<compile_context>
chip_gen: v5e
topology: v5e:2x2
jax: 0.10.0
libtpu: 0.0.40
codegen_flags: <defaults>
</compile_context>

<pallas_src>
import numpy as np
import jax
import jax.numpy as jnp
from jax import lax
from jax.experimental import pallas as pl
from jax.experimental.pallas import tpu as pltpu

LANE = 128          # feature dim padded to a full lane group (lane-dense MXU/VPU)
SUBLANE = 8
INV_TEMPERATURE = 10.0   # 1 / temperature (temperature = 0.1 in the reference)


def _round_up(v, m):
    return ((v + m - 1) // m) * m


def _mosaic_params(dim_sem, blocks):
    """CompilerParams with a VMEM limit sized from the actual block footprint."""
    nbytes = sum(int(np.prod(s)) * np.dtype(d).itemsize for s, d in blocks)
    limit = int(min(max(2 * nbytes + (4 << 20), 16 << 20), 48 << 20))
    return pltpu.CompilerParams(dimension_semantics=dim_sem,
                                vmem_limit_bytes=limit)


# -----------------------------------------------------------------------------
# Kernels
# -----------------------------------------------------------------------------
def _make_xw_kernel(dp):
    # Stage 1: Y1 = X @ W1 (row-tiled; staged once, reused by every P row block).
    def kernel(x_ref, w_ref, y_ref):
        y_ref[...] = jnp.dot(x_ref[...], w_ref[0:dp, :],
                             preferred_element_type=jnp.float32).astype(y_ref.dtype)
    return kernel


def _make_conv1_proj_kernel(dp):
    # Stage 2: h1 = PReLU(sum_k P[i,k] @ Y1[k] + b1)  (P3 accumulator pattern).
    # Finalize (last k) fuses: Y2 = h1 @ W2, h_pos = projector(h1 + x),
    # hp_n = L2-normalize(h_pos).
    def kernel(p_ref, y1_ref, x_ref, w_ref, bias_ref,
               y2_ref, hpos_ref, hpn_ref, acc_ref):
        k = pl.program_id(1)

        @pl.when(k == 0)
        def _():
            acc_ref[...] = jnp.zeros_like(acc_ref)

        acc_ref[...] += jnp.dot(p_ref[...], y1_ref[...],
                                preferred_element_type=jnp.float32)

        @pl.when(k == pl.num_programs(1) - 1)
        def _():
            bias = bias_ref[...]                       # (8, dp) single aligned load
            b1, bp1, bp2, a = bias[0:1], bias[2:3], bias[3:4], bias[4:5]
            h1 = acc_ref[...] + b1
            h1 = jnp.maximum(h1, 0.0) + a * jnp.minimum(h1, 0.0)   # shared PReLU
            # F.dropout(h1) is identity in eval mode.
            y2_ref[...] = jnp.dot(h1.astype(jnp.bfloat16), w_ref[dp:2 * dp, :],
                                  preferred_element_type=jnp.float32
                                  ).astype(y2_ref.dtype)
            # projector(h1 + x): Linear -> ReLU -> Linear (row-wise, fused here)
            z = (h1 + x_ref[...].astype(jnp.float32)).astype(jnp.bfloat16)
            t = jnp.dot(z, w_ref[2 * dp:3 * dp, :],
                        preferred_element_type=jnp.float32) + bp1
            t = jnp.maximum(t, 0.0).astype(jnp.bfloat16)
            hpos = jnp.dot(t, w_ref[3 * dp:4 * dp, :],
                           preferred_element_type=jnp.float32) + bp2
            hpos_ref[...] = hpos
            # F.normalize(h_pos, dim=-1), eps=1e-12  (rsqrt -> EUP slot)
            inv = lax.rsqrt(jnp.maximum(jnp.sum(hpos * hpos, axis=-1, keepdims=True),
                                        1e-24))
            hpn_ref[...] = hpos * inv
    return kernel


def _conv2_kernel(p_ref, y2_ref, bias_ref, h2_ref, acc_ref):
    # Stage 3: h2 = PReLU(sum_k P[i,k] @ Y2[k] + b2).
    k = pl.program_id(1)

    @pl.when(k == 0)
    def _():
        acc_ref[...] = jnp.zeros_like(acc_ref)

    acc_ref[...] += jnp.dot(p_ref[...], y2_ref[...],
                            preferred_element_type=jnp.float32)

    @pl.when(k == pl.num_programs(1) - 1)
    def _():
        bias = bias_ref[...]
        b2, a = bias[1:2], bias[4:5]
        h2 = acc_ref[...] + b2
        h2_ref[...] = jnp.maximum(h2, 0.0) + a * jnp.minimum(h2, 0.0)


def _make_infonce_kernel(num_pad_cols):
    # Stage 4: InfoNCE (1/temperature already folded into hn):
    #   loss_i = log(exp(pos_i) + sum_j exp(hp_i . hn_j)) - pos_i
    # tiled over (row block i, column block k) with an online sum-of-exp
    # accumulator; matches the reference (including the double-counted diagonal).
    # TODO(synk): switch to a running-max online logsumexp if the temperature is
    # ever lowered; here |logits| <= 10, so plain f32 exp cannot overflow.
    pad_cols = float(num_pad_cols)

    def kernel(hp_ref, hn_col_ref, hn_row_ref, loss_ref, den_ref):
        k = pl.program_id(1)

        @pl.when(k == 0)
        def _():
            den_ref[...] = jnp.zeros_like(den_ref)

        logits = lax.dot_general(hp_ref[...], hn_col_ref[...],
                                 dimension_numbers=(((1,), (1,)), ((), ())),
                                 preferred_element_type=jnp.float32)      # (tm, tk)
        den_ref[...] += jnp.sum(jnp.exp(logits), axis=-1, keepdims=True)  # EUP-bound

        @pl.when(k == pl.num_programs(1) - 1)
        def _():
            pos = jnp.sum(hp_ref[...] * hn_row_ref[...], axis=-1, keepdims=True)
            # padded hn rows are exactly zero -> each contributed exp(0)=1; remove.
            denom = den_ref[...] - pad_cols
            loss_ref[...] = jnp.log(jnp.exp(pos) + denom) - pos
    return kernel


# -----------------------------------------------------------------------------
# Host-side glue: community partition -> dense hypergraph incidence matrix
# -----------------------------------------------------------------------------
def build_hypergraph_incidence(edge_index_np, num_nodes):
    # TODO(synk): Louvain modularity optimization (community_louvain.best_partition)
    # is a host-side graph algorithm with no Pallas equivalent; replaced by a
    # deterministic connected-component partition.
    parent = list(range(num_nodes))

    def find(i):
        while parent[i] != i:
            parent[i] = parent[parent[i]]
            i = parent[i]
        return i

    def union(i, j):
        ri, rj = find(i), find(j)
        if ri != rj:
            parent[max(ri, rj)] = min(ri, rj)

    for s, d in zip(edge_index_np[0], edge_index_np[1]):
        union(int(s), int(d))

    communities = {}
    for n in range(num_nodes):
        communities.setdefault(find(n), []).append(n)

    pairs = []
    for nodes in communities.values():
        if len(nodes) > 1:
            for i in range(len(nodes)):
                for j in range(i + 1, len(nodes)):
                    pairs.append([nodes[i], nodes[j]])
        else:
            pairs.append([nodes[0], nodes[0]])

    row0 = np.array([p[0] for p in pairs], dtype=np.int64)
    row1 = np.array([p[1] for p in pairs], dtype=np.int64)  # hyperedge ids
    num_edges = int(row1.max()) + 1
    H = np.zeros((num_nodes, num_edges), dtype=np.float32)
    H[row0, row1] = 1.0
    return H


# -----------------------------------------------------------------------------
# Full forward pass (eval mode)
# -----------------------------------------------------------------------------
def hypergcl_forward(x, edge_index, params, perm, *, tm=256, tk=256):
    N, D = x.shape
    dp = _round_up(max(D, 1), LANE)
    bf, f32 = jnp.bfloat16, jnp.float32

    # ---- tile geometry: row tile sublane-aligned, column tile lane-aligned ----
    tk = _round_up(min(max(tk, LANE), _round_up(N, LANE)), LANE)
    n_pad = _round_up(N, tk)
    tm = _round_up(max(SUBLANE, min(tm, n_pad)), SUBLANE)
    while n_pad % tm:
        tm -= SUBLANE
    nm, nk = n_pad // tm, n_pad // tk

    # ---- host precompute: incidence -> normalized propagation matrix P -------
    H = build_hypergraph_incidence(np.asarray(edge_index), N)        # (N, E)
    deg_n = H.sum(axis=1, keepdims=True)
    deg_e = H.sum(axis=0, keepdims=True)
    inv_d = np.where(deg_n > 0, 1.0 / deg_n, 0.0)
    inv_b = np.where(deg_e > 0, 1.0 / deg_e, 0.0)
    P = (inv_d * H) @ (H * inv_b).T                                   # (N, N)
    P_pad = np.zeros((n_pad, n_pad), np.float32)
    P_pad[:N, :N] = P
    p_bf = jnp.asarray(P_pad, bf)       # bf16: halves the dominant N^2 traffic

    x_pad = np.zeros((n_pad, dp), np.float32)
    x_pad[:N, :D] = np.asarray(x, np.float32)
    x_bf = jnp.asarray(x_pad, bf)

    # ---- pack params: one bf16 weight slab + one f32 bias/PReLU slab ---------
    def _wt(w):   # torch Linear (out, in) -> padded (in, out): no in-kernel transpose
        w = np.asarray(w, np.float32).T
        out = np.zeros((dp, dp), np.float32)
        out[:w.shape[0], :w.shape[1]] = w
        return out

    w_slab = jnp.asarray(np.concatenate(
        [_wt(params["W_hg1"]), _wt(params["W_hg2"]),
         _wt(params["W_p1"]), _wt(params["W_p2"])], axis=0), bf)      # (4*dp, dp)

    bias_np = np.zeros((8, dp), np.float32)
    for row, key in enumerate(("b_hg1", "b_hg2", "b_p1", "b_p2")):
        b = np.asarray(params[key], np.float32)
        bias_np[row, :b.shape[0]] = b
    bias_np[4, :] = float(params["prelu_a"])
    bias_slab = jnp.asarray(bias_np)                                  # (8, dp)

    perm = jnp.asarray(perm, jnp.int32)
    closs_w = jnp.asarray(params["closs_weight"], f32)

    xw_kernel = _make_xw_kernel(dp)
    conv1_kernel = _make_conv1_proj_kernel(dp)
    nce_kernel = _make_infonce_kernel(n_pad - N)

    @jax.jit
    def _device_forward(p_bf, x_bf, w_slab, bias_slab, perm, closs_w):
        # --- stage 1: Y1 = X @ W1 --------------------------------------------
        y1 = pl.pallas_call(
            xw_kernel,
            out_shape=jax.ShapeDtypeStruct((n_pad, dp), bf),
            grid_spec=pltpu.PrefetchScalarGridSpec(
                num_scalar_prefetch=0, grid=(nm,),
                in_specs=[pl.BlockSpec((tm, dp), lambda i: (i, 0)),
                          pl.BlockSpec((4 * dp, dp), lambda i: (0, 0))],
                out_specs=pl.BlockSpec((tm, dp), lambda i: (i, 0))),
            compiler_params=_mosaic_params(
                ("parallel",),
                [((tm, dp), bf), ((4 * dp, dp), bf), ((tm, dp), bf)]),
        )(x_bf, w_slab)

        # --- stage 2: conv1 + PReLU, fused with Y2 / projector / normalize ----
        y2, hpos, hpn = pl.pallas_call(
            conv1_kernel,
            out_shape=(jax.ShapeDtypeStruct((n_pad, dp), bf),
                       jax.ShapeDtypeStruct((n_pad, dp), f32),
                       jax.ShapeDtypeStruct((n_pad, dp), f32)),
            grid_spec=pltpu.PrefetchScalarGridSpec(
                num_scalar_prefetch=0, grid=(nm, nk),
                in_specs=[pl.BlockSpec((tm, tk), lambda i, k: (i, k)),
                          pl.BlockSpec((tk, dp), lambda i, k: (k, 0)),
                          pl.BlockSpec((tm, dp), lambda i, k: (i, 0)),
                          pl.BlockSpec((4 * dp, dp), lambda i, k: (0, 0)),
                          pl.BlockSpec((8, dp), lambda i, k: (0, 0))],
                out_specs=[pl.BlockSpec((tm, dp), lambda i, k: (i, 0)),
                           pl.BlockSpec((tm, dp), lambda i, k: (i, 0)),
                           pl.BlockSpec((tm, dp), lambda i, k: (i, 0))],
                scratch_shapes=[pltpu.VMEM((tm, dp), f32)]),
            compiler_params=_mosaic_params(
                ("parallel", "arbitrary"),
                [((tm, tk), bf), ((tk, dp), bf), ((tm, dp), bf),
                 ((4 * dp, dp), bf), ((8, dp), f32),
                 ((tm, dp), bf), ((tm, dp), f32), ((tm, dp), f32),
                 ((tm, dp), f32)]),
        )(p_bf, y1, x_bf, w_slab, bias_slab)

        # --- stage 3: conv2 + PReLU (computed per reference forward) ----------
        h2 = pl.pallas_call(
            _conv2_kernel,
            out_shape=jax.ShapeDtypeStruct((n_pad, dp), f32),
            grid_spec=pltpu.PrefetchScalarGridSpec(
                num_scalar_prefetch=0, grid=(nm, nk),
                in_specs=[pl.BlockSpec((tm, tk), lambda i, k: (i, k)),
                          pl.BlockSpec((tk, dp), lambda i, k: (k, 0)),
                          pl.BlockSpec((8, dp), lambda i, k: (0, 0))],
                out_specs=pl.BlockSpec((tm, dp), lambda i, k: (i, 0)),
                scratch_shapes=[pltpu.VMEM((tm, dp), f32)]),
            compiler_params=_mosaic_params(
                ("parallel", "arbitrary"),
                [((tm, tk), bf), ((tk, dp), bf), ((8, dp), f32),
                 ((tm, dp), f32), ((tm, dp), f32)]),
        )(p_bf, y2, bias_slab)

        # --- negative sampling: row gather (no dense NxN permutation matrix),
        #     with 1/temperature folded once into the gathered operand ---------
        hn = jnp.take(hpn[:N], perm, axis=0) * jnp.float32(INV_TEMPERATURE)
        hn = jnp.pad(hn, ((0, n_pad - N), (0, 0)))   # padded rows exactly zero

        # --- stage 4: InfoNCE with online sum-of-exp over column blocks -------
        loss_rows = pl.pallas_call(
            nce_kernel,
            out_shape=jax.ShapeDtypeStruct((n_pad, 1), f32),
            grid_spec=pltpu.PrefetchScalarGridSpec(
                num_scalar_prefetch=0, grid=(nm, nk),
                in_specs=[pl.BlockSpec((tm, dp), lambda i, k: (i, 0)),
                          pl.BlockSpec((tk, dp), lambda i, k: (k, 0)),
                          pl.BlockSpec((tm, dp), lambda i, k: (i, 0))],
                out_specs=pl.BlockSpec((tm, 1), lambda i, k: (i, 0)),
                scratch_shapes=[pltpu.VMEM((tm, 1), f32)]),
            compiler_params=_mosaic_params(
                ("parallel", "arbitrary"),
                [((tm, dp), f32), ((tk, dp), f32), ((tm, dp), f32),
                 ((tm, 1), f32), ((tm, 1), f32)]),
        )(hpn, hn, hn)

        loss = jnp.mean(loss_rows[:N, 0])
        # eval-mode weighting: raw (detached) parameter; softplus is training-only.
        weighted_loss = loss * closs_w
        # outputs are written lane-padded (dp=128) and sliced back to D here.
        # TODO(synk): for mem-bound N, measure masked D=32 stores vs 4x fewer bytes.
        return hpos[:N, :D], weighted_loss, h2[:N, :D]

    return _device_forward(p_bf, x_bf, w_slab, bias_slab, perm, closs_w)


# -----------------------------------------------------------------------------
# Deterministic setup and run
# -----------------------------------------------------------------------------
if __name__ == "__main__":
    hidden_dim = 32
    num_nodes = 160   # small, but big enough to exercise the (parallel, arbitrary) grid

    key = jax.random.PRNGKey(0)
    kx, k1, k2, k3, k4, kperm = jax.random.split(key, 6)

    def kaiming(k, shape):  # kaiming_normal_ (fan_in mode); biases zeroed
        fan_in = shape[1]
        return jax.random.normal(k, shape, jnp.float32) * np.sqrt(2.0 / fan_in)

    params = {
        "W_hg1": kaiming(k1, (hidden_dim, hidden_dim)),
        "b_hg1": jnp.zeros((hidden_dim,), jnp.float32),
        "W_hg2": kaiming(k2, (hidden_dim, hidden_dim)),
        "b_hg2": jnp.zeros((hidden_dim,), jnp.float32),
        "W_p1": kaiming(k3, (hidden_dim, hidden_dim)),
        "b_p1": jnp.zeros((hidden_dim,), jnp.float32),
        "W_p2": kaiming(k4, (hidden_dim, hidden_dim)),
        "b_p2": jnp.zeros((hidden_dim,), jnp.float32),
        "prelu_a": 0.25,            # nn.PReLU default (single shared slope)
        "closs_weight": jnp.float32(1.0),
    }

    x = jax.random.normal(kx, (num_nodes, hidden_dim), jnp.float32)
    # two chain components: {0..79} and {80..159}
    src = np.concatenate([np.arange(0, 79), np.arange(80, 159)])
    dst = src + 1
    edge_index = jnp.asarray(np.stack([src, dst]), jnp.int32)

    # deterministic stand-in for torch.randperm in negative_sampling
    perm = jax.random.permutation(kperm, num_nodes)

    h_pos, weighted_loss, h2 = hypergcl_forward(x, edge_index, params, perm,
                                                tm=64, tk=128)
    jax.block_until_ready((h_pos, weighted_loss, h2))
    print("KERNEL_OK")
</pallas_src>

<mosaic_0001>
module attributes {stable_mosaic.version = 11 : i64} {
  func.func @kernel(%arg0: i32, %arg1: memref<64x128xbf16, #tpu.memory_space<vmem>>, %arg2: memref<512x128xbf16, #tpu.memory_space<vmem>>, %arg3: memref<64x128xbf16, #tpu.memory_space<vmem>>) attributes {dimension_semantics = [#tpu.dimension_semantics<parallel>], iteration_bounds = array<i64: 4>, scalar_prefetch = 0 : i64, scratch_operands = 0 : i64, tpu.core_type = #tpu.core_type<tc>, window_params = [{transform_indices = @transform_0, window_bounds = array<i64: 64, 128>}, {pipeline_mode = #tpu.pipeline_mode<synchronous>, transform_indices = @transform_1, window_bounds = array<i64: 512, 128>}, {transform_indices = @transform_2, window_bounds = array<i64: 64, 128>}]} {
    %c0 = arith.constant 0 : index
    %c0_0 = arith.constant 0 : index
    %0 = vector.load %arg1[%c0, %c0_0] : memref<64x128xbf16, #tpu.memory_space<vmem>>, vector<64x128xbf16>
    %c0_1 = arith.constant 0 : index
    %c0_2 = arith.constant 0 : index
    %1 = vector.load %arg2[%c0_1, %c0_2] : memref<512x128xbf16, #tpu.memory_space<vmem>>, vector<128x128xbf16>
    %cst = arith.constant dense<0.000000e+00> : vector<64x128xf32>
    %2 = tpu.matmul %0, %1, %cst {dimension_numbers = #tpu.dot_dimension_numbers<[1], [0], [0], [1], [0, 0, 1, 1], [], []>} : vector<64x128xbf16>, vector<128x128xbf16>, vector<64x128xf32> -> vector<64x128xf32>
    %3 = arith.truncf %2 : vector<64x128xf32> to vector<64x128xbf16>
    %c0_3 = arith.constant 0 : index
    %c0_4 = arith.constant 0 : index
    %4 = vector.load %arg3[%c0_3, %c0_4] : memref<64x128xbf16, #tpu.memory_space<vmem>>, vector<64x128xbf16>
    tpu.vector_store %arg3[%c0_3, %c0_4], %3 {strides = array<i32>} : memref<64x128xbf16, #tpu.memory_space<vmem>>, vector<64x128xbf16>,
    return
  }
  func.func @transform_0(%arg0: i32) -> (i32, i32) {
    %c0_i32 = arith.constant 0 : i32
    %c0_i32_0 = arith.constant 0 : i32
    return %arg0, %c0_i32 : i32, i32
  }
  func.func @transform_1(%arg0: i32) -> (i32, i32) {
    %c0_i32 = arith.constant 0 : i32
    %c0_i32_0 = arith.constant 0 : i32
    %c0_i32_1 = arith.constant 0 : i32
    return %c0_i32, %c0_i32_0 : i32, i32
  }
  func.func @transform_2(%arg0: i32) -> (i32, i32) {
    %c0_i32 = arith.constant 0 : i32
    %c0_i32_0 = arith.constant 0 : i32
    return %arg0, %c0_i32 : i32, i32
  }
}

module attributes {stable_mosaic.version = 11 : i64} {
  func.func @kernel(%arg0: i32, %arg1: i32, %arg2: memref<64x128xbf16, #tpu.memory_space<vmem>>, %arg3: memref<128x128xbf16, #tpu.memory_space<vmem>>, %arg4: memref<64x128xbf16, #tpu.memory_space<vmem>>, %arg5: memref<512x128xbf16, #tpu.memory_space<vmem>>, %arg6: memref<8x128xf32, #tpu.memory_space<vmem>>, %arg7: memref<64x128xbf16, #tpu.memory_space<vmem>>, %arg8: memref<64x128xf32, #tpu.memory_space<vmem>>, %arg9: memref<64x128xf32, #tpu.memory_space<vmem>>, %arg10: memref<64x128xf32, #tpu.memory_space<vmem>>) attributes {dimension_semantics = [#tpu.dimension_semantics<parallel>, #tpu.dimension_semantics<arbitrary>], iteration_bounds = array<i64: 4, 2>, scalar_prefetch = 0 : i64, scratch_operands = 1 : i64, tpu.core_type = #tpu.core_type<tc>, window_params = [{transform_indices = @transform_0, window_bounds = array<i64: 64, 128>}, {transform_indices = @transform_1, window_bounds = array<i64: 128, 128>}, {transform_indices = @transform_2, window_bounds = array<i64: 64, 128>}, {pipeline_mode = #tpu.pipeline_mode<synchronous>, transform_indices = @transform_3, window_bounds = array<i64: 512, 128>}, {pipeline_mode = #tpu.pipeline_mode<synchronous>, transform_indices = @transform_4, window_bounds = array<i64: 8, 128>}, {transform_indices = @transform_5, window_bounds = array<i64: 64, 128>}, {transform_indices = @transform_6, window_bounds = array<i64: 64, 128>}, {transform_indices = @transform_7, window_bounds = array<i64: 64, 128>}]} {
    %c0_i32 = arith.constant 0 : i32
    %0 = arith.cmpi eq, %arg1, %c0_i32 : i32
    %1 = arith.extui %0 : i1 to i32
    %c0_i32_0 = arith.constant 0 : i32
    %2 = arith.cmpi ne, %1, %c0_i32_0 : i32
    scf.if %2 {
      %cst_9 = arith.constant 0.000000e+00 : f32
      %12 = vector.broadcast %cst_9 : f32 to vector<64x128xf32>
      %c0_10 = arith.constant 0 : index
      %c0_11 = arith.constant 0 : index
      %13 = vector.load %arg10[%c0_10, %c0_11] : memref<64x128xf32, #tpu.memory_space<vmem>>, vector<64x128xf32>
      tpu.vector_store %arg10[%c0_10, %c0_11], %12 {strides = array<i32>} : memref<64x128xf32, #tpu.memory_space<vmem>>, vector<64x128xf32>,
    } else {
    }
    %c0 = arith.constant 0 : index
    %c0_1 = arith.constant 0 : index
    %3 = vector.load %arg10[%c0, %c0_1] : memref<64x128xf32, #tpu.memory_space<vmem>>, vector<64x128xf32>
    %c0_2 = arith.constant 0 : index
    %c0_3 = arith.constant 0 : index
    %4 = vector.load %arg2[%c0_2, %c0_3] : memref<64x128xbf16, #tpu.memory_space<vmem>>, vector<64x128xbf16>
    %c0_4 = arith.constant 0 : index
    %c0_5 = arith.constant 0 : index
    %5 = vector.load %arg3[%c0_4, %c0_5] : memref<128x128xbf16, #tpu.memory_space<vmem>>, vector<128x128xbf16>
    %cst = arith.constant dense<0.000000e+00> : vector<64x128xf32>
    %6 = tpu.matmul %4, %5, %cst {dimension_numbers = #tpu.dot_dimension_numbers<[1], [0], [0], [1], [0, 0, 1, 1], [], []>} : vector<64x128xbf16>, vector<128x128xbf16>, vector<64x128xf32> -> vector<64x128xf32>
    %7 = arith.addf %3, %6 : vector<64x128xf32>
    %c0_6 = arith.constant 0 : index
    %c0_7 = arith.constant 0 : index
    %8 = vector.load %arg10[%c0_6, %c0_7] : memref<64x128xf32, #tpu.memory_space<vmem>>, vector<64x128xf32>
    tpu.vector_store %arg10[%c0_6, %c0_7], %7 {strides = array<i32>} : memref<64x128xf32, #tpu.memory_space<vmem>>, vector<64x128xf32>,
    %c1_i32 = arith.constant 1 : i32
    %9 = arith.cmpi eq, %arg1, %c1_i32 : i32
    %10 = arith.extui %9 : i1 to i32
    %c0_i32_8 = arith.constant 0 : i32
    %11 = arith.cmpi ne, %10, %c0_i32_8 : i32
    scf.if %11 {
      %c0_9 = arith.constant 0 : index
      %c0_10 = arith.constant 0 : index
      %12 = vector.load %arg6[%c0_9, %c0_10] : memref<8x128xf32, #tpu.memory_space<vmem>>, vector<8x128xf32>
      %13 = vector.extract_strided_slice %12 {offsets = [0, 0], sizes = [1, 128], strides = [1, 1]} : vector<8x128xf32> to vector<1x128xf32>
      %14 = vector.extract_strided_slice %12 {offsets = [2, 0], sizes = [1, 128], strides = [1, 1]} : vector<8x128xf32> to vector<1x128xf32>
      %15 = vector.extract_strided_slice %12 {offsets = [3, 0], sizes = [1, 128], strides = [1, 1]} : vector<8x128xf32> to vector<1x128xf32>
      %16 = vector.extract_strided_slice %12 {offsets = [4, 0], sizes = [1, 128], strides = [1, 1]} : vector<8x128xf32> to vector<1x128xf32>
      %c0_11 = arith.constant 0 : index
      %c0_12 = arith.constant 0 : index
      %17 = vector.load %arg10[%c0_11, %c0_12] : memref<64x128xf32, #tpu.memory_space<vmem>>, vector<64x128xf32>
      %18 = vector.broadcast %13 : vector<1x128xf32> to vector<64x128xf32>
      %19 = arith.addf %17, %18 : vector<64x128xf32>
      %cst_13 = arith.constant 0.000000e+00 : f32
      %20 = vector.broadcast %cst_13 : f32 to vector<64x128xf32>
      %21 = arith.maximumf %19, %20 : vector<64x128xf32>
      %cst_14 = arith.constant 0.000000e+00 : f32
      %22 = vector.broadcast %cst_14 : f32 to vector<64x128xf32>
      %23 = arith.minimumf %19, %22 : vector<64x128xf32>
      %24 = vector.broadcast %16 : vector<1x128xf32> to vector<64x128xf32>
      %25 = arith.mulf %24, %23 : vector<64x128xf32>
      %26 = arith.addf %21, %25 : vector<64x128xf32>
      %27 = arith.truncf %26 : vector<64x128xf32> to vector<64x128xbf16>
      %c128 = arith.constant 128 : index
      %c0_15 = arith.constant 0 : index
      %28 = vector.load %arg5[%c128, %c0_15] : memref<512x128xbf16, #tpu.memory_space<vmem>>, vector<128x128xbf16>
      %cst_16 = arith.constant dense<0.000000e+00> : vector<64x128xf32>
      %29 = tpu.matmul %27, %28, %cst_16 {dimension_numbers = #tpu.dot_dimension_numbers<[1], [0], [0], [1], [0, 0, 1, 1], [], []>} : vector<64x128xbf16>, vector<128x128xbf16>, vector<64x128xf32> -> vector<64x128xf32>
      %30 = arith.truncf %29 : vector<64x128xf32> to vector<64x128xbf16>
      %c0_17 = arith.constant 0 : index
      %c0_18 = arith.constant 0 : index
      %31 = vector.load %arg7[%c0_17, %c0_18] : memref<64x128xbf16, #tpu.memory_space<vmem>>, vector<64x128xbf16>
      tpu.vector_store %arg7[%c0_17, %c0_18], %30 {strides = array<i32>} : memref<64x128xbf16, #tpu.memory_space<vmem>>, vector<64x128xbf16>,
      %c0_19 = arith.constant 0 : index
      %c0_20 = arith.constant 0 : index
      %32 = vector.load %arg4[%c0_19, %c0_20] : memref<64x128xbf16, #tpu.memory_space<vmem>>, vector<64x128xbf16>
      %33 = arith.extf %32 : vector<64x128xbf16> to vector<64x128xf32>
      %34 = arith.addf %26, %33 : vector<64x128xf32>
      %35 = arith.truncf %34 : vector<64x128xf32> to vector<64x128xbf16>
      %c256 = arith.constant 256 : index
      %c0_21 = arith.constant 0 : index
      %36 = vector.load %arg5[%c256, %c0_21] : memref<512x128xbf16, #tpu.memory_space<vmem>>, vector<128x128xbf16>
      %cst_22 = arith.constant dense<0.000000e+00> : vector<64x128xf32>
      %37 = tpu.matmul %35, %36, %cst_22 {dimension_numbers = #tpu.dot_dimension_numbers<[1], [0], [0], [1], [0, 0, 1, 1], [], []>} : vector<64x128xbf16>, vector<128x128xbf16>, vector<64x128xf32> -> vector<64x128xf32>
      %38 = vector.broadcast %14 : vector<1x128xf32> to vector<64x128xf32>
      %39 = arith.addf %37, %38 : vector<64x128xf32>
      %cst_23 = arith.constant 0.000000e+00 : f32
      %40 = vector.broadcast %cst_23 : f32 to vector<64x128xf32>
      %41 = arith.maximumf %39, %40 : vector<64x128xf32>
      %42 = arith.truncf %41 : vector<64x128xf32> to vector<64x128xbf16>
      %c384 = arith.constant 384 : index
      %c0_24 = arith.constant 0 : index
      %43 = vector.load %arg5[%c384, %c0_24] : memref<512x128xbf16, #tpu.memory_space<vmem>>, vector<128x128xbf16>
      %cst_25 = arith.constant dense<0.000000e+00> : vector<64x128xf32>
      %44 = tpu.matmul %42, %43, %cst_25 {dimension_numbers = #tpu.dot_dimension_numbers<[1], [0], [0], [1], [0, 0, 1, 1], [], []>} : vector<64x128xbf16>, vector<128x128xbf16>, vector<64x128xf32> -> vector<64x128xf32>
      %45 = vector.broadcast %15 : vector<1x128xf32> to vector<64x128xf32>
      %46 = arith.addf %44, %45 : vector<64x128xf32>
      %c0_26 = arith.constant 0 : index
      %c0_27 = arith.constant 0 : index
      %47 = vector.load %arg8[%c0_26, %c0_27] : memref<64x128xf32, #tpu.memory_space<vmem>>, vector<64x128xf32>
      tpu.vector_store %arg8[%c0_26, %c0_27], %46 {strides = array<i32>} : memref<64x128xf32, #tpu.memory_space<vmem>>, vector<64x128xf32>,
      %48 = arith.mulf %46, %46 : vector<64x128xf32>
      %cst_28 = arith.constant dense<0.000000e+00> : vector<64xf32>
      %49 = vector.multi_reduction <add>, %48, %cst_28 [1] : vector<64x128xf32> to vector<64xf32>
      %50 = vector.shape_cast %49 : vector<64xf32> to vector<64x1xf32>
      %cst_29 = arith.constant 1.000000e-24 : f32
      %51 = vector.broadcast %cst_29 : f32 to vector<64x1xf32>
      %52 = arith.maximumf %50, %51 : vector<64x1xf32>
      %53 = math.rsqrt %52 : vector<64x1xf32>
      %54 = vector.broadcast %53 : vector<64x1xf32> to vector<64x128xf32>
      %55 = arith.mulf %46, %54 : vector<64x128xf32>
      %c0_30 = arith.constant 0 : index
      %c0_31 = arith.constant 0 : index
      %56 = vector.load %arg9[%c0_30, %c0_31] : memref<64x128xf32, #tpu.memory_space<vmem>>, vector<64x128xf32>
      tpu.vector_store %arg9[%c0_30, %c0_31], %55 {strides = array<i32>} : memref<64x128xf32, #tpu.memory_space<vmem>>, vector<64x128xf32>,
    } else {
    }
    return
  }
  func.func @transform_0(%arg0: i32, %arg1: i32) -> (i32, i32) {
    %c0_i32 = arith.constant 0 : i32
    return %arg0, %arg1 : i32, i32
  }
  func.func @transform_1(%arg0: i32, %arg1: i32) -> (i32, i32) {
    %c0_i32 = arith.constant 0 : i32
    %c0_i32_0 = arith.constant 0 : i32
    return %arg1, %c0_i32 : i32, i32
  }
  func.func @transform_2(%arg0: i32, %arg1: i32) -> (i32, i32) {
    %c0_i32 = arith.constant 0 : i32
    %c0_i32_0 = arith.constant 0 : i32
    return %arg0, %c0_i32 : i32, i32
  }
  func.func @transform_3(%arg0: i32, %arg1: i32) -> (i32, i32) {
    %c0_i32 = arith.constant 0 : i32
    %c0_i32_0 = arith.constant 0 : i32
    %c0_i32_1 = arith.constant 0 : i32
    return %c0_i32, %c0_i32_0 : i32, i32
  }
  func.func @transform_4(%arg0: i32, %arg1: i32) -> (i32, i32) {
    %c0_i32 = arith.constant 0 : i32
    %c0_i32_0 = arith.constant 0 : i32
    %c0_i32_1 = arith.constant 0 : i32
    return %c0_i32, %c0_i32_0 : i32, i32
  }
  func.func @transform_5(%arg0: i32, %arg1: i32) -> (i32, i32) {
    %c0_i32 = arith.constant 0 : i32
    %c0_i32_0 = arith.constant 0 : i32
    return %arg0, %c0_i32 : i32, i32
  }
  func.func @transform_6(%arg0: i32, %arg1: i32) -> (i32, i32) {
    %c0_i32 = arith.constant 0 : i32
    %c0_i32_0 = arith.constant 0 : i32
    return %arg0, %c0_i32 : i32, i32
  }
  func.func @transform_7(%arg0: i32, %arg1: i32) -> (i32, i32) {
    %c0_i32 = arith.constant 0 : i32
    %c0_i32_0 = arith.constant 0 : i32
    return %arg0, %c0_i32 : i32, i32
  }
}

module attributes {stable_mosaic.version = 11 : i64} {
  func.func @kernel(%arg0: i32, %arg1: i32, %arg2: memref<64x128xf32, #tpu.memory_space<vmem>>, %arg3: memref<128x128xf32, #tpu.memory_space<vmem>>, %arg4: memref<64x128xf32, #tpu.memory_space<vmem>>, %arg5: memref<64x1xf32, #tpu.memory_space<vmem>>, %arg6: memref<64x1xf32, #tpu.memory_space<vmem>>) attributes {dimension_semantics = [#tpu.dimension_semantics<parallel>, #tpu.dimension_semantics<arbitrary>], iteration_bounds = array<i64: 4, 2>, scalar_prefetch = 0 : i64, scratch_operands = 1 : i64, tpu.core_type = #tpu.core_type<tc>, window_params = [{transform_indices = @transform_0, window_bounds = array<i64: 64, 128>}, {transform_indices = @transform_1, window_bounds = array<i64: 128, 128>}, {transform_indices = @transform_2, window_bounds = array<i64: 64, 128>}, {transform_indices = @transform_3, window_bounds = array<i64: 64, 1>}]} {
    %c0_i32 = arith.constant 0 : i32
    %0 = arith.cmpi eq, %arg1, %c0_i32 : i32
    %1 = arith.extui %0 : i1 to i32
    %c0_i32_0 = arith.constant 0 : i32
    %2 = arith.cmpi ne, %1, %c0_i32_0 : i32
    scf.if %2 {
      %cst_10 = arith.constant 0.000000e+00 : f32
      %15 = vector.broadcast %cst_10 : f32 to vector<64x1xf32>
      %c0_11 = arith.constant 0 : index
      %c0_12 = arith.constant 0 : index
      %16 = vector.load %arg6[%c0_11, %c0_12] : memref<64x1xf32, #tpu.memory_space<vmem>>, vector<64x1xf32>
      tpu.vector_store %arg6[%c0_11, %c0_12], %15 {strides = array<i32>} : memref<64x1xf32, #tpu.memory_space<vmem>>, vector<64x1xf32>,
    } else {
    }
    %c0 = arith.constant 0 : index
    %c0_1 = arith.constant 0 : index
    %3 = vector.load %arg2[%c0, %c0_1] : memref<64x128xf32, #tpu.memory_space<vmem>>, vector<64x128xf32>
    %c0_2 = arith.constant 0 : index
    %c0_3 = arith.constant 0 : index
    %4 = vector.load %arg3[%c0_2, %c0_3] : memref<128x128xf32, #tpu.memory_space<vmem>>, vector<128x128xf32>
    %cst = arith.constant dense<0.000000e+00> : vector<64x128xf32>
    %5 = tpu.matmul %3, %4, %cst {dimension_numbers = #tpu.dot_dimension_numbers<[1], [1], [0], [0], [0, 0, 1, 0], [], []>} : vector<64x128xf32>, vector<128x128xf32>, vector<64x128xf32> -> vector<64x128xf32>
    %c0_4 = arith.constant 0 : index
    %c0_5 = arith.constant 0 : index
    %6 = vector.load %arg6[%c0_4, %c0_5] : memref<64x1xf32, #tpu.memory_space<vmem>>, vector<64x1xf32>
    %7 = math.exp %5 : vector<64x128xf32>
    %cst_6 = arith.constant dense<0.000000e+00> : vector<64xf32>
    %8 = vector.multi_reduction <add>, %7, %cst_6 [1] : vector<64x128xf32> to vector<64xf32>
    %9 = vector.shape_cast %8 : vector<64xf32> to vector<64x1xf32>
    %10 = arith.addf %6, %9 : vector<64x1xf32>
    %c0_7 = arith.constant 0 : index
    %c0_8 = arith.constant 0 : index
    %11 = vector.load %arg6[%c0_7, %c0_8] : memref<64x1xf32, #tpu.memory_space<vmem>>, vector<64x1xf32>
    tpu.vector_store %arg6[%c0_7, %c0_8], %10 {strides = array<i32>} : memref<64x1xf32, #tpu.memory_space<vmem>>, vector<64x1xf32>,
    %c1_i32 = arith.constant 1 : i32
    %12 = arith.cmpi eq, %arg1, %c1_i32 : i32
    %13 = arith.extui %12 : i1 to i32
    %c0_i32_9 = arith.constant 0 : i32
    %14 = arith.cmpi ne, %13, %c0_i32_9 : i32
    scf.if %14 {
      %c0_10 = arith.constant 0 : index
      %c0_11 = arith.constant 0 : index
      %15 = vector.load %arg2[%c0_10, %c0_11] : memref<64x128xf32, #tpu.memory_space<vmem>>, vector<64x128xf32>
      %c0_12 = arith.constant 0 : index
      %c0_13 = arith.constant 0 : index
      %16 = vector.load %arg4[%c0_12, %c0_13] : memref<64x128xf32, #tpu.memory_space<vmem>>, vector<64x128xf32>
      %17 = arith.mulf %15, %16 : vector<64x128xf32>
      %cst_14 = arith.constant dense<0.000000e+00> : vector<64xf32>
      %18 = vector.multi_reduction <add>, %17, %cst_14 [1] : vector<64x128xf32> to vector<64xf32>
      %19 = vector.shape_cast %18 : vector<64xf32> to vector<64x1xf32>
      %c0_15 = arith.constant 0 : index
      %c0_16 = arith.constant 0 : index
      %20 = vector.load %arg6[%c0_15, %c0_16] : memref<64x1xf32, #tpu.memory_space<vmem>>, vector<64x1xf32>
      %cst_17 = arith.constant 9.600000e+01 : f32
      %21 = vector.broadcast %cst_17 : f32 to vector<64x1xf32>
      %22 = arith.subf %20, %21 : vector<64x1xf32>
      %23 = math.exp %19 : vector<64x1xf32>
      %24 = arith.addf %23, %22 : vector<64x1xf32>
      %25 = math.log %24 : vector<64x1xf32>
      %26 = arith.subf %25, %19 : vector<64x1xf32>
      %c0_18 = arith.constant 0 : index
      %c0_19 = arith.constant 0 : index
      %27 = vector.load %arg5[%c0_18, %c0_19] : memref<64x1xf32, #tpu.memory_space<vmem>>, vector<64x1xf32>
      tpu.vector_store %arg5[%c0_18, %c0_19], %26 {strides = array<i32>} : memref<64x1xf32, #tpu.memory_space<vmem>>, vector<64x1xf32>,
    } else {
    }
    return
  }
  func.func @transform_0(%arg0: i32, %arg1: i32) -> (i32, i32) {
    %c0_i32 = arith.constant 0 : i32
    %c0_i32_0 = arith.constant 0 : i32
    return %arg0, %c0_i32 : i32, i32
  }
  func.func @transform_1(%arg0: i32, %arg1: i32) -> (i32, i32) {
    %c0_i32 = arith.constant 0 : i32
    %c0_i32_0 = arith.constant 0 : i32
    return %arg1, %c0_i32 : i32, i32
  }
  func.func @transform_2(%arg0: i32, %arg1: i32) -> (i32, i32) {
    %c0_i32 = arith.constant 0 : i32
    %c0_i32_0 = arith.constant 0 : i32
    return %arg0, %c0_i32 : i32, i32
  }
  func.func @transform_3(%arg0: i32, %arg1: i32) -> (i32, i32) {
    %c0_i32 = arith.constant 0 : i32
    %c0_i32_0 = arith.constant 0 : i32
    return %arg0, %c0_i32 : i32, i32
  }
}

module attributes {stable_mosaic.version = 11 : i64} {
  func.func @_conv2_kernel(%arg0: i32, %arg1: i32, %arg2: memref<64x128xbf16, #tpu.memory_space<vmem>>, %arg3: memref<128x128xbf16, #tpu.memory_space<vmem>>, %arg4: memref<8x128xf32, #tpu.memory_space<vmem>>, %arg5: memref<64x128xf32, #tpu.memory_space<vmem>>, %arg6: memref<64x128xf32, #tpu.memory_space<vmem>>) attributes {dimension_semantics = [#tpu.dimension_semantics<parallel>, #tpu.dimension_semantics<arbitrary>], iteration_bounds = array<i64: 4, 2>, scalar_prefetch = 0 : i64, scratch_operands = 1 : i64, tpu.core_type = #tpu.core_type<tc>, window_params = [{transform_indices = @transform_0, window_bounds = array<i64: 64, 128>}, {transform_indices = @transform_1, window_bounds = array<i64: 128, 128>}, {pipeline_mode = #tpu.pipeline_mode<synchronous>, transform_indices = @transform_2, window_bounds = array<i64: 8, 128>}, {transform_indices = @transform_3, window_bounds = array<i64: 64, 128>}]} {
    %c0_i32 = arith.constant 0 : i32
    %0 = arith.cmpi eq, %arg1, %c0_i32 : i32
    %1 = arith.extui %0 : i1 to i32
    %c0_i32_0 = arith.constant 0 : i32
    %2 = arith.cmpi ne, %1, %c0_i32_0 : i32
    scf.if %2 {
      %cst_9 = arith.constant 0.000000e+00 : f32
      %12 = vector.broadcast %cst_9 : f32 to vector<64x128xf32>
      %c0_10 = arith.constant 0 : index
      %c0_11 = arith.constant 0 : index
      %13 = vector.load %arg6[%c0_10, %c0_11] : memref<64x128xf32, #tpu.memory_space<vmem>>, vector<64x128xf32>
      tpu.vector_store %arg6[%c0_10, %c0_11], %12 {strides = array<i32>} : memref<64x128xf32, #tpu.memory_space<vmem>>, vector<64x128xf32>,
    } else {
    }
    %c0 = arith.constant 0 : index
    %c0_1 = arith.constant 0 : index
    %3 = vector.load %arg6[%c0, %c0_1] : memref<64x128xf32, #tpu.memory_space<vmem>>, vector<64x128xf32>
    %c0_2 = arith.constant 0 : index
    %c0_3 = arith.constant 0 : index
    %4 = vector.load %arg2[%c0_2, %c0_3] : memref<64x128xbf16, #tpu.memory_space<vmem>>, vector<64x128xbf16>
    %c0_4 = arith.constant 0 : index
    %c0_5 = arith.constant 0 : index
    %5 = vector.load %arg3[%c0_4, %c0_5] : memref<128x128xbf16, #tpu.memory_space<vmem>>, vector<128x128xbf16>
    %cst = arith.constant dense<0.000000e+00> : vector<64x128xf32>
    %6 = tpu.matmul %4, %5, %cst {dimension_numbers = #tpu.dot_dimension_numbers<[1], [0], [0], [1], [0, 0, 1, 1], [], []>} : vector<64x128xbf16>, vector<128x128xbf16>, vector<64x128xf32> -> vector<64x128xf32>
    %7 = arith.addf %3, %6 : vector<64x128xf32>
    %c0_6 = arith.constant 0 : index
    %c0_7 = arith.constant 0 : index
    %8 = vector.load %arg6[%c0_6, %c0_7] : memref<64x128xf32, #tpu.memory_space<vmem>>, vector<64x128xf32>
    tpu.vector_store %arg6[%c0_6, %c0_7], %7 {strides = array<i32>} : memref<64x128xf32, #tpu.memory_space<vmem>>, vector<64x128xf32>,
    %c1_i32 = arith.constant 1 : i32
    %9 = arith.cmpi eq, %arg1, %c1_i32 : i32
    %10 = arith.extui %9 : i1 to i32
    %c0_i32_8 = arith.constant 0 : i32
    %11 = arith.cmpi ne, %10, %c0_i32_8 : i32
    scf.if %11 {
      %c0_9 = arith.constant 0 : index
      %c0_10 = arith.constant 0 : index
      %12 = vector.load %arg4[%c0_9, %c0_10] : memref<8x128xf32, #tpu.memory_space<vmem>>, vector<8x128xf32>
      %13 = vector.extract_strided_slice %12 {offsets = [1, 0], sizes = [1, 128], strides = [1, 1]} : vector<8x128xf32> to vector<1x128xf32>
      %14 = vector.extract_strided_slice %12 {offsets = [4, 0], sizes = [1, 128], strides = [1, 1]} : vector<8x128xf32> to vector<1x128xf32>
      %c0_11 = arith.constant 0 : index
      %c0_12 = arith.constant 0 : index
      %15 = vector.load %arg6[%c0_11, %c0_12] : memref<64x128xf32, #tpu.memory_space<vmem>>, vector<64x128xf32>
      %16 = vector.broadcast %13 : vector<1x128xf32> to vector<64x128xf32>
      %17 = arith.addf %15, %16 : vector<64x128xf32>
      %cst_13 = arith.constant 0.000000e+00 : f32
      %18 = vector.broadcast %cst_13 : f32 to vector<64x128xf32>
      %19 = arith.maximumf %17, %18 : vector<64x128xf32>
      %cst_14 = arith.constant 0.000000e+00 : f32
      %20 = vector.broadcast %cst_14 : f32 to vector<64x128xf32>
      %21 = arith.minimumf %17, %20 : vector<64x128xf32>
      %22 = vector.broadcast %14 : vector<1x128xf32> to vector<64x128xf32>
      %23 = arith.mulf %22, %21 : vector<64x128xf32>
      %24 = arith.addf %19, %23 : vector<64x128xf32>
      %c0_15 = arith.constant 0 : index
      %c0_16 = arith.constant 0 : index
      %25 = vector.load %arg5[%c0_15, %c0_16] : memref<64x128xf32, #tpu.memory_space<vmem>>, vector<64x128xf32>
      tpu.vector_store %arg5[%c0_15, %c0_16], %24 {strides = array<i32>} : memref<64x128xf32, #tpu.memory_space<vmem>>, vector<64x128xf32>,
    } else {
    }
    return
  }
  func.func @transform_0(%arg0: i32, %arg1: i32) -> (i32, i32) {
    %c0_i32 = arith.constant 0 : i32
    return %arg0, %arg1 : i32, i32
  }
  func.func @transform_1(%arg0: i32, %arg1: i32) -> (i32, i32) {
    %c0_i32 = arith.constant 0 : i32
    %c0_i32_0 = arith.constant 0 : i32
    return %arg1, %c0_i32 : i32, i32
  }
  func.func @transform_2(%arg0: i32, %arg1: i32) -> (i32, i32) {
    %c0_i32 = arith.constant 0 : i32
    %c0_i32_0 = arith.constant 0 : i32
    %c0_i32_1 = arith.constant 0 : i32
    return %c0_i32, %c0_i32_0 : i32, i32
  }
  func.func @transform_3(%arg0: i32, %arg1: i32) -> (i32, i32) {
    %c0_i32 = arith.constant 0 : i32
    %c0_i32_0 = arith.constant 0 : i32
    return %arg0, %c0_i32 : i32, i32
  }
}

</mosaic_0001>

<llo_original>
// kernel: _device_forward.4
$region0: #{_device_forward.4}
  #allocation0 [shape = 'u32[]', space=smem, size = 0x4, offset = 0x4, fixed_abs, tag = 'smem constant byte address 0x4 - core index']
  #allocation1 [shape = 'u32[72,128]{1,0:T(1,128)}', space=vmem, size = 0x9000, scoped, tag = 'internal scratch']
  %s0 = inlined_call_operand.hbm [shape: bf16[256,128], index: 0, kind: input, shape index: {}]
  %s1 = inlined_call_operand.hbm [shape: bf16[512,128], index: 1, kind: input, shape index: {}]
  %s2 = inlined_call_operand.vmem [shape: bf16[256,128], index: 2, kind: output, shape index: {}]
  %s3 = sld [smem:[#allocation0]]
  $region49: #{_device_forward.4} parent=0
    _
  %s5 = ssub.s32 1, %s3
  %s6 = scalar_select 0, %s5, %s3
  $region1: #{_device_forward.4} parent=0
    #allocation2 [shape = 'u8[32768]{0}', space=vmem, size = 0x8000, scoped, tag = 'input window, operand 0']
    #allocation3 [shape = 's32[2]{0}', space=sflag, size = 0x8, scoped, tag = 'scoped memory for _device_forward.4']
    #allocation4 [shape = 'u8[131072]{0}', space=vmem, size = 0x20000, scoped, tag = 'input window, operand 1, single buffered']
    #allocation5 [shape = 's32[1]{0}', space=sflag, size = 0x4, scoped, tag = 'scoped memory for _device_forward.4']
    %7 = vsyncpa [#allocation3], 0
    %s8 = scalar_lea.sflag [#allocation3], 1
    %9 = vsyncpa %s8, 0
    %10 = vsyncpa [#allocation5], 0
    loop: start=0, step=1, limit=6
    $region2: #{_device_forward.4} parent=1 // loop_pre_header
      _
    $region3: #{_device_forward.4} parent=1 // loop_header
      %s12 = sphi 0, %s16
      %p13 = scmp.ge.s32.totalorder %s12, 6
      %s22 = sphi 0, %s24
      %s25 = sphi 0, %s22
      %s26 = sphi 0, %s25
      %s42 = sphi 0, %s26
      %s46 = sphi 0, %s46
      %s48 = sphi 0, %s46
      %s49 = sphi 0, %s48
      %s63 = sphi 0, %s49
      %s69 = sphi 0, %s71
      %s72 = sphi 0, %s69
      %s73 = sphi 0, %s72
      %s89 = sphi 0, %s73
    $region4: #{_device_forward.4} parent=1 // loop_header_branch
      %15 = sbr.rel (%p13) target = $region8
    $region5: #{_device_forward.4} parent=1 // loop_body
      %s17 = ssub.s32 %s12, 1
      %s18 = ssub.s32 %s12, 2
      %s19 = sadd.s32 %s12, 1
      %s20 = ssub.s32 %s12, %s19
      %p21 = scmp.eq.s32.totalorder %s20, 0
      %s23 = sadd.s32 %s22, 1
      %s24 = scalar_select %p21, %s22, %s23
      %p27 = pneg %p21
      %p28 = scmp.eq.s32.totalorder %s12, 3
      %p29 = por %p27, %p28
      %p30 = scmp.ne.s32.totalorder %s22, %s25
      %p31 = scmp.eq.s32.totalorder %s12, 0
      %p32 = por %p30, %p31
      %p33 = scmp.ne.s32.totalorder %s22, %s25
      %p34 = scmp.eq.s32.totalorder %s17, 3
      %p35 = por %p33, %p34
      %p36 = scmp.ne.s32.totalorder %s25, %s26
      %p37 = scmp.eq.s32.totalorder %s17, 0
      %p38 = por %p36, %p37
      %p39 = scmp.ne.s32.totalorder %s25, %s26
      %p40 = scmp.eq.s32.totalorder %s18, 3
      %p41 = por %p39, %p40
      %p43 = scmp.ne.s32.totalorder %s26, %s42
      %p44 = scmp.eq.s32.totalorder %s18, 0
      %p45 = por %p43, %p44
      %s47 = sadd.s32 %s46, 1
      %p50 = scmp.eq.s32.totalorder %s12, 3
      %p51 = scmp.ne.s32.totalorder %s46, %s48
      %p52 = scmp.eq.s32.totalorder %s12, 0
      %p53 = por %p51, %p52
      %p54 = scmp.ne.s32.totalorder %s46, %s48
      %p55 = scmp.eq.s32.totalorder %s17, 3
      %p56 = por %p54, %p55
      %p57 = scmp.ne.s32.totalorder %s48, %s49
      %p58 = scmp.eq.s32.totalorder %s17, 0
      %p59 = por %p57, %p58
      %p60 = scmp.ne.s32.totalorder %s48, %s49
      %p61 = scmp.eq.s32.totalorder %s18, 3
      %p62 = por %p60, %p61
      %p64 = scmp.ne.s32.totalorder %s49, %s63
      %p65 = scmp.eq.s32.totalorder %s18, 0
      %p66 = por %p64, %p65
      %s67 = ssub.s32 %s12, %s19
      %p68 = scmp.eq.s32.totalorder %s67, 0
      %s70 = sadd.s32 %s69, 1
      %s71 = scalar_select %p68, %s69, %s70
      %p74 = pneg %p68
      %p75 = scmp.eq.s32.totalorder %s12, 3
      %p76 = por %p74, %p75
      %p77 = scmp.ne.s32.totalorder %s69, %s72
      %p78 = scmp.eq.s32.totalorder %s12, 0
      %p79 = por %p77, %p78
      %p80 = scmp.ne.s32.totalorder %s69, %s72
      %p81 = scmp.eq.s32.totalorder %s17, 3
      %p82 = por %p80, %p81
      %p83 = scmp.ne.s32.totalorder %s72, %s73
      %p84 = scmp.eq.s32.totalorder %s17, 0
      %p85 = por %p83, %p84
      %p86 = scmp.ne.s32.totalorder %s72, %s73
      %p87 = scmp.eq.s32.totalorder %s18, 3
      %p88 = por %p86, %p87
      %p90 = scmp.ne.s32.totalorder %s73, %s89
      %p91 = scmp.eq.s32.totalorder %s18, 0
      %p92 = por %p90, %p91
      %p93 = scmp.le.s32.totalorder 1, %s12
      %p94 = scmp.lt.s32.totalorder %s12, 5
      %p95 = pnand %p93, %p94
      %p96 = pneg %p95
      // Predicated region
      $region9: #{_device_forward.4} parent=5 // pred_check
        _
      $region10: #{_device_forward.4} parent=5 // pred_check_branch
        %98 = sbr.rel (%p95) target = $region12
      $region11: #{_device_forward.4} parent=5 // pred_region
        %s99 = ssub.s32 %s12, 1
        // Predicated region
        $region13: #{_device_forward.4} parent=11 // pred_check
          %p100 = pneg %p59
        $region14: #{_device_forward.4} parent=11 // pred_check_branch
          %102 = sbr.rel (%p100) target = $region16
        $region15: #{_device_forward.4} parent=11 // pred_region
          %104 = vsyncadd [#allocation5], 0
          %s105 = sshll.u32 %s1, 4
          %s106 = int_to_ptr.hbm [resolvable:$true] %s105
          %s107 = sshll.u32 [#allocation4], 4
          %s108 = int_to_ptr.vmem [resolvable:$true] %s107
          %113 = dma.hbm_to_vmem [thread:$0]  %s106, 4096, %s108, [#allocation5], 64, 64, 4
        $region16: #{_device_forward.4} parent=11 // pred_fallthru
          _
      $region12: #{_device_forward.4} parent=5 // pred_fallthru
        _
      %p114 = scmp.lt.s32.totalorder %s12, 4
      // Predicated region
      $region17: #{_device_forward.4} parent=5 // pred_check
        %p115 = pneg %p114
      $region18: #{_device_forward.4} parent=5 // pred_check_branch
        %117 = sbr.rel (%p115) target = $region20
      $region19: #{_device_forward.4} parent=5 // pred_region
        // Predicated region
        $region21: #{_device_forward.4} parent=19 // pred_check
          %p118 = pneg %p32
        $region22: #{_device_forward.4} parent=19 // pred_check_branch
          %120 = sbr.rel (%p118) target = $region24
        $region23: #{_device_forward.4} parent=19 // pred_region
          %s121 = sand.u32 %s22, 1
          %s122 = scalar_lea.sflag [#allocation3], %s121
          %s123 = sand.u32 %s22, 1
          %s124 = smul.addr %s123, 32
          %s125 = scalar_lea.vmem [#allocation2], %s124
          %s126 = smul.u32 8, %s12
          %128 = vsyncadd %s122, 0
          %s129 = smul.addr %s126, 4
          %s130 = scalar_lea.hbm %s0, %s129
          %s131 = sshll.u32 %s130, 4
          %s132 = int_to_ptr.hbm [resolvable:$true] %s131
          %s133 = sshll.u32 %s125, 4
          %s134 = int_to_ptr.vmem [resolvable:$true] %s133
          %139 = dma.hbm_to_vmem [thread:$0]  %s132, 512, %s134, %s122, 64, 64, 4
        $region24: #{_device_forward.4} parent=19 // pred_fallthru
          _
      $region20: #{_device_forward.4} parent=5 // pred_fallthru
        _
      %p140 = scmp.le.s32.totalorder 1, %s12
      %p141 = scmp.lt.s32.totalorder %s12, 5
      %p142 = pnand %p140, %p141
      %p143 = pneg %p142
      // Predicated region
      $region25: #{_device_forward.4} parent=5 // pred_check
        _
      $region26: #{_device_forward.4} parent=5 // pred_check_branch
        %145 = sbr.rel (%p142) target = $region28
      $region27: #{_device_forward.4} parent=5 // pred_region
        %s146 = ssub.s32 %s12, 1
        %s147 = sand.u32 %s25, 1
        %s148 = scalar_lea.sflag [#allocation3], %s147
        %s149 = sand.u32 %s25, 1
        %s150 = smul.addr %s149, 32
        %s151 = scalar_lea.vmem [#allocation2], %s150
        // Predicated region
        $region29: #{_device_forward.4} parent=27 // pred_check
          %p152 = pneg %p38
        $region30: #{_device_forward.4} parent=27 // pred_check_branch
          %154 = sbr.rel (%p152) target = $region32
        $region31: #{_device_forward.4} parent=27 // pred_region
          %156 = dma.done %s148, 512
        $region32: #{_device_forward.4} parent=27 // pred_fallthru
          _
        // Predicated region
        $region33: #{_device_forward.4} parent=27 // pred_check
          %p157 = pneg %p59
        $region34: #{_device_forward.4} parent=27 // pred_check_branch
          %159 = sbr.rel (%p157) target = $region36
        $region35: #{_device_forward.4} parent=27 // pred_region
          %161 = dma.done [#allocation5], 4096
        $region36: #{_device_forward.4} parent=27 // pred_fallthru
          _
        %s162 = sand.u32 %s25, 1
        %s163 = scalar_lea.sflag [#allocation3], %s162
        %s164 = sand.u32 %s25, 1
        %s165 = smul.addr %s164, 32
        %s166 = scalar_lea.vmem [#allocation2], %s165
        %p167 = pneg %p38
        %p168 = pneg %p35
        %p169 = pneg %p59
        %p170 = pneg %p56
        %p171 = pneg %p85
        %p172 = pneg %p82
        %s173 = smul.u32 8, %s17
        %p174 = scmp.lt.s32.totalorder %s173, 31
        %s175 = scalar_select %p174, %s173, 31
        %s176 = smul.addr %s175, 4
        %s177 = scalar_lea.vmem %s2, %s176
        %s178 = smul.u32 8, %s17
        %s179 = smul.u32 8, %s17
        %p180 = scmp.lt.s32.totalorder %s179, 31
        %s181 = scalar_select %p180, %s179, 31
        %s182 = smul.addr %s181, 4
        %s183 = scalar_lea.vmem %s2, %s182
        %s184 = smul.u32 8, %s17
        %v185 = vld [vmem:[%s151] sm:$0xf]
        %v186 = vld [vmem:[%s151 + $0x4] sm:$0xf]
        %v187 = vld [vmem:[%s151 + $0x8] sm:$0xf]
        %v188 = vld [vmem:[%s151 + $0xc] sm:$0xf]
        %v189 = vld [vmem:[%s151 + $0x10] sm:$0xf]
        %v190 = vld [vmem:[%s151 + $0x14] sm:$0xf]
        %v191 = vld [vmem:[%s151 + $0x18] sm:$0xf]
        %v192 = vld [vmem:[%s151 + $0x1c] sm:$0xf]
        %v193 = vld [vmem:[#allocation4] sm:$0xf]
        %v194 = vld [vmem:[#allocation4 + $0x4] sm:$0xf]
        %v195 = vld [vmem:[#allocation4 + $0x8] sm:$0xf]
        %v196 = vld [vmem:[#allocation4 + $0xc] sm:$0xf]
        %v197 = vld [vmem:[#allocation4 + $0x10] sm:$0xf]
        %v198 = vld [vmem:[#allocation4 + $0x14] sm:$0xf]
        %v199 = vld [vmem:[#allocation4 + $0x18] sm:$0xf]
        %v200 = vld [vmem:[#allocation4 + $0x1c] sm:$0xf]
        %v201 = vld [vmem:[#allocation4 + $0x20] sm:$0xf]
        %v202 = vld [vmem:[#allocation4 + $0x24] sm:$0xf]
        %v203 = vld [vmem:[#allocation4 + $0x28] sm:$0xf]
        %v204 = vld [vmem:[#allocation4 + $0x2c] sm:$0xf]
        %v205 = vld [vmem:[#allocation4 + $0x30] sm:$0xf]
        %v206 = vld [vmem:[#allocation4 + $0x34] sm:$0xf]
        %v207 = vld [vmem:[#allocation4 + $0x38] sm:$0xf]
        %v208 = vld [vmem:[#allocation4 + $0x3c] sm:$0xf]
        %v217 = vunpack.c.l.b16 %v185
        %v218 = vunpack.c.l.b16 %v186
        %v219 = vunpack.c.l.b16 %v187
        %v220 = vunpack.c.l.b16 %v188
        %v221 = vunpack.c.l.b16 %v189
        %v222 = vunpack.c.l.b16 %v190
        %v223 = vunpack.c.l.b16 %v191
        %v224 = vunpack.c.l.b16 %v192
        %v225 = vpack.c.b16 %v218, %v217
        %v226 = vpack.c.b16 %v220, %v219
        %v227 = vpack.c.b16 %v222, %v221
        %v228 = vpack.c.b16 %v224, %v223
        %v249 = vunpack.c.l.b16 %v193
        %v250 = vunpack.c.l.b16 %v194
        %v251 = vunpack.c.l.b16 %v195
        %v252 = vunpack.c.l.b16 %v196
        %v253 = vunpack.c.l.b16 %v197
        %v254 = vunpack.c.l.b16 %v198
        %v255 = vunpack.c.l.b16 %v199
        %v256 = vunpack.c.l.b16 %v200
        %v257 = vunpack.c.l.b16 %v201
        %v258 = vunpack.c.l.b16 %v202
        %v259 = vunpack.c.l.b16 %v203
        %v260 = vunpack.c.l.b16 %v204
        %v261 = vunpack.c.l.b16 %v205
        %v262 = vunpack.c.l.b16 %v206
        %v263 = vunpack.c.l.b16 %v207
        %v264 = vunpack.c.l.b16 %v208
        %v265 = vpack.c.b16 %v250, %v249
        %v266 = vpack.c.b16 %v252, %v251
        %v267 = vpack.c.b16 %v254, %v253
        %v268 = vpack.c.b16 %v256, %v255
        %v269 = vpack.c.b16 %v258, %v257
        %v270 = vpack.c.b16 %v260, %v259
        %v271 = vpack.c.b16 %v262, %v261
        %v272 = vpack.c.b16 %v264, %v263
        %281 = vmatpush.bf16.msra.mxu0 %v272
        %282 = vmatpush.bf16.msra.mxu0 %v271
        %283 = vmatpush.bf16.msra.mxu0 %v270
        %284 = vmatpush.bf16.msra.mxu0 %v269
        %285 = vmatpush.bf16.msra.mxu0 %v268
        %286 = vmatpush.bf16.msra.mxu0 %v267
        %287 = vmatpush.bf16.msra.mxu0 %v266
        %288 = vmatpush.bf16.msra.mxu0 %v265
        %289 = vmatmul.bf16.gmra.mxu0 %v225
        %v290 = vpop.f32.mrf.mxu0
        %v291 = vadd.f32 0.0, %v290
        %v292 = vpop.f32.mrf.mxu0
        %v293 = vadd.f32 0.0, %v292
        %294 = vmatmul.bf16.gmra.mxu0 %v226
        %v295 = vpop.f32.mrf.mxu0
        %v296 = vadd.f32 0.0, %v295
        %v297 = vpop.f32.mrf.mxu0
        %v298 = vadd.f32 0.0, %v297
        %299 = vmatmul.bf16.gmra.mxu0 %v227
        %v300 = vpop.f32.mrf.mxu0
        %v301 = vadd.f32 0.0, %v300
        %v302 = vpop.f32.mrf.mxu0
        %v303 = vadd.f32 0.0, %v302
        %304 = vmatmul.bf16.gmra.mxu0 %v228
        %v305 = vpop.f32.mrf.mxu0
        %v306 = vadd.f32 0.0, %v305
        %v307 = vpop.f32.mrf.mxu0
        %v308 = vadd.f32 0.0, %v307
        %309 = vdwg.mxu0
        %v310 = vpack.c.bf16 %v291, %v291
        %v311 = vpack.c.bf16 %v293, %v293
        %v312 = vpack.c.bf16 %v296, %v296
        %v313 = vpack.c.bf16 %v298, %v298
        %v314 = vpack.c.bf16 %v301, %v301
        %v315 = vpack.c.bf16 %v303, %v303
        %v316 = vpack.c.bf16 %v306, %v306
        %v317 = vpack.c.bf16 %v308, %v308
        %318 = vst [vmem:[%s183] sm:$0xf] %v310
        %319 = vst [vmem:[%s183 + $0x4] sm:$0xf] %v311
        %320 = vst [vmem:[%s183 + $0x8] sm:$0xf] %v312
        %321 = vst [vmem:[%s183 + $0xc] sm:$0xf] %v313
        %322 = vst [vmem:[%s183 + $0x10] sm:$0xf] %v314
        %323 = vst [vmem:[%s183 + $0x14] sm:$0xf] %v315
        %324 = vst [vmem:[%s183 + $0x18] sm:$0xf] %v316
        %325 = vst [vmem:[%s183 + $0x1c] sm:$0xf] %v317
        %s326 = smul.u32 8, %s17
        %p327 = scmp.lt.s32.totalorder %s326, 31
        %s328 = scalar_select %p327, %s326, 31
        %s329 = smul.addr %s328, 4
        %s330 = scalar_lea.vmem %s2, %s329
        // Predicated region
        $region37: #{_device_forward.4} parent=27 // pred_check
          %p331 = pneg %p82
        $region38: #{_device_forward.4} parent=27 // pred_check_branch
          %333 = sbr.rel (%p331) target = $region40
        $region39: #{_device_forward.4} parent=27 // pred_region
          %s334 = smul.u32 8, %s17
        $region40: #{_device_forward.4} parent=27 // pred_fallthru
          _
      $region28: #{_device_forward.4} parent=5 // pred_fallthru
        _
      %p335 = scmp.le.s32.totalorder 2, %s12
      // Predicated region
      $region41: #{_device_forward.4} parent=5 // pred_check
        %p336 = pneg %p335
      $region42: #{_device_forward.4} parent=5 // pred_check_branch
        %338 = sbr.rel (%p336) target = $region44
      $region43: #{_device_forward.4} parent=5 // pred_region
        %s339 = ssub.s32 %s12, 2
        // Predicated region
        $region45: #{_device_forward.4} parent=43 // pred_check
          %p340 = pneg %p88
        $region46: #{_device_forward.4} parent=43 // pred_check_branch
          %342 = sbr.rel (%p340) target = $region48
        $region47: #{_device_forward.4} parent=43 // pred_region
          %s343 = smul.u32 8, %s18
          %p344 = scmp.lt.s32.totalorder %s343, 31
          %s345 = scalar_select %p344, %s343, 31
          %s346 = smul.addr %s345, 4
          %s347 = scalar_lea.vmem %s2, %s346
        $region48: #{_device_forward.4} parent=43 // pred_fallthru
          _
      $region44: #{_device_forward.4} parent=5 // pred_fallthru
        _
    $region6: #{_device_forward.4} parent=1 // loop_footer
      %s16 = sadd.s32 1, %s12
    $region7: #{_device_forward.4} parent=1 // loop_footer_branch
      %11 = sbr.rel target = $region3
    $region8: #{_device_forward.4} parent=1 // loop_exit
      _
    %348 = vsyncpa [#allocation3], 1
    %s349 = scalar_lea.sflag [#allocation3], 1
    %350 = vsyncpa %s349, 1
    %351 = vsyncpa [#allocation5], 1

// kernel: _device_forward.5
$region0: #{_device_forward.5}
  #allocation0 [shape = 'u32[]', space=smem, size = 0x4, offset = 0x4, fixed_abs, tag = 'smem constant byte address 0x4 - core index']
  #allocation1 [shape = 'u32[72,128]{1,0:T(1,128)}', space=vmem, size = 0x9000, scoped, tag = 'internal scratch']
  #allocation2 [shape = 'f32[64,128]{1,0:T(8,128)}', space=vmem, size = 0x8000, scoped, tag = 'scratch operand']
  %s0 = inlined_call_operand.hbm [shape: bf16[256,256], index: 0, kind: input, shape index: {}]
  %s1 = inlined_call_operand.vmem [shape: bf16[256,128], index: 1, kind: input, shape index: {}]
  %s2 = inlined_call_operand.hbm [shape: bf16[256,128], index: 2, kind: input, shape index: {}]
  %s3 = inlined_call_operand.hbm [shape: bf16[512,128], index: 3, kind: input, shape index: {}]
  %s4 = inlined_call_operand.vmem [shape: f32[8,128], index: 4, kind: input, shape index: {}]
  %s5 = inlined_call_operand.vmem [shape: bf16[256,128], index: 5, kind: output, shape index: {0}]
  %s6 = inlined_call_operand.vmem [shape: f32[256,128], index: 6, kind: output, shape index: {1}]
  %s7 = inlined_call_operand.vmem [shape: f32[256,128], index: 7, kind: output, shape index: {2}]
  %8 = xla_tuple %s5, %s6, %s7
  %s9 = sld [smem:[#allocation0]]
  $region89: #{_device_forward.5} parent=0
    _
  %s11 = ssub.s32 1, %s9
  %s12 = scalar_select 0, %s11, %s9
  $region1: #{_device_forward.5} parent=0
    #allocation3 [shape = 'u8[32768]{0}', space=vmem, size = 0x8000, scoped, tag = 'input window, operand 0']
    #allocation4 [shape = 's32[2]{0}', space=sflag, size = 0x8, scoped, tag = 'scoped memory for _device_forward.5']
    #allocation5 [shape = 'u8[32768]{0}', space=vmem, size = 0x8000, scoped, tag = 'input window, operand 2']
    #allocation6 [shape = 's32[2]{0}', space=sflag, size = 0x8, scoped, tag = 'scoped memory for _device_forward.5']
    #allocation7 [shape = 'u8[131072]{0}', space=vmem, size = 0x20000, scoped, tag = 'input window, operand 3, single buffered']
    %13 = vsyncpa [#allocation4], 0
    %s14 = scalar_lea.sflag [#allocation4], 1
    %15 = vsyncpa %s14, 0
    %16 = vsyncpa [#allocation6], 0
    %s17 = scalar_lea.sflag [#allocation6], 1
    %18 = vsyncpa %s17, 0
    loop: start=0, step=1, limit=10
    $region2: #{_device_forward.5} parent=1 // loop_pre_header
      _
    $region3: #{_device_forward.5} parent=1 // loop_header
      %s20 = sphi 0, %s24
      %p21 = scmp.ge.s32.totalorder %s20, 10
      %s27 = sphi 0, %s39
      %s28 = sphi 0, %s35
      %s29 = sphi 0, %s27
      %s30 = sphi 0, %s28
      %s31 = sphi 0, %s29
      %s32 = sphi 0, %s30
      %s44 = sphi 0, %s46
      %s47 = sphi 0, %s44
      %s48 = sphi 0, %s47
      %s64 = sphi 0, %s48
      %s70 = sphi 0, %s72
      %s73 = sphi 0, %s70
      %s74 = sphi 0, %s73
      %s90 = sphi 0, %s74
      %s96 = sphi 0, %s98
      %s99 = sphi 0, %s96
      %s100 = sphi 0, %s99
      %s116 = sphi 0, %s100
      %s120 = sphi 0, %s120
      %s122 = sphi 0, %s120
      %s123 = sphi 0, %s122
      %s137 = sphi 0, %s123
      %s141 = sphi 0, %s141
      %s143 = sphi 0, %s141
      %s144 = sphi 0, %s143
      %s158 = sphi 0, %s144
      %s164 = sphi 0, %s166
      %s167 = sphi 0, %s164
      %s168 = sphi 0, %s167
      %s184 = sphi 0, %s168
      %s190 = sphi 0, %s192
      %s193 = sphi 0, %s190
      %s194 = sphi 0, %s193
      %s210 = sphi 0, %s194
      %s216 = sphi 0, %s218
      %s219 = sphi 0, %s216
      %s220 = sphi 0, %s219
      %s236 = sphi 0, %s220
    $region4: #{_device_forward.5} parent=1 // loop_header_branch
      %23 = sbr.rel (%p21) target = $region8
    $region5: #{_device_forward.5} parent=1 // loop_body
      %s25 = ssub.s32 %s20, 1
      %s26 = ssub.s32 %s20, 2
      %s33 = sadd.s32 1, %s28
      %p34 = scmp.ge.s32.totalorder %s33, 2
      %s35 = scalar_select %p34, 0, %s33
      %s36 = sadd.s32 1, %s27
      %s37 = scalar_select %p34, %s36, %s27
      %p38 = scmp.ge.s32.totalorder %s37, 4
      %s39 = scalar_select %p38, 0, %s37
      %s40 = ssub.s32 %s27, %s39
      %s41 = ssub.s32 %s28, %s35
      %s42 = sor.u32 %s40, %s41
      %p43 = scmp.eq.s32.totalorder %s42, 0
      %s45 = sadd.s32 %s44, 1
      %s46 = scalar_select %p43, %s44, %s45
      %p49 = pneg %p43
      %p50 = scmp.eq.s32.totalorder %s20, 7
      %p51 = por %p49, %p50
      %p52 = scmp.ne.s32.totalorder %s44, %s47
      %p53 = scmp.eq.s32.totalorder %s20, 0
      %p54 = por %p52, %p53
      %p55 = scmp.ne.s32.totalorder %s44, %s47
      %p56 = scmp.eq.s32.totalorder %s25, 7
      %p57 = por %p55, %p56
      %p58 = scmp.ne.s32.totalorder %s47, %s48
      %p59 = scmp.eq.s32.totalorder %s25, 0
      %p60 = por %p58, %p59
      %p61 = scmp.ne.s32.totalorder %s47, %s48
      %p62 = scmp.eq.s32.totalorder %s26, 7
      %p63 = por %p61, %p62
      %p65 = scmp.ne.s32.totalorder %s48, %s64
      %p66 = scmp.eq.s32.totalorder %s26, 0
      %p67 = por %p65, %p66
      %s68 = ssub.s32 %s28, %s35
      %p69 = scmp.eq.s32.totalorder %s68, 0
      %s71 = sadd.s32 %s70, 1
      %s72 = scalar_select %p69, %s70, %s71
      %p75 = pneg %p69
      %p76 = scmp.eq.s32.totalorder %s20, 7
      %p77 = por %p75, %p76
      %p78 = scmp.ne.s32.totalorder %s70, %s73
      %p79 = scmp.eq.s32.totalorder %s20, 0
      %p80 = por %p78, %p79
      %p81 = scmp.ne.s32.totalorder %s70, %s73
      %p82 = scmp.eq.s32.totalorder %s25, 7
      %p83 = por %p81, %p82
      %p84 = scmp.ne.s32.totalorder %s73, %s74
      %p85 = scmp.eq.s32.totalorder %s25, 0
      %p86 = por %p84, %p85
      %p87 = scmp.ne.s32.totalorder %s73, %s74
      %p88 = scmp.eq.s32.totalorder %s26, 7
      %p89 = por %p87, %p88
      %p91 = scmp.ne.s32.totalorder %s74, %s90
      %p92 = scmp.eq.s32.totalorder %s26, 0
      %p93 = por %p91, %p92
      %s94 = ssub.s32 %s27, %s39
      %p95 = scmp.eq.s32.totalorder %s94, 0
      %s97 = sadd.s32 %s96, 1
      %s98 = scalar_select %p95, %s96, %s97
      %p101 = pneg %p95
      %p102 = scmp.eq.s32.totalorder %s20, 7
      %p103 = por %p101, %p102
      %p104 = scmp.ne.s32.totalorder %s96, %s99
      %p105 = scmp.eq.s32.totalorder %s20, 0
      %p106 = por %p104, %p105
      %p107 = scmp.ne.s32.totalorder %s96, %s99
      %p108 = scmp.eq.s32.totalorder %s25, 7
      %p109 = por %p107, %p108
      %p110 = scmp.ne.s32.totalorder %s99, %s100
      %p111 = scmp.eq.s32.totalorder %s25, 0
      %p112 = por %p110, %p111
      %p113 = scmp.ne.s32.totalorder %s99, %s100
      %p114 = scmp.eq.s32.totalorder %s26, 7
      %p115 = por %p113, %p114
      %p117 = scmp.ne.s32.totalorder %s100, %s116
      %p118 = scmp.eq.s32.totalorder %s26, 0
      %p119 = por %p117, %p118
      %s121 = sadd.s32 %s120, 1
      %p124 = scmp.eq.s32.totalorder %s20, 7
      %p125 = scmp.ne.s32.totalorder %s120, %s122
      %p126 = scmp.eq.s32.totalorder %s20, 0
      %p127 = por %p125, %p126
      %p128 = scmp.ne.s32.totalorder %s120, %s122
      %p129 = scmp.eq.s32.totalorder %s25, 7
      %p130 = por %p128, %p129
      %p131 = scmp.ne.s32.totalorder %s122, %s123
      %p132 = scmp.eq.s32.totalorder %s25, 0
      %p133 = por %p131, %p132
      %p134 = scmp.ne.s32.totalorder %s122, %s123
      %p135 = scmp.eq.s32.totalorder %s26, 7
      %p136 = por %p134, %p135
      %p138 = scmp.ne.s32.totalorder %s123, %s137
      %p139 = scmp.eq.s32.totalorder %s26, 0
      %p140 = por %p138, %p139
      %s142 = sadd.s32 %s141, 1
      %p145 = scmp.eq.s32.totalorder %s20, 7
      %p146 = scmp.ne.s32.totalorder %s141, %s143
      %p147 = scmp.eq.s32.totalorder %s20, 0
      %p148 = por %p146, %p147
      %p149 = scmp.ne.s32.totalorder %s141, %s143
      %p150 = scmp.eq.s32.totalorder %s25, 7
      %p151 = por %p149, %p150
      %p152 = scmp.ne.s32.totalorder %s143, %s144
      %p153 = scmp.eq.s32.totalorder %s25, 0
      %p154 = por %p152, %p153
      %p155 = scmp.ne.s32.totalorder %s143, %s144
      %p156 = scmp.eq.s32.totalorder %s26, 7
      %p157 = por %p155, %p156
      %p159 = scmp.ne.s32.totalorder %s144, %s158
      %p160 = scmp.eq.s32.totalorder %s26, 0
      %p161 = por %p159, %p160
      %s162 = ssub.s32 %s27, %s39
      %p163 = scmp.eq.s32.totalorder %s162, 0
      %s165 = sadd.s32 %s164, 1
      %s166 = scalar_select %p163, %s164, %s165
      %p169 = pneg %p163
      %p170 = scmp.eq.s32.totalorder %s20, 7
      %p171 = por %p169, %p170
      %p172 = scmp.ne.s32.totalorder %s164, %s167
      %p173 = scmp.eq.s32.totalorder %s20, 0
      %p174 = por %p172, %p173
      %p175 = scmp.ne.s32.totalorder %s164, %s167
      %p176 = scmp.eq.s32.totalorder %s25, 7
      %p177 = por %p175, %p176
      %p178 = scmp.ne.s32.totalorder %s167, %s168
      %p179 = scmp.eq.s32.totalorder %s25, 0
      %p180 = por %p178, %p179
      %p181 = scmp.ne.s32.totalorder %s167, %s168
      %p182 = scmp.eq.s32.totalorder %s26, 7
      %p183 = por %p181, %p182
      %p185 = scmp.ne.s32.totalorder %s168, %s184
      %p186 = scmp.eq.s32.totalorder %s26, 0
      %p187 = por %p185, %p186
      %s188 = ssub.s32 %s27, %s39
      %p189 = scmp.eq.s32.totalorder %s188, 0
      %s191 = sadd.s32 %s190, 1
      %s192 = scalar_select %p189, %s190, %s191
      %p195 = pneg %p189
      %p196 = scmp.eq.s32.totalorder %s20, 7
      %p197 = por %p195, %p196
      %p198 = scmp.ne.s32.totalorder %s190, %s193
      %p199 = scmp.eq.s32.totalorder %s20, 0
      %p200 = por %p198, %p199
      %p201 = scmp.ne.s32.totalorder %s190, %s193
      %p202 = scmp.eq.s32.totalorder %s25, 7
      %p203 = por %p201, %p202
      %p204 = scmp.ne.s32.totalorder %s193, %s194
      %p205 = scmp.eq.s32.totalorder %s25, 0
      %p206 = por %p204, %p205
      %p207 = scmp.ne.s32.totalorder %s193, %s194
      %p208 = scmp.eq.s32.totalorder %s26, 7
      %p209 = por %p207, %p208
      %p211 = scmp.ne.s32.totalorder %s194, %s210
      %p212 = scmp.eq.s32.totalorder %s26, 0
      %p213 = por %p211, %p212
      %s214 = ssub.s32 %s27, %s39
      %p215 = scmp.eq.s32.totalorder %s214, 0
      %s217 = sadd.s32 %s216, 1
      %s218 = scalar_select %p215, %s216, %s217
      %p221 = pneg %p215
      %p222 = scmp.eq.s32.totalorder %s20, 7
      %p223 = por %p221, %p222
      %p224 = scmp.ne.s32.totalorder %s216, %s219
      %p225 = scmp.eq.s32.totalorder %s20, 0
      %p226 = por %p224, %p225
      %p227 = scmp.ne.s32.totalorder %s216, %s219
      %p228 = scmp.eq.s32.totalorder %s25, 7
      %p229 = por %p227, %p228
      %p230 = scmp.ne.s32.totalorder %s219, %s220
      %p231 = scmp.eq.s32.totalorder %s25, 0
      %p232 = por %p230, %p231
      %p233 = scmp.ne.s32.totalorder %s219, %s220
      %p234 = scmp.eq.s32.totalorder %s26, 7
      %p235 = por %p233, %p234
      %p237 = scmp.ne.s32.totalorder %s220, %s236
      %p238 = scmp.eq.s32.totalorder %s26, 0
      %p239 = por %p237, %p238
      %p240 = scmp.le.s32.totalorder 1, %s20
      %p241 = scmp.lt.s32.totalorder %s20, 9
      %p242 = pnand %p240, %p241
      %p243 = pneg %p242
      // Predicated region
      $region9: #{_device_forward.5} parent=5 // pred_check
        _
      $region10: #{_device_forward.5} parent=5 // pred_check_branch
        %245 = sbr.rel (%p242) target = $region12
      $region11: #{_device_forward.5} parent=5 // pred_region
        %s246 = ssub.s32 %s20, 1
        // Predicated region
        $region13: #{_device_forward.5} parent=11 // pred_check
          %p247 = pneg %p133
        $region14: #{_device_forward.5} parent=11 // pred_check_branch
          %249 = sbr.rel (%p247) target = $region16
        $region15: #{_device_forward.5} parent=11 // pred_region
          %251 = vsyncadd [#allocation6], 0
          %s252 = sshll.u32 %s3, 4
          %s253 = int_to_ptr.hbm [resolvable:$true] %s252
          %s254 = sshll.u32 [#allocation7], 4
          %s255 = int_to_ptr.vmem [resolvable:$true] %s254
          %260 = dma.hbm_to_vmem [thread:$0]  %s253, 4096, %s255, [#allocation6], 64, 64, 4
        $region16: #{_device_forward.5} parent=11 // pred_fallthru
          _
        // Predicated region
        $region17: #{_device_forward.5} parent=11 // pred_check
          %p261 = pneg %p154
        $region18: #{_device_forward.5} parent=11 // pred_check_branch
          %263 = sbr.rel (%p261) target = $region20
        $region19: #{_device_forward.5} parent=11 // pred_region
          _
        $region20: #{_device_forward.5} parent=11 // pred_fallthru
          _
      $region12: #{_device_forward.5} parent=5 // pred_fallthru
        _
      %p264 = scmp.lt.s32.totalorder %s20, 8
      // Predicated region
      $region21: #{_device_forward.5} parent=5 // pred_check
        %p265 = pneg %p264
      $region22: #{_device_forward.5} parent=5 // pred_check_branch
        %267 = sbr.rel (%p265) target = $region24
      $region23: #{_device_forward.5} parent=5 // pred_region
        // Predicated region
        $region25: #{_device_forward.5} parent=23 // pred_check
          %p268 = pneg %p54
        $region26: #{_device_forward.5} parent=23 // pred_check_branch
          %270 = sbr.rel (%p268) target = $region28
        $region27: #{_device_forward.5} parent=23 // pred_region
          %s271 = sand.u32 %s44, 1
          %s272 = scalar_lea.sflag [#allocation4], %s271
          %s273 = sand.u32 %s44, 1
          %s274 = smul.addr %s273, 32
          %s275 = scalar_lea.vmem [#allocation3], %s274
          %s276 = smul.u32 8, %s27
          %278 = vsyncadd %s272, 0
          %s279 = smul.addr %s276, 2
          %s280 = sadd.s32 %s28, %s279
          %s281 = smul.addr %s280, 4
          %s282 = scalar_lea.hbm %s0, %s281
          %s283 = sshll.u32 %s282, 4
          %s284 = int_to_ptr.hbm [resolvable:$true] %s283
          %s285 = sshll.u32 %s275, 4
          %s286 = int_to_ptr.vmem [resolvable:$true] %s285
          %291 = dma.hbm_to_vmem [thread:$0]  %s284, 512, %s286, %s272, 128, 64, 4
        $region28: #{_device_forward.5} parent=23 // pred_fallthru
          _
        // Predicated region
        $region29: #{_device_forward.5} parent=23 // pred_check
          %p292 = pneg %p80
        $region30: #{_device_forward.5} parent=23 // pred_check_branch
          %294 = sbr.rel (%p292) target = $region32
        $region31: #{_device_forward.5} parent=23 // pred_region
          %s295 = smul.u32 16, %s28
          %p296 = scmp.lt.s32.totalorder %s295, 31
          %s297 = scalar_select %p296, %s295, 31
          %s298 = smul.addr %s297, 4
          %s299 = scalar_lea.vmem %s1, %s298
          %s300 = smul.u32 16, %s28
        $region32: #{_device_forward.5} parent=23 // pred_fallthru
          _
        // Predicated region
        $region33: #{_device_forward.5} parent=23 // pred_check
          %p301 = pneg %p106
        $region34: #{_device_forward.5} parent=23 // pred_check_branch
          %303 = sbr.rel (%p301) target = $region36
        $region35: #{_device_forward.5} parent=23 // pred_region
          %s304 = sand.u32 %s20, 1
          %s305 = scalar_lea.sflag [#allocation6], %s304
          %s306 = sand.u32 %s96, 1
          %s307 = smul.addr %s306, 32
          %s308 = scalar_lea.vmem [#allocation5], %s307
          %s309 = smul.u32 8, %s27
          %311 = vsyncadd %s305, 0
          %s312 = smul.addr %s309, 4
          %s313 = scalar_lea.hbm %s2, %s312
          %s314 = sshll.u32 %s313, 4
          %s315 = int_to_ptr.hbm [resolvable:$true] %s314
          %s316 = sshll.u32 %s308, 4
          %s317 = int_to_ptr.vmem [resolvable:$true] %s316
          %322 = dma.hbm_to_vmem [thread:$0]  %s315, 512, %s317, %s305, 64, 64, 4
        $region36: #{_device_forward.5} parent=23 // pred_fallthru
          _
      $region24: #{_device_forward.5} parent=5 // pred_fallthru
        _
      %p323 = scmp.le.s32.totalorder 1, %s20
      %p324 = scmp.lt.s32.totalorder %s20, 9
      %p325 = pnand %p323, %p324
      %p326 = pneg %p325
      // Predicated region
      $region37: #{_device_forward.5} parent=5 // pred_check
        _
      $region38: #{_device_forward.5} parent=5 // pred_check_branch
        %328 = sbr.rel (%p325) target = $region40
      $region39: #{_device_forward.5} parent=5 // pred_region
        %s329 = ssub.s32 %s20, 1
        %s330 = sand.u32 %s47, 1
        %s331 = scalar_lea.sflag [#allocation4], %s330
        %s332 = sand.u32 %s47, 1
        %s333 = smul.addr %s332, 32
        %s334 = scalar_lea.vmem [#allocation3], %s333
        // Predicated region
        $region41: #{_device_forward.5} parent=39 // pred_check
          %p335 = pneg %p60
        $region42: #{_device_forward.5} parent=39 // pred_check_branch
          %337 = sbr.rel (%p335) target = $region44
        $region43: #{_device_forward.5} parent=39 // pred_region
          %339 = dma.done %s331, 512
        $region44: #{_device_forward.5} parent=39 // pred_fallthru
          _
        %s340 = sand.u32 %s25, 1
        %s341 = scalar_lea.sflag [#allocation6], %s340
        %s342 = sand.u32 %s99, 1
        %s343 = smul.addr %s342, 32
        %s344 = scalar_lea.vmem [#allocation5], %s343
        // Predicated region
        $region45: #{_device_forward.5} parent=39 // pred_check
          %p345 = pneg %p112
        $region46: #{_device_forward.5} parent=39 // pred_check_branch
          %347 = sbr.rel (%p345) target = $region48
        $region47: #{_device_forward.5} parent=39 // pred_region
          %349 = dma.done %s341, 512
        $region48: #{_device_forward.5} parent=39 // pred_fallthru
          _
        // Predicated region
        $region49: #{_device_forward.5} parent=39 // pred_check
          %p350 = pneg %p133
        $region50: #{_device_forward.5} parent=39 // pred_check_branch
          %352 = sbr.rel (%p350) target = $region52
        $region51: #{_device_forward.5} parent=39 // pred_region
          %354 = dma.done [#allocation6], 4096
        $region52: #{_device_forward.5} parent=39 // pred_fallthru
          _
        %s355 = sand.u32 %s47, 1
        %s356 = scalar_lea.sflag [#allocation4], %s355
        %s357 = sand.u32 %s47, 1
        %s358 = smul.addr %s357, 32
        %s359 = scalar_lea.vmem [#allocation3], %s358
        %p360 = pneg %p60
        %p361 = pneg %p57
        %s362 = smul.u32 16, %s30
        %p363 = scmp.lt.s32.totalorder %s362, 31
        %s364 = scalar_select %p363, %s362, 31
        %s365 = smul.addr %s364, 4
        %s366 = scalar_lea.vmem %s1, %s365
        %p367 = pneg %p86
        %p368 = pneg %p83
        %s369 = sand.u32 %s25, 1
        %s370 = scalar_lea.sflag [#allocation6], %s369
        %s371 = sand.u32 %s99, 1
        %s372 = smul.addr %s371, 32
        %s373 = scalar_lea.vmem [#allocation5], %s372
        %p374 = pneg %p112
        %p375 = pneg %p109
        %p376 = pneg %p133
        %p377 = pneg %p130
        %p378 = pneg %p154
        %p379 = pneg %p151
        %p380 = pneg %p180
        %p381 = pneg %p177
        %s382 = smul.u32 8, %s29
        %p383 = scmp.lt.s32.totalorder %s382, 31
        %s384 = scalar_select %p383, %s382, 31
        %s385 = smul.addr %s384, 4
        %s386 = scalar_lea.vmem %s5, %s385
        %p387 = pneg %p206
        %p388 = pneg %p203
        %s389 = smul.u32 8, %s29
        %p390 = scmp.lt.s32.totalorder %s389, 31
        %s391 = scalar_select %p390, %s389, 31
        %s392 = smul.addr %s391, 8
        %s393 = scalar_lea.vmem %s6, %s392
        %p394 = pneg %p232
        %p395 = pneg %p229
        %s396 = smul.u32 8, %s29
        %p397 = scmp.lt.s32.totalorder %s396, 31
        %s398 = scalar_select %p397, %s396, 31
        %s399 = smul.addr %s398, 8
        %s400 = scalar_lea.vmem %s7, %s399
        %s401 = smul.u32 8, %s29
        %s402 = smul.u32 16, %s30
        %p403 = scmp.lt.s32.totalorder %s402, 31
        %s404 = scalar_select %p403, %s402, 31
        %s405 = smul.addr %s404, 4
        %s406 = scalar_lea.vmem %s1, %s405
        %s407 = smul.u32 16, %s30
        %s408 = smul.u32 8, %s29
        %s409 = smul.u32 8, %s29
        %p410 = scmp.lt.s32.totalorder %s409, 31
        %s411 = scalar_select %p410, %s409, 31
        %s412 = smul.addr %s411, 4
        %s413 = scalar_lea.vmem %s5, %s412
        %s414 = smul.u32 8, %s29
        %s415 = smul.u32 8, %s29
        %p416 = scmp.lt.s32.totalorder %s415, 31
        %s417 = scalar_select %p416, %s415, 31
        %s418 = smul.addr %s417, 8
        %s419 = scalar_lea.vmem %s6, %s418
        %s420 = smul.u32 8, %s29
        %s421 = smul.u32 8, %s29
        %p422 = scmp.lt.s32.totalorder %s421, 31
        %s423 = scalar_select %p422, %s421, 31
        %s424 = smul.addr %s423, 8
        %s425 = scalar_lea.vmem %s7, %s424
        %s426 = smul.u32 8, %s29
        %p427 = scmp.eq.s32.totalorder %s30, 0
        // Predicated region
        $region53: #{_device_forward.5} parent=39 // pred_check
          %p428 = pneg %p427
        $region54: #{_device_forward.5} parent=39 // pred_check_branch
          %430 = sbr.rel (%p428) target = $region56
        $region55: #{_device_forward.5} parent=39 // pred_region
          %431 = vst [vmem:[#allocation2] sm:$0xff] 0.0
          %432 = vst [vmem:[#allocation2 + $0x8] sm:$0xff] 0.0
          %433 = vst [vmem:[#allocation2 + $0x10] sm:$0xff] 0.0
          %434 = vst [vmem:[#allocation2 + $0x18] sm:$0xff] 0.0
          %435 = vst [vmem:[#allocation2 + $0x20] sm:$0xff] 0.0
          %436 = vst [vmem:[#allocation2 + $0x28] sm:$0xff] 0.0
          %437 = vst [vmem:[#allocation2 + $0x30] sm:$0xff] 0.0
          %438 = vst [vmem:[#allocation2 + $0x38] sm:$0xff] 0.0
        $region56: #{_device_forward.5} parent=39 // pred_fallthru
          _
        %v439 = vld [vmem:[#allocation2] sm:$0xff]
        %v440 = vld [vmem:[#allocation2 + $0x8] sm:$0xff]
        %v441 = vld [vmem:[#allocation2 + $0x10] sm:$0xff]
        %v442 = vld [vmem:[#allocation2 + $0x18] sm:$0xff]
        %v443 = vld [vmem:[#allocation2 + $0x20] sm:$0xff]
        %v444 = vld [vmem:[#allocation2 + $0x28] sm:$0xff]
        %v445 = vld [vmem:[#allocation2 + $0x30] sm:$0xff]
        %v446 = vld [vmem:[#allocation2 + $0x38] sm:$0xff]
        %v447 = vld [vmem:[%s334] sm:$0xf]
        %v448 = vld [vmem:[%s334 + $0x4] sm:$0xf]
        %v449 = vld [vmem:[%s334 + $0x8] sm:$0xf]
        %v450 = vld [vmem:[%s334 + $0xc] sm:$0xf]
        %v451 = vld [vmem:[%s334 + $0x10] sm:$0xf]
        %v452 = vld [vmem:[%s334 + $0x14] sm:$0xf]
        %v453 = vld [vmem:[%s334 + $0x18] sm:$0xf]
        %v454 = vld [vmem:[%s334 + $0x1c] sm:$0xf]
        %v455 = vld [vmem:[%s406] sm:$0xf]
        %v456 = vld [vmem:[%s406 + $0x4] sm:$0xf]
        %v457 = vld [vmem:[%s406 + $0x8] sm:$0xf]
        %v458 = vld [vmem:[%s406 + $0xc] sm:$0xf]
        %v459 = vld [vmem:[%s406 + $0x10] sm:$0xf]
        %v460 = vld [vmem:[%s406 + $0x14] sm:$0xf]
        %v461 = vld [vmem:[%s406 + $0x18] sm:$0xf]
        %v462 = vld [vmem:[%s406 + $0x1c] sm:$0xf]
        %v463 = vld [vmem:[%s406 + $0x20] sm:$0xf]
        %v464 = vld [vmem:[%s406 + $0x24] sm:$0xf]
        %v465 = vld [vmem:[%s406 + $0x28] sm:$0xf]
        %v466 = vld [vmem:[%s406 + $0x2c] sm:$0xf]
        %v467 = vld [vmem:[%s406 + $0x30] sm:$0xf]
        %v468 = vld [vmem:[%s406 + $0x34] sm:$0xf]
        %v469 = vld [vmem:[%s406 + $0x38] sm:$0xf]
        %v470 = vld [vmem:[%s406 + $0x3c] sm:$0xf]
        %v479 = vunpack.c.l.b16 %v447
        %v480 = vunpack.c.l.b16 %v448
        %v481 = vunpack.c.l.b16 %v449
        %v482 = vunpack.c.l.b16 %v450
        %v483 = vunpack.c.l.b16 %v451
        %v484 = vunpack.c.l.b16 %v452
        %v485 = vunpack.c.l.b16 %v453
        %v486 = vunpack.c.l.b16 %v454
        %v487 = vpack.c.b16 %v480, %v479
        %v488 = vpack.c.b16 %v482, %v481
        %v489 = vpack.c.b16 %v484, %v483
        %v490 = vpack.c.b16 %v486, %v485
        %v511 = vunpack.c.l.b16 %v455
        %v512 = vunpack.c.l.b16 %v456
        %v513 = vunpack.c.l.b16 %v457
        %v514 = vunpack.c.l.b16 %v458
        %v515 = vunpack.c.l.b16 %v459
        %v516 = vunpack.c.l.b16 %v460
        %v517 = vunpack.c.l.b16 %v461
        %v518 = vunpack.c.l.b16 %v462
        %v519 = vunpack.c.l.b16 %v463
        %v520 = vunpack.c.l.b16 %v464
        %v521 = vunpack.c.l.b16 %v465
        %v522 = vunpack.c.l.b16 %v466
        %v523 = vunpack.c.l.b16 %v467
        %v524 = vunpack.c.l.b16 %v468
        %v525 = vunpack.c.l.b16 %v469
        %v526 = vunpack.c.l.b16 %v470
        %v527 = vpack.c.b16 %v512, %v511
        %v528 = vpack.c.b16 %v514, %v513
        %v529 = vpack.c.b16 %v516, %v515
        %v530 = vpack.c.b16 %v518, %v517
        %v531 = vpack.c.b16 %v520, %v519
        %v532 = vpack.c.b16 %v522, %v521
        %v533 = vpack.c.b16 %v524, %v523
        %v534 = vpack.c.b16 %v526, %v525
        %543 = vmatpush.bf16.msra.mxu0 %v534
        %544 = vmatpush.bf16.msra.mxu0 %v533
        %545 = vmatpush.bf16.msra.mxu0 %v532
        %546 = vmatpush.bf16.msra.mxu0 %v531
        %547 = vmatpush.bf16.msra.mxu0 %v530
        %548 = vmatpush.bf16.msra.mxu0 %v529
        %549 = vmatpush.bf16.msra.mxu0 %v528
        %550 = vmatpush.bf16.msra.mxu0 %v527
        %551 = vmatmul.bf16.gmra.mxu0 %v487
        %v552 = vpop.f32.mrf.mxu0
        %v553 = vadd.f32 0.0, %v552
        %v554 = vpop.f32.mrf.mxu0
        %v555 = vadd.f32 0.0, %v554
        %556 = vmatmul.bf16.gmra.mxu0 %v488
        %v557 = vpop.f32.mrf.mxu0
        %v558 = vadd.f32 0.0, %v557
        %v559 = vpop.f32.mrf.mxu0
        %v560 = vadd.f32 0.0, %v559
        %561 = vmatmul.bf16.gmra.mxu0 %v489
        %v562 = vpop.f32.mrf.mxu0
        %v563 = vadd.f32 0.0, %v562
        %v564 = vpop.f32.mrf.mxu0
        %v565 = vadd.f32 0.0, %v564
        %566 = vmatmul.bf16.gmra.mxu0 %v490
        %v567 = vpop.f32.mrf.mxu0
        %v568 = vadd.f32 0.0, %v567
        %v569 = vpop.f32.mrf.mxu0
        %v570 = vadd.f32 0.0, %v569
        %571 = vdwg.mxu0
        %v572 = vadd.f32 %v439, %v553
        %v573 = vadd.f32 %v440, %v555
        %v574 = vadd.f32 %v441, %v558
        %v575 = vadd.f32 %v442, %v560
        %v576 = vadd.f32 %v443, %v563
        %v577 = vadd.f32 %v444, %v565
        %v578 = vadd.f32 %v445, %v568
        %v579 = vadd.f32 %v446, %v570
        %580 = vst [vmem:[#allocation2] sm:$0xff] %v572
        %581 = vst [vmem:[#allocation2 + $0x8] sm:$0xff] %v573
        %582 = vst [vmem:[#allocation2 + $0x10] sm:$0xff] %v574
        %583 = vst [vmem:[#allocation2 + $0x18] sm:$0xff] %v575
        %584 = vst [vmem:[#allocation2 + $0x20] sm:$0xff] %v576
        %585 = vst [vmem:[#allocation2 + $0x28] sm:$0xff] %v577
        %586 = vst [vmem:[#allocation2 + $0x30] sm:$0xff] %v578
        %587 = vst [vmem:[#allocation2 + $0x38] sm:$0xff] %v579
        %p588 = scmp.eq.s32.totalorder %s30, 1
        // Predicated region
        $region57: #{_device_forward.5} parent=39 // pred_check
          %p589 = pneg %p588
        $region58: #{_device_forward.5} parent=39 // pred_check_branch
          %591 = sbr.rel (%p589) target = $region60
        $region59: #{_device_forward.5} parent=39 // pred_region
          %v592 = vld [vmem:[%s4] sm:$0xff]
          %v593 = vld [vmem:[#allocation2] sm:$0xff]
          %v594 = vld [vmem:[#allocation2 + $0x8] sm:$0xff]
          %v595 = vld [vmem:[#allocation2 + $0x10] sm:$0xff]
          %v596 = vld [vmem:[#allocation2 + $0x18] sm:$0xff]
          %v597 = vld [vmem:[#allocation2 + $0x20] sm:$0xff]
          %v598 = vld [vmem:[#allocation2 + $0x28] sm:$0xff]
          %v599 = vld [vmem:[#allocation2 + $0x30] sm:$0xff]
          %v600 = vld [vmem:[#allocation2 + $0x38] sm:$0xff]
          %v601 = vperm.slane %v592, 0
          %v602 = vadd.f32 %v593, %v601
          %v603 = vadd.f32 %v594, %v601
          %v604 = vadd.f32 %v595, %v601
          %v605 = vadd.f32 %v596, %v601
          %v606 = vadd.f32 %v597, %v601
          %v607 = vadd.f32 %v598, %v601
          %v608 = vadd.f32 %v599, %v601
          %v609 = vadd.f32 %v600, %v601
          %v610 = vmax.f32 %v602, 0.0
          %v611 = vmax.f32 %v603, 0.0
          %v612 = vmax.f32 %v604, 0.0
          %v613 = vmax.f32 %v605, 0.0
          %v614 = vmax.f32 %v606, 0.0
          %v615 = vmax.f32 %v607, 0.0
          %v616 = vmax.f32 %v608, 0.0
          %v617 = vmax.f32 %v609, 0.0
          %v618 = vmin.f32 %v602, 0.0
          %v619 = vmin.f32 %v603, 0.0
          %v620 = vmin.f32 %v604, 0.0
          %v621 = vmin.f32 %v605, 0.0
          %v622 = vmin.f32 %v606, 0.0
          %v623 = vmin.f32 %v607, 0.0
          %v624 = vmin.f32 %v608, 0.0
          %v625 = vmin.f32 %v609, 0.0
          %v626 = vperm.slane %v592, 4
          %v627 = vmul.f32 %v626, %v618
          %v628 = vmul.f32 %v626, %v619
          %v629 = vmul.f32 %v626, %v620
          %v630 = vmul.f32 %v626, %v621
          %v631 = vmul.f32 %v626, %v622
          %v632 = vmul.f32 %v626, %v623
          %v633 = vmul.f32 %v626, %v624
          %v634 = vmul.f32 %v626, %v625
          %v635 = vadd.f32 %v610, %v627
          %v636 = vadd.f32 %v611, %v628
          %v637 = vadd.f32 %v612, %v629
          %v638 = vadd.f32 %v613, %v630
          %v639 = vadd.f32 %v614, %v631
          %v640 = vadd.f32 %v615, %v632
          %v641 = vadd.f32 %v616, %v633
          %v642 = vadd.f32 %v617, %v634
          %v643 = vpack.c.bf16 %v636, %v635
          %v644 = vpack.c.bf16 %v638, %v637
          %v645 = vpack.c.bf16 %v640, %v639
          %v646 = vpack.c.bf16 %v642, %v641
          %v647 = vld [vmem:[#allocation7 + $0x40] sm:$0xf]
          %v648 = vld [vmem:[#allocation7 + $0x44] sm:$0xf]
          %v649 = vld [vmem:[#allocation7 + $0x48] sm:$0xf]
          %v650 = vld [vmem:[#allocation7 + $0x4c] sm:$0xf]
          %v651 = vld [vmem:[#allocation7 + $0x50] sm:$0xf]
          %v652 = vld [vmem:[#allocation7 + $0x54] sm:$0xf]
          %v653 = vld [vmem:[#allocation7 + $0x58] sm:$0xf]
          %v654 = vld [vmem:[#allocation7 + $0x5c] sm:$0xf]
          %v655 = vld [vmem:[#allocation7 + $0x60] sm:$0xf]
          %v656 = vld [vmem:[#allocation7 + $0x64] sm:$0xf]
          %v657 = vld [vmem:[#allocation7 + $0x68] sm:$0xf]
          %v658 = vld [vmem:[#allocation7 + $0x6c] sm:$0xf]
          %v659 = vld [vmem:[#allocation7 + $0x70] sm:$0xf]
          %v660 = vld [vmem:[#allocation7 + $0x74] sm:$0xf]
          %v661 = vld [vmem:[#allocation7 + $0x78] sm:$0xf]
          %v662 = vld [vmem:[#allocation7 + $0x7c] sm:$0xf]
          %v679 = vunpack.c.l.b16 %v647
          %v680 = vunpack.c.l.b16 %v648
          %v681 = vunpack.c.l.b16 %v649
          %v682 = vunpack.c.l.b16 %v650
          %v683 = vunpack.c.l.b16 %v651
          %v684 = vunpack.c.l.b16 %v652
          %v685 = vunpack.c.l.b16 %v653
          %v686 = vunpack.c.l.b16 %v654
          %v687 = vunpack.c.l.b16 %v655
          %v688 = vunpack.c.l.b16 %v656
          %v689 = vunpack.c.l.b16 %v657
          %v690 = vunpack.c.l.b16 %v658
          %v691 = vunpack.c.l.b16 %v659
          %v692 = vunpack.c.l.b16 %v660
          %v693 = vunpack.c.l.b16 %v661
          %v694 = vunpack.c.l.b16 %v662
          %v695 = vpack.c.b16 %v680, %v679
          %v696 = vpack.c.b16 %v682, %v681
          %v697 = vpack.c.b16 %v684, %v683
          %v698 = vpack.c.b16 %v686, %v685
          %v699 = vpack.c.b16 %v688, %v687
          %v700 = vpack.c.b16 %v690, %v689
          %v701 = vpack.c.b16 %v692, %v691
          %v702 = vpack.c.b16 %v694, %v693
          %711 = vmatpush.bf16.msra.mxu0 %v702
          %712 = vmatpush.bf16.msra.mxu0 %v701
          %713 = vmatpush.bf16.msra.mxu0 %v700
          %714 = vmatpush.bf16.msra.mxu0 %v699
          %715 = vmatpush.bf16.msra.mxu0 %v698
          %716 = vmatpush.bf16.msra.mxu0 %v697
          %717 = vmatpush.bf16.msra.mxu0 %v696
          %718 = vmatpush.bf16.msra.mxu0 %v695
          %719 = vmatmul.bf16.gmra.mxu0 %v643
          %v720 = vpop.f32.mrf.mxu0
          %v721 = vadd.f32 0.0, %v720
          %v722 = vpop.f32.mrf.mxu0
          %v723 = vadd.f32 0.0, %v722
          %724 = vmatmul.bf16.gmra.mxu0 %v644
          %v725 = vpop.f32.mrf.mxu0
          %v726 = vadd.f32 0.0, %v725
          %v727 = vpop.f32.mrf.mxu0
          %v728 = vadd.f32 0.0, %v727
          %729 = vmatmul.bf16.gmra.mxu0 %v645
          %v730 = vpop.f32.mrf.mxu0
          %v731 = vadd.f32 0.0, %v730
          %v732 = vpop.f32.mrf.mxu0
          %v733 = vadd.f32 0.0, %v732
          %734 = vmatmul.bf16.gmra.mxu0 %v646
          %v735 = vpop.f32.mrf.mxu0
          %v736 = vadd.f32 0.0, %v735
          %v737 = vpop.f32.mrf.mxu0
          %v738 = vadd.f32 0.0, %v737
          %739 = vdwg.mxu0
          %v740 = vpack.c.bf16 %v721, %v721
          %v741 = vpack.c.bf16 %v723, %v723
          %v742 = vpack.c.bf16 %v726, %v726
          %v743 = vpack.c.bf16 %v728, %v728
          %v744 = vpack.c.bf16 %v731, %v731
          %v745 = vpack.c.bf16 %v733, %v733
          %v746 = vpack.c.bf16 %v736, %v736
          %v747 = vpack.c.bf16 %v738, %v738
          %748 = vst [vmem:[%s413] sm:$0xf] %v740
          %749 = vst [vmem:[%s413 + $0x4] sm:$0xf] %v741
          %750 = vst [vmem:[%s413 + $0x8] sm:$0xf] %v742
          %751 = vst [vmem:[%s413 + $0xc] sm:$0xf] %v743
          %752 = vst [vmem:[%s413 + $0x10] sm:$0xf] %v744
          %753 = vst [vmem:[%s413 + $0x14] sm:$0xf] %v745
          %754 = vst [vmem:[%s413 + $0x18] sm:$0xf] %v746
          %755 = vst [vmem:[%s413 + $0x1c] sm:$0xf] %v747
          %v756 = vld [vmem:[%s344] sm:$0xf]
          %v757 = vld [vmem:[%s344 + $0x4] sm:$0xf]
          %v758 = vld [vmem:[%s344 + $0x8] sm:$0xf]
          %v759 = vld [vmem:[%s344 + $0xc] sm:$0xf]
          %v760 = vld [vmem:[%s344 + $0x10] sm:$0xf]
          %v761 = vld [vmem:[%s344 + $0x14] sm:$0xf]
          %v762 = vld [vmem:[%s344 + $0x18] sm:$0xf]
          %v763 = vld [vmem:[%s344 + $0x1c] sm:$0xf]
          %v764 = vunpack.c.l.bf16 %v756
          %v765 = vunpack.c.l.bf16 %v757
          %v766 = vunpack.c.l.bf16 %v758
          %v767 = vunpack.c.l.bf16 %v759
          %v768 = vunpack.c.l.bf16 %v760
          %v769 = vunpack.c.l.bf16 %v761
          %v770 = vunpack.c.l.bf16 %v762
          %v771 = vunpack.c.l.bf16 %v763
          %v772 = vadd.f32 %v635, %v764
          %v773 = vadd.f32 %v636, %v765
          %v774 = vadd.f32 %v637, %v766
          %v775 = vadd.f32 %v638, %v767
          %v776 = vadd.f32 %v639, %v768
          %v777 = vadd.f32 %v640, %v769
          %v778 = vadd.f32 %v641, %v770
          %v779 = vadd.f32 %v642, %v771
          %v780 = vpack.c.bf16 %v773, %v772
          %v781 = vpack.c.bf16 %v775, %v774
          %v782 = vpack.c.bf16 %v777, %v776
          %v783 = vpack.c.bf16 %v779, %v778
          %v784 = vld [vmem:[#allocation7 + $0x80] sm:$0xf]
          %v785 = vld [vmem:[#allocation7 + $0x84] sm:$0xf]
          %v786 = vld [vmem:[#allocation7 + $0x88] sm:$0xf]
          %v787 = vld [vmem:[#allocation7 + $0x8c] sm:$0xf]
          %v788 = vld [vmem:[#allocation7 + $0x90] sm:$0xf]
          %v789 = vld [vmem:[#allocation7 + $0x94] sm:$0xf]
          %v790 = vld [vmem:[#allocation7 + $0x98] sm:$0xf]
          %v791 = vld [vmem:[#allocation7 + $0x9c] sm:$0xf]
          %v792 = vld [vmem:[#allocation7 + $0xa0] sm:$0xf]
          %v793 = vld [vmem:[#allocation7 + $0xa4] sm:$0xf]
          %v794 = vld [vmem:[#allocation7 + $0xa8] sm:$0xf]
          %v795 = vld [vmem:[#allocation7 + $0xac] sm:$0xf]
          %v796 = vld [vmem:[#allocation7 + $0xb0] sm:$0xf]
          %v797 = vld [vmem:[#allocation7 + $0xb4] sm:$0xf]
          %v798 = vld [vmem:[#allocation7 + $0xb8] sm:$0xf]
          %v799 = vld [vmem:[#allocation7 + $0xbc] sm:$0xf]
          %v800 = vperm.slane %v592, 2
          %v817 = vunpack.c.l.b16 %v784
          %v818 = vunpack.c.l.b16 %v785
          %v819 = vunpack.c.l.b16 %v786
          %v820 = vunpack.c.l.b16 %v787
          %v821 = vunpack.c.l.b16 %v788
          %v822 = vunpack.c.l.b16 %v789
          %v823 = vunpack.c.l.b16 %v790
          %v824 = vunpack.c.l.b16 %v791
          %v825 = vunpack.c.l.b16 %v792
          %v826 = vunpack.c.l.b16 %v793
          %v827 = vunpack.c.l.b16 %v794
          %v828 = vunpack.c.l.b16 %v795
          %v829 = vunpack.c.l.b16 %v796
          %v830 = vunpack.c.l.b16 %v797
          %v831 = vunpack.c.l.b16 %v798
          %v832 = vunpack.c.l.b16 %v799
          %v833 = vpack.c.b16 %v818, %v817
          %v834 = vpack.c.b16 %v820, %v819
          %v835 = vpack.c.b16 %v822, %v821
          %v836 = vpack.c.b16 %v824, %v823
          %v837 = vpack.c.b16 %v826, %v825
          %v838 = vpack.c.b16 %v828, %v827
          %v839 = vpack.c.b16 %v830, %v829
          %v840 = vpack.c.b16 %v832, %v831
          %849 = vmatpush.bf16.msra.mxu0 %v840
          %850 = vmatpush.bf16.msra.mxu0 %v839
          %851 = vmatpush.bf16.msra.mxu0 %v838
          %852 = vmatpush.bf16.msra.mxu0 %v837
          %853 = vmatpush.bf16.msra.mxu0 %v836
          %854 = vmatpush.bf16.msra.mxu0 %v835
          %855 = vmatpush.bf16.msra.mxu0 %v834
          %856 = vmatpush.bf16.msra.mxu0 %v833
          %857 = vmatmul.bf16.gmra.mxu0 %v780
          %v858 = vpop.f32.mrf.mxu0
          %v859 = vadd.f32 %v800, %v858
          %v860 = vpop.f32.mrf.mxu0
          %v861 = vadd.f32 %v800, %v860
          %862 = vmatmul.bf16.gmra.mxu0 %v781
          %v863 = vpop.f32.mrf.mxu0
          %v864 = vadd.f32 %v800, %v863
          %v865 = vpop.f32.mrf.mxu0
          %v866 = vadd.f32 %v800, %v865
          %867 = vmatmul.bf16.gmra.mxu0 %v782
          %v868 = vpop.f32.mrf.mxu0
          %v869 = vadd.f32 %v800, %v868
          %v870 = vpop.f32.mrf.mxu0
          %v871 = vadd.f32 %v800, %v870
          %872 = vmatmul.bf16.gmra.mxu0 %v783
          %v873 = vpop.f32.mrf.mxu0
          %v874 = vadd.f32 %v800, %v873
          %v875 = vpop.f32.mrf.mxu0
          %v876 = vadd.f32 %v800, %v875
          %877 = vdwg.mxu0
          %v878 = vmax.f32 %v859, 0.0
          %v879 = vmax.f32 %v861, 0.0
          %v880 = vmax.f32 %v864, 0.0
          %v881 = vmax.f32 %v866, 0.0
          %v882 = vmax.f32 %v869, 0.0
          %v883 = vmax.f32 %v871, 0.0
          %v884 = vmax.f32 %v874, 0.0
          %v885 = vmax.f32 %v876, 0.0
          %v886 = vpack.c.bf16 %v879, %v878
          %v887 = vpack.c.bf16 %v881, %v880
          %v888 = vpack.c.bf16 %v883, %v882
          %v889 = vpack.c.bf16 %v885, %v884
          %v890 = vld [vmem:[#allocation7 + $0xc0] sm:$0xf]
          %v891 = vld [vmem:[#allocation7 + $0xc4] sm:$0xf]
          %v892 = vld [vmem:[#allocation7 + $0xc8] sm:$0xf]
          %v893 = vld [vmem:[#allocation7 + $0xcc] sm:$0xf]
          %v894 = vld [vmem:[#allocation7 + $0xd0] sm:$0xf]
          %v895 = vld [vmem:[#allocation7 + $0xd4] sm:$0xf]
          %v896 = vld [vmem:[#allocation7 + $0xd8] sm:$0xf]
          %v897 = vld [vmem:[#allocation7 + $0xdc] sm:$0xf]
          %v898 = vld [vmem:[#allocation7 + $0xe0] sm:$0xf]
          %v899 = vld [vmem:[#allocation7 + $0xe4] sm:$0xf]
          %v900 = vld [vmem:[#allocation7 + $0xe8] sm:$0xf]
          %v901 = vld [vmem:[#allocation7 + $0xec] sm:$0xf]
          %v902 = vld [vmem:[#allocation7 + $0xf0] sm:$0xf]
          %v903 = vld [vmem:[#allocation7 + $0xf4] sm:$0xf]
          %v904 = vld [vmem:[#allocation7 + $0xf8] sm:$0xf]
          %v905 = vld [vmem:[#allocation7 + $0xfc] sm:$0xf]
          %v906 = vperm.slane %v592, 3
          %v923 = vunpack.c.l.b16 %v890
          %v924 = vunpack.c.l.b16 %v891
          %v925 = vunpack.c.l.b16 %v892
          %v926 = vunpack.c.l.b16 %v893
          %v927 = vunpack.c.l.b16 %v894
          %v928 = vunpack.c.l.b16 %v895
          %v929 = vunpack.c.l.b16 %v896
          %v930 = vunpack.c.l.b16 %v897
          %v931 = vunpack.c.l.b16 %v898
          %v932 = vunpack.c.l.b16 %v899
          %v933 = vunpack.c.l.b16 %v900
          %v934 = vunpack.c.l.b16 %v901
          %v935 = vunpack.c.l.b16 %v902
          %v936 = vunpack.c.l.b16 %v903
          %v937 = vunpack.c.l.b16 %v904
          %v938 = vunpack.c.l.b16 %v905
          %v939 = vpack.c.b16 %v924, %v923
          %v940 = vpack.c.b16 %v926, %v925
          %v941 = vpack.c.b16 %v928, %v927
          %v942 = vpack.c.b16 %v930, %v929
          %v943 = vpack.c.b16 %v932, %v931
          %v944 = vpack.c.b16 %v934, %v933
          %v945 = vpack.c.b16 %v936, %v935
          %v946 = vpack.c.b16 %v938, %v937
          %955 = vmatpush.bf16.msra.mxu0 %v946
          %956 = vmatpush.bf16.msra.mxu0 %v945
          %957 = vmatpush.bf16.msra.mxu0 %v944
          %958 = vmatpush.bf16.msra.mxu0 %v943
          %959 = vmatpush.bf16.msra.mxu0 %v942
          %960 = vmatpush.bf16.msra.mxu0 %v941
          %961 = vmatpush.bf16.msra.mxu0 %v940
          %962 = vmatpush.bf16.msra.mxu0 %v939
          %963 = vmatmul.bf16.gmra.mxu0 %v886
          %v964 = vpop.f32.mrf.mxu0
          %v965 = vadd.f32 %v906, %v964
          %v966 = vpop.f32.mrf.mxu0
          %v967 = vadd.f32 %v906, %v966
          %968 = vmatmul.bf16.gmra.mxu0 %v887
          %v969 = vpop.f32.mrf.mxu0
          %v970 = vadd.f32 %v906, %v969
          %v971 = vpop.f32.mrf.mxu0
          %v972 = vadd.f32 %v906, %v971
          %973 = vmatmul.bf16.gmra.mxu0 %v888
          %v974 = vpop.f32.mrf.mxu0
          %v975 = vadd.f32 %v906, %v974
          %v976 = vpop.f32.mrf.mxu0
          %v977 = vadd.f32 %v906, %v976
          %978 = vmatmul.bf16.gmra.mxu0 %v889
          %v979 = vpop.f32.mrf.mxu0
          %v980 = vadd.f32 %v906, %v979
          %v981 = vpop.f32.mrf.mxu0
          %v982 = vadd.f32 %v906, %v981
          %983 = vdwg.mxu0
          %984 = vst [vmem:[%s419] sm:$0xff] %v965
          %985 = vst [vmem:[%s419 + $0x8] sm:$0xff] %v967
          %986 = vst [vmem:[%s419 + $0x10] sm:$0xff] %v970
          %987 = vst [vmem:[%s419 + $0x18] sm:$0xff] %v972
          %988 = vst [vmem:[%s419 + $0x20] sm:$0xff] %v975
          %989 = vst [vmem:[%s419 + $0x28] sm:$0xff] %v977
          %990 = vst [vmem:[%s419 + $0x30] sm:$0xff] %v980
          %991 = vst [vmem:[%s419 + $0x38] sm:$0xff] %v982
          %v992 = vmul.f32 %v965, %v965
          %v993 = vmul.f32 %v967, %v967
          %v994 = vmul.f32 %v970, %v970
          %v995 = vmul.f32 %v972, %v972
          %v996 = vmul.f32 %v975, %v975
          %v997 = vmul.f32 %v977, %v977
          %v998 = vmul.f32 %v980, %v980
          %v999 = vmul.f32 %v982, %v982
          %1000 = vadd.xlane.f32.xlu0 %v992
          %v1001 = vpop.xlane.xlu0 %1000
          %1002 = vadd.xlane.f32.xlu0 %v993
          %v1003 = vpop.xlane.xlu0 %1002
          %1004 = vadd.xlane.f32.xlu0 %v994
          %v1005 = vpop.xlane.xlu0 %1004
          %1006 = vadd.xlane.f32.xlu0 %v995
          %v1007 = vpop.xlane.xlu0 %1006
          %1008 = vadd.xlane.f32.xlu0 %v996
          %v1009 = vpop.xlane.xlu0 %1008
          %1010 = vadd.xlane.f32.xlu0 %v997
          %v1011 = vpop.xlane.xlu0 %1010
          %1012 = vadd.xlane.f32.xlu0 %v998
          %v1013 = vpop.xlane.xlu0 %1012
          %1014 = vadd.xlane.f32.xlu0 %v999
          %v1015 = vpop.xlane.xlu0 %1014
          %v1016 = vmax.f32 %v1001, 1e-24
          %v1017 = vmax.f32 %v1003, 1e-24
          %v1018 = vmax.f32 %v1005, 1e-24
          %v1019 = vmax.f32 %v1007, 1e-24
          %v1020 = vmax.f32 %v1009, 1e-24
          %v1021 = vmax.f32 %v1011, 1e-24
          %v1022 = vmax.f32 %v1013, 1e-24
          %v1023 = vmax.f32 %v1015, 1e-24
          %v1024 = vrsqrt.pop %v1016
          %v1025 = vmul.f32 %v1024, %v1016
          %v1026 = vmul.f32 %v1025, %v1024
          %v1027 = vmul.f32 0.5, %v1026
          %v1028 = vsub.f32 1.5, %v1027
          %v1029 = vmul.f32 %v1024, %v1028
          %vm1030 = vweird.f32 %v1016
          %vm1031 = vweird.f32 %v1024
          %vm1032 = vmor %vm1030, %vm1031
          %v1033 = vsel %vm1032, %v1024, %v1029
          %v1034 = vrsqrt.pop %v1017
          %v1035 = vmul.f32 %v1034, %v1017
          %v1036 = vmul.f32 %v1035, %v1034
          %v1037 = vmul.f32 0.5, %v1036
          %v1038 = vsub.f32 1.5, %v1037
          %v1039 = vmul.f32 %v1034, %v1038
          %vm1040 = vweird.f32 %v1017
          %vm1041 = vweird.f32 %v1034
          %vm1042 = vmor %vm1040, %vm1041
          %v1043 = vsel %vm1042, %v1034, %v1039
          %v1044 = vrsqrt.pop %v1018
          %v1045 = vmul.f32 %v1044, %v1018
          %v1046 = vmul.f32 %v1045, %v1044
          %v1047 = vmul.f32 0.5, %v1046
          %v1048 = vsub.f32 1.5, %v1047
          %v1049 = vmul.f32 %v1044, %v1048
          %vm1050 = vweird.f32 %v1018
          %vm1051 = vweird.f32 %v1044
          %vm1052 = vmor %vm1050, %vm1051
          %v1053 = vsel %vm1052, %v1044, %v1049
          %v1054 = vrsqrt.pop %v1019
          %v1055 = vmul.f32 %v1054, %v1019
          %v1056 = vmul.f32 %v1055, %v1054
          %v1057 = vmul.f32 0.5, %v1056
          %v1058 = vsub.f32 1.5, %v1057
          %v1059 = vmul.f32 %v1054, %v1058
          %vm1060 = vweird.f32 %v1019
          %vm1061 = vweird.f32 %v1054
          %vm1062 = vmor %vm1060, %vm1061
          %v1063 = vsel %vm1062, %v1054, %v1059
          %v1064 = vrsqrt.pop %v1020
          %v1065 = vmul.f32 %v1064, %v1020
          %v1066 = vmul.f32 %v1065, %v1064
          %v1067 = vmul.f32 0.5, %v1066
          %v1068 = vsub.f32 1.5, %v1067
          %v1069 = vmul.f32 %v1064, %v1068
          %vm1070 = vweird.f32 %v1020
          %vm1071 = vweird.f32 %v1064
          %vm1072 = vmor %vm1070, %vm1071
          %v1073 = vsel %vm1072, %v1064, %v1069
          %v1074 = vrsqrt.pop %v1021
          %v1075 = vmul.f32 %v1074, %v1021
          %v1076 = vmul.f32 %v1075, %v1074
          %v1077 = vmul.f32 0.5, %v1076
          %v1078 = vsub.f32 1.5, %v1077
          %v1079 = vmul.f32 %v1074, %v1078
          %vm1080 = vweird.f32 %v1021
          %vm1081 = vweird.f32 %v1074
          %vm1082 = vmor %vm1080, %vm1081
          %v1083 = vsel %vm1082, %v1074, %v1079
          %v1084 = vrsqrt.pop %v1022
          %v1085 = vmul.f32 %v1084, %v1022
          %v1086 = vmul.f32 %v1085, %v1084
          %v1087 = vmul.f32 0.5, %v1086
          %v1088 = vsub.f32 1.5, %v1087
          %v1089 = vmul.f32 %v1084, %v1088
          %vm1090 = vweird.f32 %v1022
          %vm1091 = vweird.f32 %v1084
          %vm1092 = vmor %vm1090, %vm1091
          %v1093 = vsel %vm1092, %v1084, %v1089
          %v1094 = vrsqrt.pop %v1023
          %v1095 = vmul.f32 %v1094, %v1023
          %v1096 = vmul.f32 %v1095, %v1094
          %v1097 = vmul.f32 0.5, %v1096
          %v1098 = vsub.f32 1.5, %v1097
          %v1099 = vmul.f32 %v1094, %v1098
          %vm1100 = vweird.f32 %v1023
          %vm1101 = vweird.f32 %v1094
          %vm1102 = vmor %vm1100, %vm1101
          %v1103 = vsel %vm1102, %v1094, %v1099
          %v1104 = vmul.f32 %v965, %v1033
          %v1105 = vmul.f32 %v967, %v1043
          %v1106 = vmul.f32 %v970, %v1053
          %v1107 = vmul.f32 %v972, %v1063
          %v1108 = vmul.f32 %v975, %v1073
          %v1109 = vmul.f32 %v977, %v1083
          %v1110 = vmul.f32 %v980, %v1093
          %v1111 = vmul.f32 %v982, %v1103
          %1112 = vst [vmem:[%s425] sm:$0xff] %v1104
          %1113 = vst [vmem:[%s425 + $0x8] sm:$0xff] %v1105
          %1114 = vst [vmem:[%s425 + $0x10] sm:$0xff] %v1106
          %1115 = vst [vmem:[%s425 + $0x18] sm:$0xff] %v1107
          %1116 = vst [vmem:[%s425 + $0x20] sm:$0xff] %v1108
          %1117 = vst [vmem:[%s425 + $0x28] sm:$0xff] %v1109
          %1118 = vst [vmem:[%s425 + $0x30] sm:$0xff] %v1110
          %1119 = vst [vmem:[%s425 + $0x38] sm:$0xff] %v1111
        $region60: #{_device_forward.5} parent=39 // pred_fallthru
          _
        %s1120 = smul.u32 8, %s29
        %p1121 = scmp.lt.s32.totalorder %s1120, 31
        %s1122 = scalar_select %p1121, %s1120, 31
        %s1123 = smul.addr %s1122, 4
        %s1124 = scalar_lea.vmem %s5, %s1123
        %s1125 = smul.u32 8, %s29
        %p1126 = scmp.lt.s32.totalorder %s1125, 31
        %s1127 = scalar_select %p1126, %s1125, 31
        %s1128 = smul.addr %s1127, 8
        %s1129 = scalar_lea.vmem %s6, %s1128
        %s1130 = smul.u32 8, %s29
        %p1131 = scmp.lt.s32.totalorder %s1130, 31
        %s1132 = scalar_select %p1131, %s1130, 31
        %s1133 = smul.addr %s1132, 8
        %s1134 = scalar_lea.vmem %s7, %s1133
        // Predicated region
        $region61: #{_device_forward.5} parent=39 // pred_check
          %p1135 = pneg %p177
        $region62: #{_device_forward.5} parent=39 // pred_check_branch
          %1137 = sbr.rel (%p1135) target = $region64
        $region63: #{_device_forward.5} parent=39 // pred_region
          %s1138 = smul.u32 8, %s29
        $region64: #{_device_forward.5} parent=39 // pred_fallthru
          _
        // Predicated region
        $region65: #{_device_forward.5} parent=39 // pred_check
          %p1139 = pneg %p203
        $region66: #{_device_forward.5} parent=39 // pred_check_branch
          %1141 = sbr.rel (%p1139) target = $region68
        $region67: #{_device_forward.5} parent=39 // pred_region
          %s1142 = smul.u32 8, %s29
        $region68: #{_device_forward.5} parent=39 // pred_fallthru
          _
        // Predicated region
        $region69: #{_device_forward.5} parent=39 // pred_check
          %p1143 = pneg %p229
        $region70: #{_device_forward.5} parent=39 // pred_check_branch
          %1145 = sbr.rel (%p1143) target = $region72
        $region71: #{_device_forward.5} parent=39 // pred_region
          %s1146 = smul.u32 8, %s29
        $region72: #{_device_forward.5} parent=39 // pred_fallthru
          _
      $region40: #{_device_forward.5} parent=5 // pred_fallthru
        _
      %p1147 = scmp.le.s32.totalorder 2, %s20
      // Predicated region
      $region73: #{_device_forward.5} parent=5 // pred_check
        %p1148 = pneg %p1147
      $region74: #{_device_forward.5} parent=5 // pred_check_branch
        %1150 = sbr.rel (%p1148) target = $region76
      $region75: #{_device_forward.5} parent=5 // pred_region
        %s1151 = ssub.s32 %s20, 2
        // Predicated region
        $region77: #{_device_forward.5} parent=75 // pred_check
          %p1152 = pneg %p183
        $region78: #{_device_forward.5} parent=75 // pred_check_branch
          %1154 = sbr.rel (%p1152) target = $region80
        $region79: #{_device_forward.5} parent=75 // pred_region
          %s1155 = smul.u32 8, %s31
          %p1156 = scmp.lt.s32.totalorder %s1155, 31
          %s1157 = scalar_select %p1156, %s1155, 31
          %s1158 = smul.addr %s1157, 4
          %s1159 = scalar_lea.vmem %s5, %s1158
        $region80: #{_device_forward.5} parent=75 // pred_fallthru
          _
        // Predicated region
        $region81: #{_device_forward.5} parent=75 // pred_check
          %p1160 = pneg %p209
        $region82: #{_device_forward.5} parent=75 // pred_check_branch
          %1162 = sbr.rel (%p1160) target = $region84
        $region83: #{_device_forward.5} parent=75 // pred_region
          %s1163 = smul.u32 8, %s31
          %p1164 = scmp.lt.s32.totalorder %s1163, 31
          %s1165 = scalar_select %p1164, %s1163, 31
          %s1166 = smul.addr %s1165, 8
          %s1167 = scalar_lea.vmem %s6, %s1166
        $region84: #{_device_forward.5} parent=75 // pred_fallthru
          _
        // Predicated region
        $region85: #{_device_forward.5} parent=75 // pred_check
          %p1168 = pneg %p235
        $region86: #{_device_forward.5} parent=75 // pred_check_branch
          %1170 = sbr.rel (%p1168) target = $region88
        $region87: #{_device_forward.5} parent=75 // pred_region
          %s1171 = smul.u32 8, %s31
          %p1172 = scmp.lt.s32.totalorder %s1171, 31
          %s1173 = scalar_select %p1172, %s1171, 31
          %s1174 = smul.addr %s1173, 8
          %s1175 = scalar_lea.vmem %s7, %s1174
        $region88: #{_device_forward.5} parent=75 // pred_fallthru
          _
      $region76: #{_device_forward.5} parent=5 // pred_fallthru
        _
    $region6: #{_device_forward.5} parent=1 // loop_footer
      %s24 = sadd.s32 1, %s20
    $region7: #{_device_forward.5} parent=1 // loop_footer_branch
      %19 = sbr.rel target = $region3
    $region8: #{_device_forward.5} parent=1 // loop_exit
      _
    %1176 = vsyncpa [#allocation4], 1
    %s1177 = scalar_lea.sflag [#allocation4], 1
    %1178 = vsyncpa %s1177, 1
    %1179 = vsyncpa [#allocation6], 1
    %s1180 = scalar_lea.sflag [#allocation6], 1
    %1181 = vsyncpa %s1180, 1

// kernel: _device_forward.7
$region0: #{_device_forward.7}
  #allocation0 [shape = 'u32[]', space=smem, size = 0x4, offset = 0x4, fixed_abs, tag = 'smem constant byte address 0x4 - core index']
  #allocation1 [shape = 'u32[72,128]{1,0:T(1,128)}', space=vmem, size = 0x9000, scoped, tag = 'internal scratch']
  #allocation2 [shape = 'f32[64,1]{1,0:T(8,128)}', space=vmem, size = 0x8000, scoped, tag = 'scratch operand']
  %s0 = inlined_call_operand.vmem [shape: f32[256,128], index: 0, kind: input, shape index: {}]
  %s1 = inlined_call_operand.vmem [shape: f32[256,128], index: 1, kind: input, shape index: {}, may-alias: {1,2}]
  %s2 = inlined_call_operand.vmem [shape: f32[256,128], index: 2, kind: input, shape index: {}, may-alias: {1,2}]
  %s3 = inlined_call_operand.vmem [shape: f32[256,1], index: 3, kind: output, shape index: {}]
  %s4 = sld [smem:[#allocation0]]
  $region53: #{_device_forward.7} parent=0
    _
  %s6 = ssub.s32 1, %s4
  %s7 = scalar_select 0, %s6, %s4
  loop: start=0, step=1, limit=10
  $region2: #{_device_forward.7} parent=0 // loop_pre_header
    _
  $region3: #{_device_forward.7} parent=0 // loop_header
    %s9 = sphi 0, %s13
    %p10 = scmp.ge.s32.totalorder %s9, 10
    %s16 = sphi 0, %s28
    %s17 = sphi 0, %s24
    %s18 = sphi 0, %s16
    %s19 = sphi 0, %s17
    %s20 = sphi 0, %s18
    %s21 = sphi 0, %s19
    %s31 = sphi 0, %s33
    %s34 = sphi 0, %s31
    %s35 = sphi 0, %s34
    %s51 = sphi 0, %s35
    %s57 = sphi 0, %s59
    %s60 = sphi 0, %s57
    %s61 = sphi 0, %s60
    %s77 = sphi 0, %s61
    %s83 = sphi 0, %s85
    %s86 = sphi 0, %s83
    %s87 = sphi 0, %s86
    %s103 = sphi 0, %s87
    %s109 = sphi 0, %s111
    %s112 = sphi 0, %s109
    %s113 = sphi 0, %s112
    %s129 = sphi 0, %s113
  $region4: #{_device_forward.7} parent=0 // loop_header_branch
    %12 = sbr.rel (%p10) target = $region8
  $region5: #{_device_forward.7} parent=0 // loop_body
    %s14 = ssub.s32 %s9, 1
    %s15 = ssub.s32 %s9, 2
    %s22 = sadd.s32 1, %s17
    %p23 = scmp.ge.s32.totalorder %s22, 2
    %s24 = scalar_select %p23, 0, %s22
    %s25 = sadd.s32 1, %s16
    %s26 = scalar_select %p23, %s25, %s16
    %p27 = scmp.ge.s32.totalorder %s26, 4
    %s28 = scalar_select %p27, 0, %s26
    %s29 = ssub.s32 %s16, %s28
    %p30 = scmp.eq.s32.totalorder %s29, 0
    %s32 = sadd.s32 %s31, 1
    %s33 = scalar_select %p30, %s31, %s32
    %p36 = pneg %p30
    %p37 = scmp.eq.s32.totalorder %s9, 7
    %p38 = por %p36, %p37
    %p39 = scmp.ne.s32.totalorder %s31, %s34
    %p40 = scmp.eq.s32.totalorder %s9, 0
    %p41 = por %p39, %p40
    %p42 = scmp.ne.s32.totalorder %s31, %s34
    %p43 = scmp.eq.s32.totalorder %s14, 7
    %p44 = por %p42, %p43
    %p45 = scmp.ne.s32.totalorder %s34, %s35
    %p46 = scmp.eq.s32.totalorder %s14, 0
    %p47 = por %p45, %p46
    %p48 = scmp.ne.s32.totalorder %s34, %s35
    %p49 = scmp.eq.s32.totalorder %s15, 7
    %p50 = por %p48, %p49
    %p52 = scmp.ne.s32.totalorder %s35, %s51
    %p53 = scmp.eq.s32.totalorder %s15, 0
    %p54 = por %p52, %p53
    %s55 = ssub.s32 %s17, %s24
    %p56 = scmp.eq.s32.totalorder %s55, 0
    %s58 = sadd.s32 %s57, 1
    %s59 = scalar_select %p56, %s57, %s58
    %p62 = pneg %p56
    %p63 = scmp.eq.s32.totalorder %s9, 7
    %p64 = por %p62, %p63
    %p65 = scmp.ne.s32.totalorder %s57, %s60
    %p66 = scmp.eq.s32.totalorder %s9, 0
    %p67 = por %p65, %p66
    %p68 = scmp.ne.s32.totalorder %s57, %s60
    %p69 = scmp.eq.s32.totalorder %s14, 7
    %p70 = por %p68, %p69
    %p71 = scmp.ne.s32.totalorder %s60, %s61
    %p72 = scmp.eq.s32.totalorder %s14, 0
    %p73 = por %p71, %p72
    %p74 = scmp.ne.s32.totalorder %s60, %s61
    %p75 = scmp.eq.s32.totalorder %s15, 7
    %p76 = por %p74, %p75
    %p78 = scmp.ne.s32.totalorder %s61, %s77
    %p79 = scmp.eq.s32.totalorder %s15, 0
    %p80 = por %p78, %p79
    %s81 = ssub.s32 %s16, %s28
    %p82 = scmp.eq.s32.totalorder %s81, 0
    %s84 = sadd.s32 %s83, 1
    %s85 = scalar_select %p82, %s83, %s84
    %p88 = pneg %p82
    %p89 = scmp.eq.s32.totalorder %s9, 7
    %p90 = por %p88, %p89
    %p91 = scmp.ne.s32.totalorder %s83, %s86
    %p92 = scmp.eq.s32.totalorder %s9, 0
    %p93 = por %p91, %p92
    %p94 = scmp.ne.s32.totalorder %s83, %s86
    %p95 = scmp.eq.s32.totalorder %s14, 7
    %p96 = por %p94, %p95
    %p97 = scmp.ne.s32.totalorder %s86, %s87
    %p98 = scmp.eq.s32.totalorder %s14, 0
    %p99 = por %p97, %p98
    %p100 = scmp.ne.s32.totalorder %s86, %s87
    %p101 = scmp.eq.s32.totalorder %s15, 7
    %p102 = por %p100, %p101
    %p104 = scmp.ne.s32.totalorder %s87, %s103
    %p105 = scmp.eq.s32.totalorder %s15, 0
    %p106 = por %p104, %p105
    %s107 = ssub.s32 %s16, %s28
    %p108 = scmp.eq.s32.totalorder %s107, 0
    %s110 = sadd.s32 %s109, 1
    %s111 = scalar_select %p108, %s109, %s110
    %p114 = pneg %p108
    %p115 = scmp.eq.s32.totalorder %s9, 7
    %p116 = por %p114, %p115
    %p117 = scmp.ne.s32.totalorder %s109, %s112
    %p118 = scmp.eq.s32.totalorder %s9, 0
    %p119 = por %p117, %p118
    %p120 = scmp.ne.s32.totalorder %s109, %s112
    %p121 = scmp.eq.s32.totalorder %s14, 7
    %p122 = por %p120, %p121
    %p123 = scmp.ne.s32.totalorder %s112, %s113
    %p124 = scmp.eq.s32.totalorder %s14, 0
    %p125 = por %p123, %p124
    %p126 = scmp.ne.s32.totalorder %s112, %s113
    %p127 = scmp.eq.s32.totalorder %s15, 7
    %p128 = por %p126, %p127
    %p130 = scmp.ne.s32.totalorder %s113, %s129
    %p131 = scmp.eq.s32.totalorder %s15, 0
    %p132 = por %p130, %p131
    %p133 = scmp.le.s32.totalorder 1, %s9
    %p134 = scmp.lt.s32.totalorder %s9, 9
    %p135 = pnand %p133, %p134
    %p136 = pneg %p135
    // Predicated region
    $region9: #{_device_forward.7} parent=5 // pred_check
      _
    $region10: #{_device_forward.7} parent=5 // pred_check_branch
      %138 = sbr.rel (%p135) target = $region12
    $region11: #{_device_forward.7} parent=5 // pred_region
      %s139 = ssub.s32 %s9, 1
    $region12: #{_device_forward.7} parent=5 // pred_fallthru
      _
    %p140 = scmp.lt.s32.totalorder %s9, 8
    // Predicated region
    $region13: #{_device_forward.7} parent=5 // pred_check
      %p141 = pneg %p140
    $region14: #{_device_forward.7} parent=5 // pred_check_branch
      %143 = sbr.rel (%p141) target = $region16
    $region15: #{_device_forward.7} parent=5 // pred_region
      // Predicated region
      $region17: #{_device_forward.7} parent=15 // pred_check
        %p144 = pneg %p41
      $region18: #{_device_forward.7} parent=15 // pred_check_branch
        %146 = sbr.rel (%p144) target = $region20
      $region19: #{_device_forward.7} parent=15 // pred_region
        %s147 = smul.u32 8, %s16
        %p148 = scmp.lt.s32.totalorder %s147, 31
        %s149 = scalar_select %p148, %s147, 31
        %s150 = smul.addr %s149, 8
        %s151 = scalar_lea.vmem %s0, %s150
        %s152 = smul.u32 8, %s16
      $region20: #{_device_forward.7} parent=15 // pred_fallthru
        _
      // Predicated region
      $region21: #{_device_forward.7} parent=15 // pred_check
        %p153 = pneg %p67
      $region22: #{_device_forward.7} parent=15 // pred_check_branch
        %155 = sbr.rel (%p153) target = $region24
      $region23: #{_device_forward.7} parent=15 // pred_region
        %s156 = smul.u32 16, %s17
        %p157 = scmp.lt.s32.totalorder %s156, 31
        %s158 = scalar_select %p157, %s156, 31
        %s159 = smul.addr %s158, 8
        %s160 = scalar_lea.vmem %s1, %s159
        %s161 = smul.u32 16, %s17
      $region24: #{_device_forward.7} parent=15 // pred_fallthru
        _
      // Predicated region
      $region25: #{_device_forward.7} parent=15 // pred_check
        %p162 = pneg %p93
      $region26: #{_device_forward.7} parent=15 // pred_check_branch
        %164 = sbr.rel (%p162) target = $region28
      $region27: #{_device_forward.7} parent=15 // pred_region
        %s165 = smul.u32 8, %s16
        %p166 = scmp.lt.s32.totalorder %s165, 31
        %s167 = scalar_select %p166, %s165, 31
        %s168 = smul.addr %s167, 8
        %s169 = scalar_lea.vmem %s2, %s168
        %s170 = smul.u32 8, %s16
      $region28: #{_device_forward.7} parent=15 // pred_fallthru
        _
    $region16: #{_device_forward.7} parent=5 // pred_fallthru
      _
    %p171 = scmp.le.s32.totalorder 1, %s9
    %p172 = scmp.lt.s32.totalorder %s9, 9
    %p173 = pnand %p171, %p172
    %p174 = pneg %p173
    // Predicated region
    $region29: #{_device_forward.7} parent=5 // pred_check
      _
    $region30: #{_device_forward.7} parent=5 // pred_check_branch
      %176 = sbr.rel (%p173) target = $region32
    $region31: #{_device_forward.7} parent=5 // pred_region
      %s177 = ssub.s32 %s9, 1
      %s178 = smul.u32 8, %s18
      %p179 = scmp.lt.s32.totalorder %s178, 31
      %s180 = scalar_select %p179, %s178, 31
      %s181 = smul.addr %s180, 8
      %s182 = scalar_lea.vmem %s0, %s181
      %p183 = pneg %p47
      %p184 = pneg %p44
      %s185 = smul.u32 16, %s19
      %p186 = scmp.lt.s32.totalorder %s185, 31
      %s187 = scalar_select %p186, %s185, 31
      %s188 = smul.addr %s187, 8
      %s189 = scalar_lea.vmem %s1, %s188
      %p190 = pneg %p73
      %p191 = pneg %p70
      %s192 = smul.u32 8, %s18
      %p193 = scmp.lt.s32.totalorder %s192, 31
      %s194 = scalar_select %p193, %s192, 31
      %s195 = smul.addr %s194, 8
      %s196 = scalar_lea.vmem %s2, %s195
      %p197 = pneg %p99
      %p198 = pneg %p96
      %p199 = pneg %p125
      %p200 = pneg %p122
      %s201 = smul.u32 8, %s18
      %p202 = scmp.lt.s32.totalorder %s201, 31
      %s203 = scalar_select %p202, %s201, 31
      %s204 = smul.addr %s203, 8
      %s205 = scalar_lea.vmem %s3, %s204
      %s206 = smul.u32 8, %s18
      %p207 = scmp.lt.s32.totalorder %s206, 31
      %s208 = scalar_select %p207, %s206, 31
      %s209 = smul.addr %s208, 8
      %s210 = scalar_lea.vmem %s0, %s209
      %s211 = smul.u32 8, %s18
      %s212 = smul.u32 16, %s19
      %p213 = scmp.lt.s32.totalorder %s212, 31
      %s214 = scalar_select %p213, %s212, 31
      %s215 = smul.addr %s214, 8
      %s216 = scalar_lea.vmem %s1, %s215
      %s217 = smul.u32 16, %s19
      %s218 = smul.u32 8, %s18
      %p219 = scmp.lt.s32.totalorder %s218, 31
      %s220 = scalar_select %p219, %s218, 31
      %s221 = smul.addr %s220, 8
      %s222 = scalar_lea.vmem %s2, %s221
      %s223 = smul.u32 8, %s18
      %s224 = smul.u32 8, %s18
      %p225 = scmp.lt.s32.totalorder %s224, 31
      %s226 = scalar_select %p225, %s224, 31
      %s227 = smul.addr %s226, 8
      %s228 = scalar_lea.vmem %s3, %s227
      %s229 = smul.u32 8, %s18
      %p230 = scmp.eq.s32.totalorder %s19, 0
      // Predicated region
      $region33: #{_device_forward.7} parent=31 // pred_check
        %p231 = pneg %p230
      $region34: #{_device_forward.7} parent=31 // pred_check_branch
        %233 = sbr.rel (%p231) target = $region36
      $region35: #{_device_forward.7} parent=31 // pred_region
        %vm234 = vcmask 7168
        %235 = vst.msk [vmem:[#allocation2] sm:$0xff] %vm234, 0.0
        %236 = vst.msk [vmem:[#allocation2 + $0x8] sm:$0xff] %vm234, 0.0
        %237 = vst.msk [vmem:[#allocation2 + $0x10] sm:$0xff] %vm234, 0.0
        %238 = vst.msk [vmem:[#allocation2 + $0x18] sm:$0xff] %vm234, 0.0
        %239 = vst.msk [vmem:[#allocation2 + $0x20] sm:$0xff] %vm234, 0.0
        %240 = vst.msk [vmem:[#allocation2 + $0x28] sm:$0xff] %vm234, 0.0
        %241 = vst.msk [vmem:[#allocation2 + $0x30] sm:$0xff] %vm234, 0.0
        %242 = vst.msk [vmem:[#allocation2 + $0x38] sm:$0xff] %vm234, 0.0
      $region36: #{_device_forward.7} parent=31 // pred_fallthru
        _
      %v243 = vld [vmem:[%s210] sm:$0xff]
      %v244 = vld [vmem:[%s210 + $0x8] sm:$0xff]
      %v245 = vld [vmem:[%s210 + $0x10] sm:$0xff]
      %v246 = vld [vmem:[%s210 + $0x18] sm:$0xff]
      %v247 = vld [vmem:[%s210 + $0x20] sm:$0xff]
      %v248 = vld [vmem:[%s210 + $0x28] sm:$0xff]
      %v249 = vld [vmem:[%s210 + $0x30] sm:$0xff]
      %v250 = vld [vmem:[%s210 + $0x38] sm:$0xff]
      %v251 = vld [vmem:[%s216] sm:$0xff]
      %v252 = vld [vmem:[%s216 + $0x8] sm:$0xff]
      %v253 = vld [vmem:[%s216 + $0x10] sm:$0xff]
      %v254 = vld [vmem:[%s216 + $0x18] sm:$0xff]
      %v255 = vld [vmem:[%s216 + $0x20] sm:$0xff]
      %v256 = vld [vmem:[%s216 + $0x28] sm:$0xff]
      %v257 = vld [vmem:[%s216 + $0x30] sm:$0xff]
      %v258 = vld [vmem:[%s216 + $0x38] sm:$0xff]
      %v259 = vld [vmem:[%s216 + $0x40] sm:$0xff]
      %v260 = vld [vmem:[%s216 + $0x48] sm:$0xff]
      %v261 = vld [vmem:[%s216 + $0x50] sm:$0xff]
      %v262 = vld [vmem:[%s216 + $0x58] sm:$0xff]
      %v263 = vld [vmem:[%s216 + $0x60] sm:$0xff]
      %v264 = vld [vmem:[%s216 + $0x68] sm:$0xff]
      %v265 = vld [vmem:[%s216 + $0x70] sm:$0xff]
      %v266 = vld [vmem:[%s216 + $0x78] sm:$0xff]
      %267 = vmatpush.xpose.msra.mxu0 %v266
      %268 = vmatpush.xpose.msra.mxu0 %v265
      %269 = vmatpush.xpose.msra.mxu0 %v264
      %270 = vmatpush.xpose.msra.mxu0 %v263
      %271 = vmatpush.xpose.msra.mxu0 %v262
      %272 = vmatpush.xpose.msra.mxu0 %v261
      %273 = vmatpush.xpose.msra.mxu0 %v260
      %274 = vmatpush.xpose.msra.mxu0 %v259
      %275 = vmatpush.xpose.msra.mxu0 %v258
      %276 = vmatpush.xpose.msra.mxu0 %v257
      %277 = vmatpush.xpose.msra.mxu0 %v256
      %278 = vmatpush.xpose.msra.mxu0 %v255
      %279 = vmatpush.xpose.msra.mxu0 %v254
      %280 = vmatpush.xpose.msra.mxu0 %v253
      %281 = vmatpush.xpose.msra.mxu0 %v252
      %282 = vmatpush.xpose.msra.mxu0 %v251
      %283 = vmatmul.f32.gmra.mxu0 %v243
      %v284 = vpop.f32.mrf.mxu0
      %v285 = vadd.f32 0.0, %v284
      %286 = vmatmul.f32.gmra.mxu0 %v244
      %v287 = vpop.f32.mrf.mxu0
      %v288 = vadd.f32 0.0, %v287
      %289 = vmatmul.f32.gmra.mxu0 %v245
      %v290 = vpop.f32.mrf.mxu0
      %v291 = vadd.f32 0.0, %v290
      %292 = vmatmul.f32.gmra.mxu0 %v246
      %v293 = vpop.f32.mrf.mxu0
      %v294 = vadd.f32 0.0, %v293
      %295 = vmatmul.f32.gmra.mxu0 %v247
      %v296 = vpop.f32.mrf.mxu0
      %v297 = vadd.f32 0.0, %v296
      %298 = vmatmul.f32.gmra.mxu0 %v248
      %v299 = vpop.f32.mrf.mxu0
      %v300 = vadd.f32 0.0, %v299
      %301 = vmatmul.f32.gmra.mxu0 %v249
      %v302 = vpop.f32.mrf.mxu0
      %v303 = vadd.f32 0.0, %v302
      %304 = vmatmul.f32.gmra.mxu0 %v250
      %v305 = vpop.f32.mrf.mxu0
      %v306 = vadd.f32 0.0, %v305
      %307 = vdwg.mxu0
      %v308 = vld [vmem:[#allocation2] sm:$0xff]
      %v309 = vld [vmem:[#allocation2 + $0x8] sm:$0xff]
      %v310 = vld [vmem:[#allocation2 + $0x10] sm:$0xff]
      %v311 = vld [vmem:[#allocation2 + $0x18] sm:$0xff]
      %v312 = vld [vmem:[#allocation2 + $0x20] sm:$0xff]
      %v313 = vld [vmem:[#allocation2 + $0x28] sm:$0xff]
      %v314 = vld [vmem:[#allocation2 + $0x30] sm:$0xff]
      %v315 = vld [vmem:[#allocation2 + $0x38] sm:$0xff]
      %v316 = vmul.f32 %v285, 1.442695
      %v317 = vpow.pop %v316
      %v318 = vmul.f32 %v288, 1.442695
      %v319 = vpow.pop %v318
      %v320 = vmul.f32 %v291, 1.442695
      %v321 = vpow.pop %v320
      %v322 = vmul.f32 %v294, 1.442695
      %v323 = vpow.pop %v322
      %v324 = vmul.f32 %v297, 1.442695
      %v325 = vpow.pop %v324
      %v326 = vmul.f32 %v300, 1.442695
      %v327 = vpow.pop %v326
      %v328 = vmul.f32 %v303, 1.442695
      %v329 = vpow.pop %v328
      %v330 = vmul.f32 %v306, 1.442695
      %v331 = vpow.pop %v330
      %332 = vadd.xlane.f32.xlu0 %v317
      %v333 = vpop.xlane.xlu0 %332
      %334 = vadd.xlane.f32.xlu0 %v319
      %v335 = vpop.xlane.xlu0 %334
      %336 = vadd.xlane.f32.xlu0 %v321
      %v337 = vpop.xlane.xlu0 %336
      %338 = vadd.xlane.f32.xlu0 %v323
      %v339 = vpop.xlane.xlu0 %338
      %340 = vadd.xlane.f32.xlu0 %v325
      %v341 = vpop.xlane.xlu0 %340
      %342 = vadd.xlane.f32.xlu0 %v327
      %v343 = vpop.xlane.xlu0 %342
      %344 = vadd.xlane.f32.xlu0 %v329
      %v345 = vpop.xlane.xlu0 %344
      %346 = vadd.xlane.f32.xlu0 %v331
      %v347 = vpop.xlane.xlu0 %346
      %v348 = vadd.f32 %v308, %v333
      %v349 = vadd.f32 %v309, %v335
      %v350 = vadd.f32 %v310, %v337
      %v351 = vadd.f32 %v311, %v339
      %v352 = vadd.f32 %v312, %v341
      %v353 = vadd.f32 %v313, %v343
      %v354 = vadd.f32 %v314, %v345
      %v355 = vadd.f32 %v315, %v347
      %vm356 = vcmask 7168
      %357 = vst.msk [vmem:[#allocation2] sm:$0xff] %vm356, %v348
      %358 = vst.msk [vmem:[#allocation2 + $0x8] sm:$0xff] %vm356, %v349
      %359 = vst.msk [vmem:[#allocation2 + $0x10] sm:$0xff] %vm356, %v350
      %360 = vst.msk [vmem:[#allocation2 + $0x18] sm:$0xff] %vm356, %v351
      %361 = vst.msk [vmem:[#allocation2 + $0x20] sm:$0xff] %vm356, %v352
      %362 = vst.msk [vmem:[#allocation2 + $0x28] sm:$0xff] %vm356, %v353
      %363 = vst.msk [vmem:[#allocation2 + $0x30] sm:$0xff] %vm356, %v354
      %364 = vst.msk [vmem:[#allocation2 + $0x38] sm:$0xff] %vm356, %v355
      %p365 = scmp.eq.s32.totalorder %s19, 1
      // Predicated region
      $region37: #{_device_forward.7} parent=31 // pred_check
        %p366 = pneg %p365
      $region38: #{_device_forward.7} parent=31 // pred_check_branch
        %368 = sbr.rel (%p366) target = $region40
      $region39: #{_device_forward.7} parent=31 // pred_region
        %v369 = vld [vmem:[%s210] sm:$0xff]
        %v370 = vld [vmem:[%s210 + $0x8] sm:$0xff]
        %v371 = vld [vmem:[%s210 + $0x10] sm:$0xff]
        %v372 = vld [vmem:[%s210 + $0x18] sm:$0xff]
        %v373 = vld [vmem:[%s210 + $0x20] sm:$0xff]
        %v374 = vld [vmem:[%s210 + $0x28] sm:$0xff]
        %v375 = vld [vmem:[%s210 + $0x30] sm:$0xff]
        %v376 = vld [vmem:[%s210 + $0x38] sm:$0xff]
        %v377 = vld [vmem:[%s222] sm:$0xff]
        %v378 = vld [vmem:[%s222 + $0x8] sm:$0xff]
        %v379 = vld [vmem:[%s222 + $0x10] sm:$0xff]
        %v380 = vld [vmem:[%s222 + $0x18] sm:$0xff]
        %v381 = vld [vmem:[%s222 + $0x20] sm:$0xff]
        %v382 = vld [vmem:[%s222 + $0x28] sm:$0xff]
        %v383 = vld [vmem:[%s222 + $0x30] sm:$0xff]
        %v384 = vld [vmem:[%s222 + $0x38] sm:$0xff]
        %v385 = vmul.f32 %v369, %v377
        %v386 = vmul.f32 %v370, %v378
        %v387 = vmul.f32 %v371, %v379
        %v388 = vmul.f32 %v372, %v380
        %v389 = vmul.f32 %v373, %v381
        %v390 = vmul.f32 %v374, %v382
        %v391 = vmul.f32 %v375, %v383
        %v392 = vmul.f32 %v376, %v384
        %393 = vadd.xlane.f32.xlu0 %v385
        %v394 = vpop.xlane.xlu0 %393
        %395 = vadd.xlane.f32.xlu0 %v386
        %v396 = vpop.xlane.xlu0 %395
        %397 = vadd.xlane.f32.xlu0 %v387
        %v398 = vpop.xlane.xlu0 %397
        %399 = vadd.xlane.f32.xlu0 %v388
        %v400 = vpop.xlane.xlu0 %399
        %401 = vadd.xlane.f32.xlu0 %v389
        %v402 = vpop.xlane.xlu0 %401
        %403 = vadd.xlane.f32.xlu0 %v390
        %v404 = vpop.xlane.xlu0 %403
        %405 = vadd.xlane.f32.xlu0 %v391
        %v406 = vpop.xlane.xlu0 %405
        %407 = vadd.xlane.f32.xlu0 %v392
        %v408 = vpop.xlane.xlu0 %407
        %v409 = vld [vmem:[#allocation2] sm:$0xff]
        %v410 = vld [vmem:[#allocation2 + $0x8] sm:$0xff]
        %v411 = vld [vmem:[#allocation2 + $0x10] sm:$0xff]
        %v412 = vld [vmem:[#allocation2 + $0x18] sm:$0xff]
        %v413 = vld [vmem:[#allocation2 + $0x20] sm:$0xff]
        %v414 = vld [vmem:[#allocation2 + $0x28] sm:$0xff]
        %v415 = vld [vmem:[#allocation2 + $0x30] sm:$0xff]
        %v416 = vld [vmem:[#allocation2 + $0x38] sm:$0xff]
        %v417 = vsub.f32 %v409, 96.0
        %v418 = vsub.f32 %v410, 96.0
        %v419 = vsub.f32 %v411, 96.0
        %v420 = vsub.f32 %v412, 96.0
        %v421 = vsub.f32 %v413, 96.0
        %v422 = vsub.f32 %v414, 96.0
        %v423 = vsub.f32 %v415, 96.0
        %v424 = vsub.f32 %v416, 96.0
        %v425 = vmul.f32 %v394, 1.442695
        %v426 = vpow.pop %v425
        %v427 = vmul.f32 %v396, 1.442695
        %v428 = vpow.pop %v427
        %v429 = vmul.f32 %v398, 1.442695
        %v430 = vpow.pop %v429
        %v431 = vmul.f32 %v400, 1.442695
        %v432 = vpow.pop %v431
        %v433 = vmul.f32 %v402, 1.442695
        %v434 = vpow.pop %v433
        %v435 = vmul.f32 %v404, 1.442695
        %v436 = vpow.pop %v435
        %v437 = vmul.f32 %v406, 1.442695
        %v438 = vpow.pop %v437
        %v439 = vmul.f32 %v408, 1.442695
        %v440 = vpow.pop %v439
        %v441 = vadd.f32 %v426, %v417
        %v442 = vadd.f32 %v428, %v418
        %v443 = vadd.f32 %v430, %v419
        %v444 = vadd.f32 %v432, %v420
        %v445 = vadd.f32 %v434, %v421
        %v446 = vadd.f32 %v436, %v422
        %v447 = vadd.f32 %v438, %v423
        %v448 = vadd.f32 %v440, %v424
        %v449 = vlog2.pop %v441
        %v450 = vmul.f32 %v449, 0.6931472
        %v451 = vlog2.pop %v442
        %v452 = vmul.f32 %v451, 0.6931472
        %v453 = vlog2.pop %v443
        %v454 = vmul.f32 %v453, 0.6931472
        %v455 = vlog2.pop %v444
        %v456 = vmul.f32 %v455, 0.6931472
        %v457 = vlog2.pop %v445
        %v458 = vmul.f32 %v457, 0.6931472
        %v459 = vlog2.pop %v446
        %v460 = vmul.f32 %v459, 0.6931472
        %v461 = vlog2.pop %v447
        %v462 = vmul.f32 %v461, 0.6931472
        %v463 = vlog2.pop %v448
        %v464 = vmul.f32 %v463, 0.6931472
        %v465 = vsub.f32 %v450, %v394
        %v466 = vsub.f32 %v452, %v396
        %v467 = vsub.f32 %v454, %v398
        %v468 = vsub.f32 %v456, %v400
        %v469 = vsub.f32 %v458, %v402
        %v470 = vsub.f32 %v460, %v404
        %v471 = vsub.f32 %v462, %v406
        %v472 = vsub.f32 %v464, %v408
        %473 = vst.msk [vmem:[%s228] sm:$0xff] %vm356, %v465
        %474 = vst.msk [vmem:[%s228 + $0x8] sm:$0xff] %vm356, %v466
        %475 = vst.msk [vmem:[%s228 + $0x10] sm:$0xff] %vm356, %v467
        %476 = vst.msk [vmem:[%s228 + $0x18] sm:$0xff] %vm356, %v468
        %477 = vst.msk [vmem:[%s228 + $0x20] sm:$0xff] %vm356, %v469
        %478 = vst.msk [vmem:[%s228 + $0x28] sm:$0xff] %vm356, %v470
        %479 = vst.msk [vmem:[%s228 + $0x30] sm:$0xff] %vm356, %v471
        %480 = vst.msk [vmem:[%s228 + $0x38] sm:$0xff] %vm356, %v472
      $region40: #{_device_forward.7} parent=31 // pred_fallthru
        _
      %s481 = smul.u32 8, %s18
      %p482 = scmp.lt.s32.totalorder %s481, 31
      %s483 = scalar_select %p482, %s481, 31
      %s484 = smul.addr %s483, 8
      %s485 = scalar_lea.vmem %s3, %s484
      // Predicated region
      $region41: #{_device_forward.7} parent=31 // pred_check
        %p486 = pneg %p122
      $region42: #{_device_forward.7} parent=31 // pred_check_branch
        %488 = sbr.rel (%p486) target = $region44
      $region43: #{_device_forward.7} parent=31 // pred_region
        %s489 = smul.u32 8, %s18
      $region44: #{_device_forward.7} parent=31 // pred_fallthru
        _
    $region32: #{_device_forward.7} parent=5 // pred_fallthru
      _
    %p490 = scmp.le.s32.totalorder 2, %s9
    // Predicated region
    $region45: #{_device_forward.7} parent=5 // pred_check
      %p491 = pneg %p490
    $region46: #{_device_forward.7} parent=5 // pred_check_branch
      %493 = sbr.rel (%p491) target = $region48
    $region47: #{_device_forward.7} parent=5 // pred_region
      %s494 = ssub.s32 %s9, 2
      // Predicated region
      $region49: #{_device_forward.7} parent=47 // pred_check
        %p495 = pneg %p128
      $region50: #{_device_forward.7} parent=47 // pred_check_branch
        %497 = sbr.rel (%p495) target = $region52
      $region51: #{_device_forward.7} parent=47 // pred_region
        %s498 = smul.u32 8, %s20
        %p499 = scmp.lt.s32.totalorder %s498, 31
        %s500 = scalar_select %p499, %s498, 31
        %s501 = smul.addr %s500, 8
        %s502 = scalar_lea.vmem %s3, %s501
      $region52: #{_device_forward.7} parent=47 // pred_fallthru
        _
    $region48: #{_device_forward.7} parent=5 // pred_fallthru
      _
  $region6: #{_device_forward.7} parent=0 // loop_footer
    %s13 = sadd.s32 1, %s9
  $region7: #{_device_forward.7} parent=0 // loop_footer_branch
    %8 = sbr.rel target = $region3
  $region8: #{_device_forward.7} parent=0 // loop_exit
    _

// kernel: _device_forward.6
$region0: #{_device_forward.6}
  #allocation0 [shape = 'u32[]', space=smem, size = 0x4, offset = 0x4, fixed_abs, tag = 'smem constant byte address 0x4 - core index']
  #allocation1 [shape = 'u32[72,128]{1,0:T(1,128)}', space=vmem, size = 0x9000, scoped, tag = 'internal scratch']
  #allocation2 [shape = 'f32[64,128]{1,0:T(8,128)}', space=vmem, size = 0x8000, scoped, tag = 'scratch operand']
  %s0 = inlined_call_operand.vmem [shape: bf16[256,256], index: 0, kind: input, shape index: {}]
  %s1 = inlined_call_operand.vmem [shape: bf16[256,128], index: 1, kind: input, shape index: {}]
  %s2 = inlined_call_operand.vmem [shape: f32[8,128], index: 2, kind: input, shape index: {}]
  %s3 = inlined_call_operand.vmem [shape: f32[256,128], index: 3, kind: output, shape index: {}]
  %s4 = sld [smem:[#allocation0]]
  $region94: #{_device_forward.6} parent=0
    _
  %s6 = ssub.s32 1, %s4
  %s7 = scalar_select 0, %s6, %s4
  $region1: #{_device_forward.6} parent=0
    #allocation3 [shape = 'u8[32768]{0}', space=vmem, size = 0x8000, scoped, tag = 'input window, operand 0']
    loop: start=0, step=1, limit=10
    $region2: #{_device_forward.6} parent=1 // loop_pre_header
      _
    $region3: #{_device_forward.6} parent=1 // loop_header
      %s9 = sphi 0, %s13
      %p10 = scmp.ge.s32.totalorder %s9, 10
      %s16 = sphi 0, %s28
      %s17 = sphi 0, %s24
      %s18 = sphi 0, %s16
      %s19 = sphi 0, %s17
      %s20 = sphi 0, %s18
      %s21 = sphi 0, %s19
      %s33 = sphi 0, %s35
      %s36 = sphi 0, %s33
      %s37 = sphi 0, %s36
      %s53 = sphi 0, %s37
      %s59 = sphi 0, %s61
      %s62 = sphi 0, %s59
      %s63 = sphi 0, %s62
      %s79 = sphi 0, %s63
      %s83 = sphi 0, %s83
      %s85 = sphi 0, %s83
      %s86 = sphi 0, %s85
      %s100 = sphi 0, %s86
      %s106 = sphi 0, %s108
      %s109 = sphi 0, %s106
      %s110 = sphi 0, %s109
      %s126 = sphi 0, %s110
    $region4: #{_device_forward.6} parent=1 // loop_header_branch
      %12 = sbr.rel (%p10) target = $region8
    $region5: #{_device_forward.6} parent=1 // loop_body
      %s14 = ssub.s32 %s9, 1
      %s15 = ssub.s32 %s9, 2
      %s22 = sadd.s32 1, %s17
      %p23 = scmp.ge.s32.totalorder %s22, 2
      %s24 = scalar_select %p23, 0, %s22
      %s25 = sadd.s32 1, %s16
      %s26 = scalar_select %p23, %s25, %s16
      %p27 = scmp.ge.s32.totalorder %s26, 4
      %s28 = scalar_select %p27, 0, %s26
      %s29 = ssub.s32 %s16, %s28
      %s30 = ssub.s32 %s17, %s24
      %s31 = sor.u32 %s29, %s30
      %p32 = scmp.eq.s32.totalorder %s31, 0
      %s34 = sadd.s32 %s33, 1
      %s35 = scalar_select %p32, %s33, %s34
      %p38 = pneg %p32
      %p39 = scmp.eq.s32.totalorder %s9, 7
      %p40 = por %p38, %p39
      %p41 = scmp.ne.s32.totalorder %s33, %s36
      %p42 = scmp.eq.s32.totalorder %s9, 0
      %p43 = por %p41, %p42
      %p44 = scmp.ne.s32.totalorder %s33, %s36
      %p45 = scmp.eq.s32.totalorder %s14, 7
      %p46 = por %p44, %p45
      %p47 = scmp.ne.s32.totalorder %s36, %s37
      %p48 = scmp.eq.s32.totalorder %s14, 0
      %p49 = por %p47, %p48
      %p50 = scmp.ne.s32.totalorder %s36, %s37
      %p51 = scmp.eq.s32.totalorder %s15, 7
      %p52 = por %p50, %p51
      %p54 = scmp.ne.s32.totalorder %s37, %s53
      %p55 = scmp.eq.s32.totalorder %s15, 0
      %p56 = por %p54, %p55
      %s57 = ssub.s32 %s17, %s24
      %p58 = scmp.eq.s32.totalorder %s57, 0
      %s60 = sadd.s32 %s59, 1
      %s61 = scalar_select %p58, %s59, %s60
      %p64 = pneg %p58
      %p65 = scmp.eq.s32.totalorder %s9, 7
      %p66 = por %p64, %p65
      %p67 = scmp.ne.s32.totalorder %s59, %s62
      %p68 = scmp.eq.s32.totalorder %s9, 0
      %p69 = por %p67, %p68
      %p70 = scmp.ne.s32.totalorder %s59, %s62
      %p71 = scmp.eq.s32.totalorder %s14, 7
      %p72 = por %p70, %p71
      %p73 = scmp.ne.s32.totalorder %s62, %s63
      %p74 = scmp.eq.s32.totalorder %s14, 0
      %p75 = por %p73, %p74
      %p76 = scmp.ne.s32.totalorder %s62, %s63
      %p77 = scmp.eq.s32.totalorder %s15, 7
      %p78 = por %p76, %p77
      %p80 = scmp.ne.s32.totalorder %s63, %s79
      %p81 = scmp.eq.s32.totalorder %s15, 0
      %p82 = por %p80, %p81
      %s84 = sadd.s32 %s83, 1
      %p87 = scmp.eq.s32.totalorder %s9, 7
      %p88 = scmp.ne.s32.totalorder %s83, %s85
      %p89 = scmp.eq.s32.totalorder %s9, 0
      %p90 = por %p88, %p89
      %p91 = scmp.ne.s32.totalorder %s83, %s85
      %p92 = scmp.eq.s32.totalorder %s14, 7
      %p93 = por %p91, %p92
      %p94 = scmp.ne.s32.totalorder %s85, %s86
      %p95 = scmp.eq.s32.totalorder %s14, 0
      %p96 = por %p94, %p95
      %p97 = scmp.ne.s32.totalorder %s85, %s86
      %p98 = scmp.eq.s32.totalorder %s15, 7
      %p99 = por %p97, %p98
      %p101 = scmp.ne.s32.totalorder %s86, %s100
      %p102 = scmp.eq.s32.totalorder %s15, 0
      %p103 = por %p101, %p102
      %s104 = ssub.s32 %s16, %s28
      %p105 = scmp.eq.s32.totalorder %s104, 0
      %s107 = sadd.s32 %s106, 1
      %s108 = scalar_select %p105, %s106, %s107
      %p111 = pneg %p105
      %p112 = scmp.eq.s32.totalorder %s9, 7
      %p113 = por %p111, %p112
      %p114 = scmp.ne.s32.totalorder %s106, %s109
      %p115 = scmp.eq.s32.totalorder %s9, 0
      %p116 = por %p114, %p115
      %p117 = scmp.ne.s32.totalorder %s106, %s109
      %p118 = scmp.eq.s32.totalorder %s14, 7
      %p119 = por %p117, %p118
      %p120 = scmp.ne.s32.totalorder %s109, %s110
      %p121 = scmp.eq.s32.totalorder %s14, 0
      %p122 = por %p120, %p121
      %p123 = scmp.ne.s32.totalorder %s109, %s110
      %p124 = scmp.eq.s32.totalorder %s15, 7
      %p125 = por %p123, %p124
      %p127 = scmp.ne.s32.totalorder %s110, %s126
      %p128 = scmp.eq.s32.totalorder %s15, 0
      %p129 = por %p127, %p128
      %p130 = scmp.le.s32.totalorder 1, %s9
      %p131 = scmp.lt.s32.totalorder %s9, 9
      %p132 = pnand %p130, %p131
      %p133 = pneg %p132
      // Predicated region
      $region9: #{_device_forward.6} parent=5 // pred_check
        _
      $region10: #{_device_forward.6} parent=5 // pred_check_branch
        %135 = sbr.rel (%p132) target = $region12
      $region11: #{_device_forward.6} parent=5 // pred_region
        %s136 = ssub.s32 %s9, 1
        // Predicated region
        $region13: #{_device_forward.6} parent=11 // pred_check
          %p137 = pneg %p96
        $region14: #{_device_forward.6} parent=11 // pred_check_branch
          %139 = sbr.rel (%p137) target = $region16
        $region15: #{_device_forward.6} parent=11 // pred_region
          _
        $region16: #{_device_forward.6} parent=11 // pred_fallthru
          _
      $region12: #{_device_forward.6} parent=5 // pred_fallthru
        _
      %p140 = scmp.lt.s32.totalorder %s9, 8
      // Predicated region
      $region17: #{_device_forward.6} parent=5 // pred_check
        %p141 = pneg %p140
      $region18: #{_device_forward.6} parent=5 // pred_check_branch
        %143 = sbr.rel (%p141) target = $region20
      $region19: #{_device_forward.6} parent=5 // pred_region
        // Predicated region
        $region21: #{_device_forward.6} parent=19 // pred_check
          %p144 = pneg %p43
        $region22: #{_device_forward.6} parent=19 // pred_check_branch
          %146 = sbr.rel (%p144) target = $region24
        $region23: #{_device_forward.6} parent=19 // pred_region
          %s147 = sand.u32 %s33, 1
          %s148 = sand.u32 %s33, 1
          %s149 = smul.addr %s148, 32
          %s150 = scalar_lea.vmem [#allocation3], %s149
          %s151 = smul.u32 8, %s16
          %s152 = smul.addr %s151, 2
          %s153 = sadd.s32 %s17, %s152
          %s154 = smul.addr %s153, 4
          %s155 = scalar_lea.vmem %s0, %s154
          // Predicated region
          $region25: #{_device_forward.6} parent=23 // pred_check
            _
          $region26: #{_device_forward.6} parent=23 // pred_check_branch
            %157 = sbr.rel (0) target = $region28
          $region27: #{_device_forward.6} parent=23 // pred_region
            // Predicated region
            $region29: #{_device_forward.6} parent=27 // pred_check
              _
            $region30: #{_device_forward.6} parent=27 // pred_check_branch
              %159 = sbr.rel target = $region32
            $region31: #{_device_forward.6} parent=27 // pred_region
              // Predicated region
              $region44: #{_device_forward.6} parent=31 // pred_check
                _
              $region45: #{_device_forward.6} parent=31 // pred_check_branch
                %189 = sbr.rel (0) target = $region47
              $region46: #{_device_forward.6} parent=31 // pred_region
                loop: start=0, step=1, limit=1
                $region48: #{_device_forward.6} parent=46 // loop_pre_header
                  _
                $region49: #{_device_forward.6} parent=46 // loop_header
                  %s191 = sphi 0, %s195
                  %p192 = scmp.ge.s32.totalorder %s191, 1
                  %s196 = sphi %s155, %s155
                  %s197 = sphi %s150, %s150
                $region50: #{_device_forward.6} parent=46 // loop_header_branch
                  %194 = sbr.rel (%p192) target = $region54
                $region51: #{_device_forward.6} parent=46 // loop_body
                  _
                $region52: #{_device_forward.6} parent=46 // loop_footer
                  %s195 = sadd.s32 1, %s191
                $region53: #{_device_forward.6} parent=46 // loop_footer_branch
                  %190 = sbr.rel target = $region49
                $region54: #{_device_forward.6} parent=46 // loop_exit
                  _
                %s199 = ssub.s32 16, 1
                loop: start=0, step=1, limit=1
                $region55: #{_device_forward.6} parent=46 // loop_pre_header
                  _
                $region56: #{_device_forward.6} parent=46 // loop_header
                  %s201 = sphi 0, %s205
                  %p202 = scmp.ge.s32.totalorder %s201, 1
                  %s206 = sphi %s155, %s155
                  %s207 = sphi %s150, %s150
                $region57: #{_device_forward.6} parent=46 // loop_header_branch
                  %204 = sbr.rel (%p202) target = $region61
                $region58: #{_device_forward.6} parent=46 // loop_body
                  %v208 = vld [vmem:[%s206] sm:%s199]
                  %209 = vst [vmem:[%s207] sm:%s199] %v208
                  %v210 = vld [vmem:[%s206 + $0x8] sm:%s199]
                  %211 = vst [vmem:[%s207 + $0x4] sm:%s199] %v210
                  %v212 = vld [vmem:[%s206 + $0x10] sm:%s199]
                  %213 = vst [vmem:[%s207 + $0x8] sm:%s199] %v212
                  %v214 = vld [vmem:[%s206 + $0x18] sm:%s199]
                  %215 = vst [vmem:[%s207 + $0xc] sm:%s199] %v214
                  %v216 = vld [vmem:[%s206 + $0x20] sm:%s199]
                  %217 = vst [vmem:[%s207 + $0x10] sm:%s199] %v216
                  %v218 = vld [vmem:[%s206 + $0x28] sm:%s199]
                  %219 = vst [vmem:[%s207 + $0x14] sm:%s199] %v218
                  %v220 = vld [vmem:[%s206 + $0x30] sm:%s199]
                  %221 = vst [vmem:[%s207 + $0x18] sm:%s199] %v220
                  %v222 = vld [vmem:[%s206 + $0x38] sm:%s199]
                  %223 = vst [vmem:[%s207 + $0x1c] sm:%s199] %v222
                $region59: #{_device_forward.6} parent=46 // loop_footer
                  %s205 = sadd.s32 1, %s201
                $region60: #{_device_forward.6} parent=46 // loop_footer_branch
                  %200 = sbr.rel target = $region56
                $region61: #{_device_forward.6} parent=46 // loop_exit
                  _
              $region47: #{_device_forward.6} parent=31 // pred_fallthru
                _
            $region32: #{_device_forward.6} parent=27 // pred_fallthru
              _
            // Predicated region
            $region33: #{_device_forward.6} parent=27 // pred_check
              _
            $region34: #{_device_forward.6} parent=27 // pred_check_branch
              %161 = sbr.rel (0) target = $region36
            $region35: #{_device_forward.6} parent=27 // pred_region
              %s163 = ssub.s32 16, 1
              loop: start=0, step=1, limit=1
              $region37: #{_device_forward.6} parent=35 // loop_pre_header
                _
              $region38: #{_device_forward.6} parent=35 // loop_header
                %s165 = sphi 0, %s169
                %p166 = scmp.ge.s32.totalorder %s165, 1
                %s170 = sphi %s155, %s155
                %s171 = sphi %s150, %s150
              $region39: #{_device_forward.6} parent=35 // loop_header_branch
                %168 = sbr.rel (%p166) target = $region43
              $region40: #{_device_forward.6} parent=35 // loop_body
                %v172 = vld [vmem:[%s170] sm:%s163]
                %173 = vst [vmem:[%s171] sm:%s163] %v172
                %v174 = vld [vmem:[%s170 + $0x8] sm:%s163]
                %175 = vst [vmem:[%s171 + $0x4] sm:%s163] %v174
                %v176 = vld [vmem:[%s170 + $0x10] sm:%s163]
                %177 = vst [vmem:[%s171 + $0x8] sm:%s163] %v176
                %v178 = vld [vmem:[%s170 + $0x18] sm:%s163]
                %179 = vst [vmem:[%s171 + $0xc] sm:%s163] %v178
                %v180 = vld [vmem:[%s170 + $0x20] sm:%s163]
                %181 = vst [vmem:[%s171 + $0x10] sm:%s163] %v180
                %v182 = vld [vmem:[%s170 + $0x28] sm:%s163]
                %183 = vst [vmem:[%s171 + $0x14] sm:%s163] %v182
                %v184 = vld [vmem:[%s170 + $0x30] sm:%s163]
                %185 = vst [vmem:[%s171 + $0x18] sm:%s163] %v184
                %v186 = vld [vmem:[%s170 + $0x38] sm:%s163]
                %187 = vst [vmem:[%s171 + $0x1c] sm:%s163] %v186
              $region41: #{_device_forward.6} parent=35 // loop_footer
                %s169 = sadd.s32 1, %s165
              $region42: #{_device_forward.6} parent=35 // loop_footer_branch
                %164 = sbr.rel target = $region38
              $region43: #{_device_forward.6} parent=35 // loop_exit
                _
            $region36: #{_device_forward.6} parent=27 // pred_fallthru
              _
          $region28: #{_device_forward.6} parent=23 // pred_fallthru
            _
          %224 = vnop
        $region24: #{_device_forward.6} parent=19 // pred_fallthru
          _
        // Predicated region
        $region62: #{_device_forward.6} parent=19 // pred_check
          %p225 = pneg %p69
        $region63: #{_device_forward.6} parent=19 // pred_check_branch
          %227 = sbr.rel (%p225) target = $region65
        $region64: #{_device_forward.6} parent=19 // pred_region
          %s228 = smul.u32 16, %s17
          %p229 = scmp.lt.s32.totalorder %s228, 31
          %s230 = scalar_select %p229, %s228, 31
          %s231 = smul.addr %s230, 4
          %s232 = scalar_lea.vmem %s1, %s231
          %s233 = smul.u32 16, %s17
        $region65: #{_device_forward.6} parent=19 // pred_fallthru
          _
      $region20: #{_device_forward.6} parent=5 // pred_fallthru
        _
      %p234 = scmp.le.s32.totalorder 1, %s9
      %p235 = scmp.lt.s32.totalorder %s9, 9
      %p236 = pnand %p234, %p235
      %p237 = pneg %p236
      // Predicated region
      $region66: #{_device_forward.6} parent=5 // pred_check
        _
      $region67: #{_device_forward.6} parent=5 // pred_check_branch
        %239 = sbr.rel (%p236) target = $region69
      $region68: #{_device_forward.6} parent=5 // pred_region
        %s240 = ssub.s32 %s9, 1
        %s241 = sand.u32 %s36, 1
        %s242 = sand.u32 %s36, 1
        %s243 = smul.addr %s242, 32
        %s244 = scalar_lea.vmem [#allocation3], %s243
        // Predicated region
        $region70: #{_device_forward.6} parent=68 // pred_check
          %p245 = pneg %p49
        $region71: #{_device_forward.6} parent=68 // pred_check_branch
          %247 = sbr.rel (%p245) target = $region73
        $region72: #{_device_forward.6} parent=68 // pred_region
          _
        $region73: #{_device_forward.6} parent=68 // pred_fallthru
          _
        %s248 = sand.u32 %s36, 1
        %s249 = sand.u32 %s36, 1
        %s250 = smul.addr %s249, 32
        %s251 = scalar_lea.vmem [#allocation3], %s250
        %p252 = pneg %p49
        %p253 = pneg %p46
        %s254 = smul.u32 16, %s19
        %p255 = scmp.lt.s32.totalorder %s254, 31
        %s256 = scalar_select %p255, %s254, 31
        %s257 = smul.addr %s256, 4
        %s258 = scalar_lea.vmem %s1, %s257
        %p259 = pneg %p75
        %p260 = pneg %p72
        %p261 = pneg %p96
        %p262 = pneg %p93
        %p263 = pneg %p122
        %p264 = pneg %p119
        %s265 = smul.u32 8, %s18
        %p266 = scmp.lt.s32.totalorder %s265, 31
        %s267 = scalar_select %p266, %s265, 31
        %s268 = smul.addr %s267, 8
        %s269 = scalar_lea.vmem %s3, %s268
        %s270 = smul.u32 8, %s18
        %s271 = smul.u32 16, %s19
        %p272 = scmp.lt.s32.totalorder %s271, 31
        %s273 = scalar_select %p272, %s271, 31
        %s274 = smul.addr %s273, 4
        %s275 = scalar_lea.vmem %s1, %s274
        %s276 = smul.u32 16, %s19
        %s277 = smul.u32 8, %s18
        %p278 = scmp.lt.s32.totalorder %s277, 31
        %s279 = scalar_select %p278, %s277, 31
        %s280 = smul.addr %s279, 8
        %s281 = scalar_lea.vmem %s3, %s280
        %s282 = smul.u32 8, %s18
        %p283 = scmp.eq.s32.totalorder %s19, 0
        // Predicated region
        $region74: #{_device_forward.6} parent=68 // pred_check
          %p284 = pneg %p283
        $region75: #{_device_forward.6} parent=68 // pred_check_branch
          %286 = sbr.rel (%p284) target = $region77
        $region76: #{_device_forward.6} parent=68 // pred_region
          %287 = vst [vmem:[#allocation2] sm:$0xff] 0.0
          %288 = vst [vmem:[#allocation2 + $0x8] sm:$0xff] 0.0
          %289 = vst [vmem:[#allocation2 + $0x10] sm:$0xff] 0.0
          %290 = vst [vmem:[#allocation2 + $0x18] sm:$0xff] 0.0
          %291 = vst [vmem:[#allocation2 + $0x20] sm:$0xff] 0.0
          %292 = vst [vmem:[#allocation2 + $0x28] sm:$0xff] 0.0
          %293 = vst [vmem:[#allocation2 + $0x30] sm:$0xff] 0.0
          %294 = vst [vmem:[#allocation2 + $0x38] sm:$0xff] 0.0
        $region77: #{_device_forward.6} parent=68 // pred_fallthru
          _
        %v295 = vld [vmem:[#allocation2] sm:$0xff]
        %v296 = vld [vmem:[#allocation2 + $0x8] sm:$0xff]
        %v297 = vld [vmem:[#allocation2 + $0x10] sm:$0xff]
        %v298 = vld [vmem:[#allocation2 + $0x18] sm:$0xff]
        %v299 = vld [vmem:[#allocation2 + $0x20] sm:$0xff]
        %v300 = vld [vmem:[#allocation2 + $0x28] sm:$0xff]
        %v301 = vld [vmem:[#allocation2 + $0x30] sm:$0xff]
        %v302 = vld [vmem:[#allocation2 + $0x38] sm:$0xff]
        %v303 = vld [vmem:[%s244] sm:$0xf]
        %v304 = vld [vmem:[%s244 + $0x4] sm:$0xf]
        %v305 = vld [vmem:[%s244 + $0x8] sm:$0xf]
        %v306 = vld [vmem:[%s244 + $0xc] sm:$0xf]
        %v307 = vld [vmem:[%s244 + $0x10] sm:$0xf]
        %v308 = vld [vmem:[%s244 + $0x14] sm:$0xf]
        %v309 = vld [vmem:[%s244 + $0x18] sm:$0xf]
        %v310 = vld [vmem:[%s244 + $0x1c] sm:$0xf]
        %v311 = vld [vmem:[%s275] sm:$0xf]
        %v312 = vld [vmem:[%s275 + $0x4] sm:$0xf]
        %v313 = vld [vmem:[%s275 + $0x8] sm:$0xf]
        %v314 = vld [vmem:[%s275 + $0xc] sm:$0xf]
        %v315 = vld [vmem:[%s275 + $0x10] sm:$0xf]
        %v316 = vld [vmem:[%s275 + $0x14] sm:$0xf]
        %v317 = vld [vmem:[%s275 + $0x18] sm:$0xf]
        %v318 = vld [vmem:[%s275 + $0x1c] sm:$0xf]
        %v319 = vld [vmem:[%s275 + $0x20] sm:$0xf]
        %v320 = vld [vmem:[%s275 + $0x24] sm:$0xf]
        %v321 = vld [vmem:[%s275 + $0x28] sm:$0xf]
        %v322 = vld [vmem:[%s275 + $0x2c] sm:$0xf]
        %v323 = vld [vmem:[%s275 + $0x30] sm:$0xf]
        %v324 = vld [vmem:[%s275 + $0x34] sm:$0xf]
        %v325 = vld [vmem:[%s275 + $0x38] sm:$0xf]
        %v326 = vld [vmem:[%s275 + $0x3c] sm:$0xf]
        %v335 = vunpack.c.l.b16 %v303
        %v336 = vunpack.c.l.b16 %v304
        %v337 = vunpack.c.l.b16 %v305
        %v338 = vunpack.c.l.b16 %v306
        %v339 = vunpack.c.l.b16 %v307
        %v340 = vunpack.c.l.b16 %v308
        %v341 = vunpack.c.l.b16 %v309
        %v342 = vunpack.c.l.b16 %v310
        %v343 = vpack.c.b16 %v336, %v335
        %v344 = vpack.c.b16 %v338, %v337
        %v345 = vpack.c.b16 %v340, %v339
        %v346 = vpack.c.b16 %v342, %v341
        %v367 = vunpack.c.l.b16 %v311
        %v368 = vunpack.c.l.b16 %v312
        %v369 = vunpack.c.l.b16 %v313
        %v370 = vunpack.c.l.b16 %v314
        %v371 = vunpack.c.l.b16 %v315
        %v372 = vunpack.c.l.b16 %v316
        %v373 = vunpack.c.l.b16 %v317
        %v374 = vunpack.c.l.b16 %v318
        %v375 = vunpack.c.l.b16 %v319
        %v376 = vunpack.c.l.b16 %v320
        %v377 = vunpack.c.l.b16 %v321
        %v378 = vunpack.c.l.b16 %v322
        %v379 = vunpack.c.l.b16 %v323
        %v380 = vunpack.c.l.b16 %v324
        %v381 = vunpack.c.l.b16 %v325
        %v382 = vunpack.c.l.b16 %v326
        %v383 = vpack.c.b16 %v368, %v367
        %v384 = vpack.c.b16 %v370, %v369
        %v385 = vpack.c.b16 %v372, %v371
        %v386 = vpack.c.b16 %v374, %v373
        %v387 = vpack.c.b16 %v376, %v375
        %v388 = vpack.c.b16 %v378, %v377
        %v389 = vpack.c.b16 %v380, %v379
        %v390 = vpack.c.b16 %v382, %v381
        %399 = vmatpush.bf16.msra.mxu0 %v390
        %400 = vmatpush.bf16.msra.mxu0 %v389
        %401 = vmatpush.bf16.msra.mxu0 %v388
        %402 = vmatpush.bf16.msra.mxu0 %v387
        %403 = vmatpush.bf16.msra.mxu0 %v386
        %404 = vmatpush.bf16.msra.mxu0 %v385
        %405 = vmatpush.bf16.msra.mxu0 %v384
        %406 = vmatpush.bf16.msra.mxu0 %v383
        %407 = vmatmul.bf16.gmra.mxu0 %v343
        %v408 = vpop.f32.mrf.mxu0
        %v409 = vadd.f32 0.0, %v408
        %v410 = vpop.f32.mrf.mxu0
        %v411 = vadd.f32 0.0, %v410
        %412 = vmatmul.bf16.gmra.mxu0 %v344
        %v413 = vpop.f32.mrf.mxu0
        %v414 = vadd.f32 0.0, %v413
        %v415 = vpop.f32.mrf.mxu0
        %v416 = vadd.f32 0.0, %v415
        %417 = vmatmul.bf16.gmra.mxu0 %v345
        %v418 = vpop.f32.mrf.mxu0
        %v419 = vadd.f32 0.0, %v418
        %v420 = vpop.f32.mrf.mxu0
        %v421 = vadd.f32 0.0, %v420
        %422 = vmatmul.bf16.gmra.mxu0 %v346
        %v423 = vpop.f32.mrf.mxu0
        %v424 = vadd.f32 0.0, %v423
        %v425 = vpop.f32.mrf.mxu0
        %v426 = vadd.f32 0.0, %v425
        %427 = vdwg.mxu0
        %v428 = vadd.f32 %v295, %v409
        %v429 = vadd.f32 %v296, %v411
        %v430 = vadd.f32 %v297, %v414
        %v431 = vadd.f32 %v298, %v416
        %v432 = vadd.f32 %v299, %v419
        %v433 = vadd.f32 %v300, %v421
        %v434 = vadd.f32 %v301, %v424
        %v435 = vadd.f32 %v302, %v426
        %436 = vst [vmem:[#allocation2] sm:$0xff] %v428
        %437 = vst [vmem:[#allocation2 + $0x8] sm:$0xff] %v429
        %438 = vst [vmem:[#allocation2 + $0x10] sm:$0xff] %v430
        %439 = vst [vmem:[#allocation2 + $0x18] sm:$0xff] %v431
        %440 = vst [vmem:[#allocation2 + $0x20] sm:$0xff] %v432
        %441 = vst [vmem:[#allocation2 + $0x28] sm:$0xff] %v433
        %442 = vst [vmem:[#allocation2 + $0x30] sm:$0xff] %v434
        %443 = vst [vmem:[#allocation2 + $0x38] sm:$0xff] %v435
        %p444 = scmp.eq.s32.totalorder %s19, 1
        // Predicated region
        $region78: #{_device_forward.6} parent=68 // pred_check
          %p445 = pneg %p444
        $region79: #{_device_forward.6} parent=68 // pred_check_branch
          %447 = sbr.rel (%p445) target = $region81
        $region80: #{_device_forward.6} parent=68 // pred_region
          %v448 = vld [vmem:[%s2] sm:$0xff]
          %v449 = vld [vmem:[#allocation2] sm:$0xff]
          %v450 = vld [vmem:[#allocation2 + $0x8] sm:$0xff]
          %v451 = vld [vmem:[#allocation2 + $0x10] sm:$0xff]
          %v452 = vld [vmem:[#allocation2 + $0x18] sm:$0xff]
          %v453 = vld [vmem:[#allocation2 + $0x20] sm:$0xff]
          %v454 = vld [vmem:[#allocation2 + $0x28] sm:$0xff]
          %v455 = vld [vmem:[#allocation2 + $0x30] sm:$0xff]
          %v456 = vld [vmem:[#allocation2 + $0x38] sm:$0xff]
          %v457 = vperm.slane %v448, 1
          %v458 = vadd.f32 %v449, %v457
          %v459 = vadd.f32 %v450, %v457
          %v460 = vadd.f32 %v451, %v457
          %v461 = vadd.f32 %v452, %v457
          %v462 = vadd.f32 %v453, %v457
          %v463 = vadd.f32 %v454, %v457
          %v464 = vadd.f32 %v455, %v457
          %v465 = vadd.f32 %v456, %v457
          %v466 = vmax.f32 %v458, 0.0
          %v467 = vmax.f32 %v459, 0.0
          %v468 = vmax.f32 %v460, 0.0
          %v469 = vmax.f32 %v461, 0.0
          %v470 = vmax.f32 %v462, 0.0
          %v471 = vmax.f32 %v463, 0.0
          %v472 = vmax.f32 %v464, 0.0
          %v473 = vmax.f32 %v465, 0.0
          %v474 = vmin.f32 %v458, 0.0
          %v475 = vmin.f32 %v459, 0.0
          %v476 = vmin.f32 %v460, 0.0
          %v477 = vmin.f32 %v461, 0.0
          %v478 = vmin.f32 %v462, 0.0
          %v479 = vmin.f32 %v463, 0.0
          %v480 = vmin.f32 %v464, 0.0
          %v481 = vmin.f32 %v465, 0.0
          %v482 = vperm.slane %v448, 4
          %v483 = vmul.f32 %v482, %v474
          %v484 = vmul.f32 %v482, %v475
          %v485 = vmul.f32 %v482, %v476
          %v486 = vmul.f32 %v482, %v477
          %v487 = vmul.f32 %v482, %v478
          %v488 = vmul.f32 %v482, %v479
          %v489 = vmul.f32 %v482, %v480
          %v490 = vmul.f32 %v482, %v481
          %v491 = vadd.f32 %v466, %v483
          %v492 = vadd.f32 %v467, %v484
          %v493 = vadd.f32 %v468, %v485
          %v494 = vadd.f32 %v469, %v486
          %v495 = vadd.f32 %v470, %v487
          %v496 = vadd.f32 %v471, %v488
          %v497 = vadd.f32 %v472, %v489
          %v498 = vadd.f32 %v473, %v490
          %499 = vst [vmem:[%s281] sm:$0xff] %v491
          %500 = vst [vmem:[%s281 + $0x8] sm:$0xff] %v492
          %501 = vst [vmem:[%s281 + $0x10] sm:$0xff] %v493
          %502 = vst [vmem:[%s281 + $0x18] sm:$0xff] %v494
          %503 = vst [vmem:[%s281 + $0x20] sm:$0xff] %v495
          %504 = vst [vmem:[%s281 + $0x28] sm:$0xff] %v496
          %505 = vst [vmem:[%s281 + $0x30] sm:$0xff] %v497
          %506 = vst [vmem:[%s281 + $0x38] sm:$0xff] %v498
        $region81: #{_device_forward.6} parent=68 // pred_fallthru
          _
        %s507 = smul.u32 8, %s18
        %p508 = scmp.lt.s32.totalorder %s507, 31
        %s509 = scalar_select %p508, %s507, 31
        %s510 = smul.addr %s509, 8
        %s511 = scalar_lea.vmem %s3, %s510
        // Predicated region
        $region82: #{_device_forward.6} parent=68 // pred_check
          %p512 = pneg %p119
        $region83: #{_device_forward.6} parent=68 // pred_check_branch
          %514 = sbr.rel (%p512) target = $region85
        $region84: #{_device_forward.6} parent=68 // pred_region
          %s515 = smul.u32 8, %s18
        $region85: #{_device_forward.6} parent=68 // pred_fallthru
          _
      $region69: #{_device_forward.6} parent=5 // pred_fallthru
        _
      %p516 = scmp.le.s32.totalorder 2, %s9
      // Predicated region
      $region86: #{_device_forward.6} parent=5 // pred_check
        %p517 = pneg %p516
      $region87: #{_device_forward.6} parent=5 // pred_check_branch
        %519 = sbr.rel (%p517) target = $region89
      $region88: #{_device_forward.6} parent=5 // pred_region
        %s520 = ssub.s32 %s9, 2
        // Predicated region
        $region90: #{_device_forward.6} parent=88 // pred_check
          %p521 = pneg %p125
        $region91: #{_device_forward.6} parent=88 // pred_check_branch
          %523 = sbr.rel (%p521) target = $region93
        $region92: #{_device_forward.6} parent=88 // pred_region
          %s524 = smul.u32 8, %s20
          %p525 = scmp.lt.s32.totalorder %s524, 31
          %s526 = scalar_select %p525, %s524, 31
          %s527 = smul.addr %s526, 8
          %s528 = scalar_lea.vmem %s3, %s527
        $region93: #{_device_forward.6} parent=88 // pred_fallthru
          _
      $region89: #{_device_forward.6} parent=5 // pred_fallthru
        _
    $region6: #{_device_forward.6} parent=1 // loop_footer
      %s13 = sadd.s32 1, %s9
    $region7: #{_device_forward.6} parent=1 // loop_footer_branch
      %8 = sbr.rel target = $region3
    $region8: #{_device_forward.6} parent=1 // loop_exit
      _

</llo_original>
